<compile_context>
chip_gen: v7x
topology: tpu7x:2x2x1
jax: 0.10.0
libtpu: 0.0.40
codegen_flags: <defaults>
</compile_context>

<pallas_src>
import functools

import jax
import jax.numpy as jnp
from jax import lax
from jax.experimental import pallas as pl
from jax.experimental.pallas import tpu as pltpu


def selective_ssm_kernel(x_ref, wix_ref, wiz_ref, wconv_ref, bconv_ref,
                         wb_ref, wc_ref, wdt_ref, bdt_ref, at_ref, d_ref,
                         wout_ref, o_ref, da_sc, dbu_sc, h_sc,
                         *, batch, mxu_dtype):
    LB = x_ref.shape[0]                       # batch * seqlen, t-major rows
    d_conv, d_inner = wconv_ref.shape
    d_state = at_ref.shape[0]
    L = LB // batch

    cast = lambda a: a.astype(mxu_dtype)

    x = x_ref[...]                                               # (LB, d_model)

    # ---- in_proj (bias-free); weights pre-split -> lane-aligned x / z ------
    x_in = jnp.dot(cast(x), cast(wix_ref[...]),
                   preferred_element_type=jnp.float32)           # (LB, d_inner)
    z = jnp.dot(cast(x), cast(wiz_ref[...]),
                preferred_element_type=jnp.float32)              # (LB, d_inner)

    # ---- depthwise causal conv1d + SiLU ------------------------------------
    # t-major rows: time shift j == row shift j*batch; first j*batch rows are
    # the causal zero padding (batches never mix).
    w = wconv_ref[...]                                           # (d_conv, d_inner)
    acc = bconv_ref[...] + x_in * w[d_conv - 1][None, :]
    for j in range(1, d_conv):                                   # static unroll
        keep = LB - j * batch
        shifted = jnp.concatenate(
            [jnp.zeros((j * batch, d_inner), jnp.float32), x_in[:keep, :]],
            axis=0)
        acc = acc + shifted * w[d_conv - 1 - j][None, :]
    u = acc * jax.nn.sigmoid(acc)                                # SiLU (f32 VPU)

    # ---- x_proj (split into W_B / W_C) and dt_proj, batched over B*L rows --
    u_c = cast(u)
    dt = jnp.dot(u_c, cast(wdt_ref[...]), preferred_element_type=jnp.float32)
    dt = jax.nn.softplus(dt + bdt_ref[...])                      # (LB, d_inner)
    bm = jnp.dot(u_c, cast(wb_ref[...]), preferred_element_type=jnp.float32)
    cm = jnp.dot(u_c, cast(wc_ref[...]), preferred_element_type=jnp.float32)

    # ---- hoist transcendentals / products out of the sequential scan -------
    # Lane-dense layout: d_inner on lanes, d_state on sublanes, time leading.
    da_sc[...] = jnp.exp(dt[:, None, :] * at_ref[...][None, :, :])   # (LB,S,Di)
    dbu_sc[...] = (dt * u)[:, None, :] * bm[:, :, None]              # (LB,S,Di)

    # ---- selective scan: h carried in registers; body = load + FMA + store --
    def step(t, h):
        r0 = t * batch
        h = da_sc[pl.ds(r0, batch), :, :] * h + dbu_sc[pl.ds(r0, batch), :, :]
        h_sc[pl.ds(r0, batch), :, :] = h
        return h

    h0 = jnp.zeros((batch, d_state, d_inner), jnp.float32)
    lax.fori_loop(0, L, step, h0, unroll=True)

    # ---- bulk epilogue: y = sum_n h*C + D*u, SiLU(z) gate, out_proj ---------
    y = jnp.sum(h_sc[...] * cm[:, :, None], axis=1) + u * d_ref[...]
    gated = y * (z * jax.nn.sigmoid(z))
    o_ref[...] = jnp.dot(cast(gated), cast(wout_ref[...]),
                         preferred_element_type=jnp.float32).astype(o_ref.dtype)


def selective_ssm(x, params, *, mxu_dtype=jnp.float32):
    """x: (batch, seqlen, d_model) -> (batch, seqlen, d_model)."""
    W_in, W_conv, b_conv, W_x, W_dt, b_dt, A, D, W_out = params
    batch, L, d_model = x.shape
    d_inner, d_conv = W_conv.shape
    d_state = A.shape[1]

    # Layout prep in plain XLA (outside the kernel): t-major rows so each
    # timestep's state block is a contiguous leading-dim slice in the kernel;
    # pre-split W_in / W_x and pre-transpose W_conv / A for lane-dense use.
    x2 = jnp.transpose(x, (1, 0, 2)).reshape(L * batch, d_model)
    W_ix, W_iz = W_in[:, :d_inner], W_in[:, d_inner:]
    W_B, W_C = W_x[:, :d_state], W_x[:, d_state:]
    W_conv_t = W_conv.T                      # (d_conv, d_inner)
    A_T = A.T                                # (d_state, d_inner)

    kernel = functools.partial(selective_ssm_kernel, batch=batch,
                               mxu_dtype=mxu_dtype)
    out2 = pl.pallas_call(
        kernel,
        out_shape=jax.ShapeDtypeStruct((L * batch, d_model), x.dtype),
        in_specs=[pl.BlockSpec(memory_space=pltpu.MemorySpace.VMEM)] * 12,
        out_specs=pl.BlockSpec(memory_space=pltpu.MemorySpace.VMEM),
        scratch_shapes=[
            pltpu.VMEM((L * batch, d_state, d_inner), jnp.float32),  # exp(dt*A)
            pltpu.VMEM((L * batch, d_state, d_inner), jnp.float32),  # dt*B*u
            pltpu.VMEM((L * batch, d_state, d_inner), jnp.float32),  # h history
        ],
        compiler_params=pltpu.CompilerParams(
            vmem_limit_bytes=32 * 1024 * 1024),
    )(x2, W_ix, W_iz, W_conv_t, b_conv, W_B, W_C, W_dt, b_dt, A_T, D, W_out)
    return out2.reshape(L, batch, d_model).transpose(1, 0, 2)


def init_params(key, d_model=32, d_state=16, d_conv=4, expand=2):
    d_inner = int(expand * d_model)
    ks = jax.random.split(key, 7)
    scale = lambda fan_in: 1.0 / jnp.sqrt(jnp.float32(fan_in))
    W_in = jax.random.normal(ks[0], (d_model, 2 * d_inner), jnp.float32) * scale(d_model)
    W_conv = jax.random.normal(ks[1], (d_inner, d_conv), jnp.float32) * scale(d_conv)
    b_conv = jax.random.normal(ks[2], (1, d_inner), jnp.float32) * 0.1
    W_x = jax.random.normal(ks[3], (d_inner, 2 * d_state), jnp.float32) * scale(d_inner)
    W_dt = jax.random.normal(ks[4], (d_inner, d_inner), jnp.float32) * scale(d_inner)
    b_dt = jax.random.normal(ks[5], (1, d_inner), jnp.float32) * 0.1
    # A_log = log(arange(1..d_state)) per channel ; A = -exp(A_log)
    A_log = jnp.log(jnp.tile(jnp.arange(1, d_state + 1, dtype=jnp.float32)[None, :],
                             (d_inner, 1)))
    A = -jnp.exp(A_log)
    D = jnp.ones((1, d_inner), jnp.float32)
    W_out = jax.random.normal(ks[6], (d_inner, d_model), jnp.float32) * scale(d_inner)
    return (W_in, W_conv, b_conv, W_x, W_dt, b_dt, A, D, W_out)


def reference(x, params):
    """Pure-JAX reference mirroring the PyTorch forward (eval mode)."""
    W_in, W_conv, b_conv, W_x, W_dt, b_dt, A, D, W_out = params
    batch, L, d_model = x.shape
    d_inner, d_conv = W_conv.shape
    d_state = A.shape[1]
    xz = x @ W_in
    x_in, z = xz[..., :d_inner], xz[..., d_inner:]
    xpad = jnp.pad(x_in, ((0, 0), (d_conv - 1, 0), (0, 0)))
    conv = b_conv[None]
    for k in range(d_conv):
        conv = conv + xpad[:, k:k + L, :] * W_conv[:, k][None, None, :]
    xs = conv * jax.nn.sigmoid(conv)
    bc = xs @ W_x
    Bm, Cm = bc[..., :d_state], bc[..., d_state:]
    dt = jax.nn.softplus(xs @ W_dt + b_dt[None])

    def step(h, inp):
        u_t, dt_t, b_t, c_t = inp
        dA = jnp.exp(dt_t[:, :, None] * A[None])
        h = dA * h + dt_t[:, :, None] * b_t[:, None, :] * u_t[:, :, None]
        y = jnp.sum(h * c_t[:, None, :], axis=-1) + D[0] * u_t
        return h, y

    h0 = jnp.zeros((batch, d_inner, d_state), jnp.float32)
    _, ys = jax.lax.scan(step, h0,
                         (xs.transpose(1, 0, 2), dt.transpose(1, 0, 2),
                          Bm.transpose(1, 0, 2), Cm.transpose(1, 0, 2)))
    y = ys.transpose(1, 0, 2)
    y = y * (z * jax.nn.sigmoid(z))
    return y @ W_out


if __name__ == "__main__":
    key = jax.random.PRNGKey(0)
    pkey, xkey = jax.random.split(key)

    d_model, d_state, d_conv, expand = 32, 16, 4, 2
    batch, seqlen = 2, 16
    params = init_params(pkey, d_model, d_state, d_conv, expand)
    x = jax.random.normal(xkey, (batch, seqlen, d_model), jnp.float32)

    out = jax.block_until_ready(selective_ssm(x, params))

    ref = reference(x, params)
    assert out.shape == (batch, seqlen, d_model)
    err = float(jnp.max(jnp.abs(out - ref)))
    assert jnp.allclose(out, ref, atol=1e-3, rtol=1e-3), f"max abs err {err}"
    print("KERNEL_OK")
</pallas_src>

<mosaic_0001>
module attributes {stable_mosaic.version = 11 : i64} {
  func.func @selective_ssm_kernel(%arg0: memref<32x32xf32, #tpu.memory_space<vmem>>, %arg1: memref<32x64xf32, #tpu.memory_space<vmem>>, %arg2: memref<32x64xf32, #tpu.memory_space<vmem>>, %arg3: memref<4x64xf32, #tpu.memory_space<vmem>>, %arg4: memref<1x64xf32, #tpu.memory_space<vmem>>, %arg5: memref<64x16xf32, #tpu.memory_space<vmem>>, %arg6: memref<64x16xf32, #tpu.memory_space<vmem>>, %arg7: memref<64x64xf32, #tpu.memory_space<vmem>>, %arg8: memref<1x64xf32, #tpu.memory_space<vmem>>, %arg9: memref<16x64xf32, #tpu.memory_space<vmem>>, %arg10: memref<1x64xf32, #tpu.memory_space<vmem>>, %arg11: memref<64x32xf32, #tpu.memory_space<vmem>>, %arg12: memref<32x32xf32, #tpu.memory_space<vmem>>, %arg13: memref<32x16x64xf32, #tpu.memory_space<vmem>>, %arg14: memref<32x16x64xf32, #tpu.memory_space<vmem>>, %arg15: memref<32x16x64xf32, #tpu.memory_space<vmem>>) attributes {dimension_semantics = [], scalar_prefetch = 0 : i64, scratch_operands = 3 : i64, tpu.core_type = #tpu.core_type<tc>} {
    %c0 = arith.constant 0 : index
    %c0_0 = arith.constant 0 : index
    %0 = vector.load %arg0[%c0, %c0_0] : memref<32x32xf32, #tpu.memory_space<vmem>>, vector<32x32xf32>
    %c0_1 = arith.constant 0 : index
    %c0_2 = arith.constant 0 : index
    %1 = vector.load %arg1[%c0_1, %c0_2] : memref<32x64xf32, #tpu.memory_space<vmem>>, vector<32x64xf32>
    %cst = arith.constant dense<0.000000e+00> : vector<32x64xf32>
    %2 = tpu.matmul %0, %1, %cst {dimension_numbers = #tpu.dot_dimension_numbers<[1], [0], [0], [1], [0, 0, 1, 1], [], []>} : vector<32x32xf32>, vector<32x64xf32>, vector<32x64xf32> -> vector<32x64xf32>
    %c0_3 = arith.constant 0 : index
    %c0_4 = arith.constant 0 : index
    %3 = vector.load %arg2[%c0_3, %c0_4] : memref<32x64xf32, #tpu.memory_space<vmem>>, vector<32x64xf32>
    %cst_5 = arith.constant dense<0.000000e+00> : vector<32x64xf32>
    %4 = tpu.matmul %0, %3, %cst_5 {dimension_numbers = #tpu.dot_dimension_numbers<[1], [0], [0], [1], [0, 0, 1, 1], [], []>} : vector<32x32xf32>, vector<32x64xf32>, vector<32x64xf32> -> vector<32x64xf32>
    %c0_6 = arith.constant 0 : index
    %c0_7 = arith.constant 0 : index
    %5 = vector.load %arg3[%c0_6, %c0_7] : memref<4x64xf32, #tpu.memory_space<vmem>>, vector<4x64xf32>
    %c0_8 = arith.constant 0 : index
    %c0_9 = arith.constant 0 : index
    %6 = vector.load %arg4[%c0_8, %c0_9] : memref<1x64xf32, #tpu.memory_space<vmem>>, vector<1x64xf32>
    %7 = vector.extract_strided_slice %5 {offsets = [3, 0], sizes = [1, 64], strides = [1, 1]} : vector<4x64xf32> to vector<1x64xf32>
    %8 = vector.shape_cast %7 : vector<1x64xf32> to vector<64xf32>
    %9 = vector.shape_cast %8 : vector<64xf32> to vector<1x64xf32>
    %10 = vector.broadcast %9 : vector<1x64xf32> to vector<32x64xf32>
    %11 = arith.mulf %2, %10 : vector<32x64xf32>
    %12 = vector.broadcast %6 : vector<1x64xf32> to vector<32x64xf32>
    %13 = arith.addf %12, %11 : vector<32x64xf32>
    %cst_10 = arith.constant 0.000000e+00 : f32
    %14 = vector.broadcast %cst_10 : f32 to vector<2x64xf32>
    %15 = vector.extract_strided_slice %2 {offsets = [0, 0], sizes = [30, 64], strides = [1, 1]} : vector<32x64xf32> to vector<30x64xf32>
    %16 = tpu.concatenate %14, %15 in 0 : vector<2x64xf32>, vector<30x64xf32> -> vector<32x64xf32>
    %17 = vector.extract_strided_slice %5 {offsets = [2, 0], sizes = [1, 64], strides = [1, 1]} : vector<4x64xf32> to vector<1x64xf32>
    %18 = vector.shape_cast %17 : vector<1x64xf32> to vector<64xf32>
    %19 = vector.shape_cast %18 : vector<64xf32> to vector<1x64xf32>
    %20 = vector.broadcast %19 : vector<1x64xf32> to vector<32x64xf32>
    %21 = arith.mulf %16, %20 : vector<32x64xf32>
    %22 = arith.addf %13, %21 : vector<32x64xf32>
    %cst_11 = arith.constant 0.000000e+00 : f32
    %23 = vector.broadcast %cst_11 : f32 to vector<4x64xf32>
    %24 = vector.extract_strided_slice %2 {offsets = [0, 0], sizes = [28, 64], strides = [1, 1]} : vector<32x64xf32> to vector<28x64xf32>
    %25 = tpu.concatenate %23, %24 in 0 : vector<4x64xf32>, vector<28x64xf32> -> vector<32x64xf32>
    %26 = vector.extract_strided_slice %5 {offsets = [1, 0], sizes = [1, 64], strides = [1, 1]} : vector<4x64xf32> to vector<1x64xf32>
    %27 = vector.shape_cast %26 : vector<1x64xf32> to vector<64xf32>
    %28 = vector.shape_cast %27 : vector<64xf32> to vector<1x64xf32>
    %29 = vector.broadcast %28 : vector<1x64xf32> to vector<32x64xf32>
    %30 = arith.mulf %25, %29 : vector<32x64xf32>
    %31 = arith.addf %22, %30 : vector<32x64xf32>
    %cst_12 = arith.constant 0.000000e+00 : f32
    %32 = vector.broadcast %cst_12 : f32 to vector<6x64xf32>
    %33 = vector.extract_strided_slice %2 {offsets = [0, 0], sizes = [26, 64], strides = [1, 1]} : vector<32x64xf32> to vector<26x64xf32>
    %34 = tpu.concatenate %32, %33 in 0 : vector<6x64xf32>, vector<26x64xf32> -> vector<32x64xf32>
    %35 = vector.extract_strided_slice %5 {offsets = [0, 0], sizes = [1, 64], strides = [1, 1]} : vector<4x64xf32> to vector<1x64xf32>
    %36 = vector.shape_cast %35 : vector<1x64xf32> to vector<64xf32>
    %37 = vector.shape_cast %36 : vector<64xf32> to vector<1x64xf32>
    %38 = vector.broadcast %37 : vector<1x64xf32> to vector<32x64xf32>
    %39 = arith.mulf %34, %38 : vector<32x64xf32>
    %40 = arith.addf %31, %39 : vector<32x64xf32>
    %41 = arith.negf %40 : vector<32x64xf32>
    %42 = math.exp %41 : vector<32x64xf32>
    %cst_13 = arith.constant 1.000000e+00 : f32
    %43 = vector.broadcast %cst_13 : f32 to vector<32x64xf32>
    %44 = arith.addf %43, %42 : vector<32x64xf32>
    %45 = arith.divf %43, %44 : vector<32x64xf32>
    %46 = arith.mulf %40, %45 : vector<32x64xf32>
    %c0_14 = arith.constant 0 : index
    %c0_15 = arith.constant 0 : index
    %47 = vector.load %arg7[%c0_14, %c0_15] : memref<64x64xf32, #tpu.memory_space<vmem>>, vector<64x64xf32>
    %cst_16 = arith.constant dense<0.000000e+00> : vector<32x64xf32>
    %48 = tpu.matmul %46, %47, %cst_16 {dimension_numbers = #tpu.dot_dimension_numbers<[1], [0], [0], [1], [0, 0, 1, 1], [], []>} : vector<32x64xf32>, vector<64x64xf32>, vector<32x64xf32> -> vector<32x64xf32>
    %c0_17 = arith.constant 0 : index
    %c0_18 = arith.constant 0 : index
    %49 = vector.load %arg8[%c0_17, %c0_18] : memref<1x64xf32, #tpu.memory_space<vmem>>, vector<1x64xf32>
    %50 = vector.broadcast %49 : vector<1x64xf32> to vector<32x64xf32>
    %51 = arith.addf %48, %50 : vector<32x64xf32>
    %cst_19 = arith.constant 0.000000e+00 : f32
    %52 = vector.broadcast %cst_19 : f32 to vector<32x64xf32>
    %53 = arith.maximumf %51, %52 : vector<32x64xf32>
    %54 = vector.broadcast %cst_19 : f32 to vector<32x64xf32>
    %55 = arith.subf %51, %54 : vector<32x64xf32>
    %56 = arith.cmpf one, %55, %55 : vector<32x64xf32>
    %57 = vector.broadcast %cst_19 : f32 to vector<32x64xf32>
    %58 = arith.addf %51, %57 : vector<32x64xf32>
    %59 = math.absf %55 : vector<32x64xf32>
    %cst_20 = arith.constant 0.000000e+00 : f32
    %60 = vector.broadcast %cst_20 : f32 to vector<32x64xf32>
    %61 = arith.subf %60, %59 : vector<32x64xf32>
    %62 = math.exp %61 : vector<32x64xf32>
    %63 = math.log1p %62 : vector<32x64xf32>
    %64 = arith.addf %53, %63 : vector<32x64xf32>
    %65 = arith.select %56, %58, %64 : vector<32x64xi1>, vector<32x64xf32>
    %c0_21 = arith.constant 0 : index
    %c0_22 = arith.constant 0 : index
    %66 = vector.load %arg5[%c0_21, %c0_22] : memref<64x16xf32, #tpu.memory_space<vmem>>, vector<64x16xf32>
    %cst_23 = arith.constant dense<0.000000e+00> : vector<32x16xf32>
    %67 = tpu.matmul %46, %66, %cst_23 {dimension_numbers = #tpu.dot_dimension_numbers<[1], [0], [0], [1], [0, 0, 1, 1], [], []>} : vector<32x64xf32>, vector<64x16xf32>, vector<32x16xf32> -> vector<32x16xf32>
    %c0_24 = arith.constant 0 : index
    %c0_25 = arith.constant 0 : index
    %68 = vector.load %arg6[%c0_24, %c0_25] : memref<64x16xf32, #tpu.memory_space<vmem>>, vector<64x16xf32>
    %cst_26 = arith.constant dense<0.000000e+00> : vector<32x16xf32>
    %69 = tpu.matmul %46, %68, %cst_26 {dimension_numbers = #tpu.dot_dimension_numbers<[1], [0], [0], [1], [0, 0, 1, 1], [], []>} : vector<32x64xf32>, vector<64x16xf32>, vector<32x16xf32> -> vector<32x16xf32>
    %70 = vector.shape_cast %65 : vector<32x64xf32> to vector<32x1x64xf32>
    %c0_27 = arith.constant 0 : index
    %c0_28 = arith.constant 0 : index
    %71 = vector.load %arg9[%c0_27, %c0_28] : memref<16x64xf32, #tpu.memory_space<vmem>>, vector<16x64xf32>
    %72 = vector.shape_cast %71 : vector<16x64xf32> to vector<1x16x64xf32>
    %73 = vector.broadcast %70 : vector<32x1x64xf32> to vector<32x16x64xf32>
    %74 = vector.broadcast %72 : vector<1x16x64xf32> to vector<32x16x64xf32>
    %75 = arith.mulf %73, %74 : vector<32x16x64xf32>
    %76 = math.exp %75 : vector<32x16x64xf32>
    %c0_29 = arith.constant 0 : index
    %c0_30 = arith.constant 0 : index
    %c0_31 = arith.constant 0 : index
    %77 = vector.load %arg13[%c0_29, %c0_30, %c0_31] : memref<32x16x64xf32, #tpu.memory_space<vmem>>, vector<32x16x64xf32>
    tpu.vector_store %arg13[%c0_29, %c0_30, %c0_31], %76 {strides = array<i32>} : memref<32x16x64xf32, #tpu.memory_space<vmem>>, vector<32x16x64xf32>,
    %78 = arith.mulf %65, %46 : vector<32x64xf32>
    %79 = vector.shape_cast %78 : vector<32x64xf32> to vector<32x1x64xf32>
    %80 = vector.shape_cast %67 : vector<32x16xf32> to vector<32x16x1xf32>
    %81 = vector.broadcast %79 : vector<32x1x64xf32> to vector<32x16x64xf32>
    %82 = vector.broadcast %80 : vector<32x16x1xf32> to vector<32x16x64xf32>
    %83 = arith.mulf %81, %82 : vector<32x16x64xf32>
    %c0_32 = arith.constant 0 : index
    %c0_33 = arith.constant 0 : index
    %c0_34 = arith.constant 0 : index
    %84 = vector.load %arg14[%c0_32, %c0_33, %c0_34] : memref<32x16x64xf32, #tpu.memory_space<vmem>>, vector<32x16x64xf32>
    tpu.vector_store %arg14[%c0_32, %c0_33, %c0_34], %83 {strides = array<i32>} : memref<32x16x64xf32, #tpu.memory_space<vmem>>, vector<32x16x64xf32>,
    %cst_35 = arith.constant 0.000000e+00 : f32
    %85 = vector.broadcast %cst_35 : f32 to vector<2x16x64xf32>
    %c0_i32 = arith.constant 0 : i32
    %c2_i32 = arith.constant 2 : i32
    %86 = arith.muli %c0_i32, %c2_i32 : i32
    %87 = arith.index_cast %86 : i32 to index
    %c0_36 = arith.constant 0 : index
    %c0_37 = arith.constant 0 : index
    %88 = vector.load %arg13[%87, %c0_36, %c0_37] : memref<32x16x64xf32, #tpu.memory_space<vmem>>, vector<2x16x64xf32>
    %89 = arith.mulf %88, %85 : vector<2x16x64xf32>
    %90 = arith.index_cast %86 : i32 to index
    %c0_38 = arith.constant 0 : index
    %c0_39 = arith.constant 0 : index
    %91 = vector.load %arg14[%90, %c0_38, %c0_39] : memref<32x16x64xf32, #tpu.memory_space<vmem>>, vector<2x16x64xf32>
    %92 = arith.addf %89, %91 : vector<2x16x64xf32>
    %93 = arith.index_cast %86 : i32 to index
    %c0_40 = arith.constant 0 : index
    %c0_41 = arith.constant 0 : index
    %94 = vector.load %arg15[%93, %c0_40, %c0_41] : memref<32x16x64xf32, #tpu.memory_space<vmem>>, vector<2x16x64xf32>
    tpu.vector_store %arg15[%93, %c0_40, %c0_41], %92 {strides = array<i32>} : memref<32x16x64xf32, #tpu.memory_space<vmem>>, vector<2x16x64xf32>,
    %c1_i32 = arith.constant 1 : i32
    %c2_i32_42 = arith.constant 2 : i32
    %95 = arith.muli %c1_i32, %c2_i32_42 : i32
    %96 = arith.index_cast %95 : i32 to index
    %c0_43 = arith.constant 0 : index
    %c0_44 = arith.constant 0 : index
    %97 = vector.load %arg13[%96, %c0_43, %c0_44] : memref<32x16x64xf32, #tpu.memory_space<vmem>>, vector<2x16x64xf32>
    %98 = arith.mulf %97, %92 : vector<2x16x64xf32>
    %99 = arith.index_cast %95 : i32 to index
    %c0_45 = arith.constant 0 : index
    %c0_46 = arith.constant 0 : index
    %100 = vector.load %arg14[%99, %c0_45, %c0_46] : memref<32x16x64xf32, #tpu.memory_space<vmem>>, vector<2x16x64xf32>
    %101 = arith.addf %98, %100 : vector<2x16x64xf32>
    %102 = arith.index_cast %95 : i32 to index
    %c0_47 = arith.constant 0 : index
    %c0_48 = arith.constant 0 : index
    %103 = vector.load %arg15[%102, %c0_47, %c0_48] : memref<32x16x64xf32, #tpu.memory_space<vmem>>, vector<2x16x64xf32>
    tpu.vector_store %arg15[%102, %c0_47, %c0_48], %101 {strides = array<i32>} : memref<32x16x64xf32, #tpu.memory_space<vmem>>, vector<2x16x64xf32>,
    %c2_i32_49 = arith.constant 2 : i32
    %c2_i32_50 = arith.constant 2 : i32
    %104 = arith.muli %c2_i32_49, %c2_i32_50 : i32
    %105 = arith.index_cast %104 : i32 to index
    %c0_51 = arith.constant 0 : index
    %c0_52 = arith.constant 0 : index
    %106 = vector.load %arg13[%105, %c0_51, %c0_52] : memref<32x16x64xf32, #tpu.memory_space<vmem>>, vector<2x16x64xf32>
    %107 = arith.mulf %106, %101 : vector<2x16x64xf32>
    %108 = arith.index_cast %104 : i32 to index
    %c0_53 = arith.constant 0 : index
    %c0_54 = arith.constant 0 : index
    %109 = vector.load %arg14[%108, %c0_53, %c0_54] : memref<32x16x64xf32, #tpu.memory_space<vmem>>, vector<2x16x64xf32>
    %110 = arith.addf %107, %109 : vector<2x16x64xf32>
    %111 = arith.index_cast %104 : i32 to index
    %c0_55 = arith.constant 0 : index
    %c0_56 = arith.constant 0 : index
    %112 = vector.load %arg15[%111, %c0_55, %c0_56] : memref<32x16x64xf32, #tpu.memory_space<vmem>>, vector<2x16x64xf32>
    tpu.vector_store %arg15[%111, %c0_55, %c0_56], %110 {strides = array<i32>} : memref<32x16x64xf32, #tpu.memory_space<vmem>>, vector<2x16x64xf32>,
    %c3_i32 = arith.constant 3 : i32
    %c2_i32_57 = arith.constant 2 : i32
    %113 = arith.muli %c3_i32, %c2_i32_57 : i32
    %114 = arith.index_cast %113 : i32 to index
    %c0_58 = arith.constant 0 : index
    %c0_59 = arith.constant 0 : index
    %115 = vector.load %arg13[%114, %c0_58, %c0_59] : memref<32x16x64xf32, #tpu.memory_space<vmem>>, vector<2x16x64xf32>
    %116 = arith.mulf %115, %110 : vector<2x16x64xf32>
    %117 = arith.index_cast %113 : i32 to index
    %c0_60 = arith.constant 0 : index
    %c0_61 = arith.constant 0 : index
    %118 = vector.load %arg14[%117, %c0_60, %c0_61] : memref<32x16x64xf32, #tpu.memory_space<vmem>>, vector<2x16x64xf32>
    %119 = arith.addf %116, %118 : vector<2x16x64xf32>
    %120 = arith.index_cast %113 : i32 to index
    %c0_62 = arith.constant 0 : index
    %c0_63 = arith.constant 0 : index
    %121 = vector.load %arg15[%120, %c0_62, %c0_63] : memref<32x16x64xf32, #tpu.memory_space<vmem>>, vector<2x16x64xf32>
    tpu.vector_store %arg15[%120, %c0_62, %c0_63], %119 {strides = array<i32>} : memref<32x16x64xf32, #tpu.memory_space<vmem>>, vector<2x16x64xf32>,
    %c4_i32 = arith.constant 4 : i32
    %c2_i32_64 = arith.constant 2 : i32
    %122 = arith.muli %c4_i32, %c2_i32_64 : i32
    %123 = arith.index_cast %122 : i32 to index
    %c0_65 = arith.constant 0 : index
    %c0_66 = arith.constant 0 : index
    %124 = vector.load %arg13[%123, %c0_65, %c0_66] : memref<32x16x64xf32, #tpu.memory_space<vmem>>, vector<2x16x64xf32>
    %125 = arith.mulf %124, %119 : vector<2x16x64xf32>
    %126 = arith.index_cast %122 : i32 to index
    %c0_67 = arith.constant 0 : index
    %c0_68 = arith.constant 0 : index
    %127 = vector.load %arg14[%126, %c0_67, %c0_68] : memref<32x16x64xf32, #tpu.memory_space<vmem>>, vector<2x16x64xf32>
    %128 = arith.addf %125, %127 : vector<2x16x64xf32>
    %129 = arith.index_cast %122 : i32 to index
    %c0_69 = arith.constant 0 : index
    %c0_70 = arith.constant 0 : index
    %130 = vector.load %arg15[%129, %c0_69, %c0_70] : memref<32x16x64xf32, #tpu.memory_space<vmem>>, vector<2x16x64xf32>
    tpu.vector_store %arg15[%129, %c0_69, %c0_70], %128 {strides = array<i32>} : memref<32x16x64xf32, #tpu.memory_space<vmem>>, vector<2x16x64xf32>,
    %c5_i32 = arith.constant 5 : i32
    %c2_i32_71 = arith.constant 2 : i32
    %131 = arith.muli %c5_i32, %c2_i32_71 : i32
    %132 = arith.index_cast %131 : i32 to index
    %c0_72 = arith.constant 0 : index
    %c0_73 = arith.constant 0 : index
    %133 = vector.load %arg13[%132, %c0_72, %c0_73] : memref<32x16x64xf32, #tpu.memory_space<vmem>>, vector<2x16x64xf32>
    %134 = arith.mulf %133, %128 : vector<2x16x64xf32>
    %135 = arith.index_cast %131 : i32 to index
    %c0_74 = arith.constant 0 : index
    %c0_75 = arith.constant 0 : index
    %136 = vector.load %arg14[%135, %c0_74, %c0_75] : memref<32x16x64xf32, #tpu.memory_space<vmem>>, vector<2x16x64xf32>
    %137 = arith.addf %134, %136 : vector<2x16x64xf32>
    %138 = arith.index_cast %131 : i32 to index
    %c0_76 = arith.constant 0 : index
    %c0_77 = arith.constant 0 : index
    %139 = vector.load %arg15[%138, %c0_76, %c0_77] : memref<32x16x64xf32, #tpu.memory_space<vmem>>, vector<2x16x64xf32>
    tpu.vector_store %arg15[%138, %c0_76, %c0_77], %137 {strides = array<i32>} : memref<32x16x64xf32, #tpu.memory_space<vmem>>, vector<2x16x64xf32>,
    %c6_i32 = arith.constant 6 : i32
    %c2_i32_78 = arith.constant 2 : i32
    %140 = arith.muli %c6_i32, %c2_i32_78 : i32
    %141 = arith.index_cast %140 : i32 to index
    %c0_79 = arith.constant 0 : index
    %c0_80 = arith.constant 0 : index
    %142 = vector.load %arg13[%141, %c0_79, %c0_80] : memref<32x16x64xf32, #tpu.memory_space<vmem>>, vector<2x16x64xf32>
    %143 = arith.mulf %142, %137 : vector<2x16x64xf32>
    %144 = arith.index_cast %140 : i32 to index
    %c0_81 = arith.constant 0 : index
    %c0_82 = arith.constant 0 : index
    %145 = vector.load %arg14[%144, %c0_81, %c0_82] : memref<32x16x64xf32, #tpu.memory_space<vmem>>, vector<2x16x64xf32>
    %146 = arith.addf %143, %145 : vector<2x16x64xf32>
    %147 = arith.index_cast %140 : i32 to index
    %c0_83 = arith.constant 0 : index
    %c0_84 = arith.constant 0 : index
    %148 = vector.load %arg15[%147, %c0_83, %c0_84] : memref<32x16x64xf32, #tpu.memory_space<vmem>>, vector<2x16x64xf32>
    tpu.vector_store %arg15[%147, %c0_83, %c0_84], %146 {strides = array<i32>} : memref<32x16x64xf32, #tpu.memory_space<vmem>>, vector<2x16x64xf32>,
    %c7_i32 = arith.constant 7 : i32
    %c2_i32_85 = arith.constant 2 : i32
    %149 = arith.muli %c7_i32, %c2_i32_85 : i32
    %150 = arith.index_cast %149 : i32 to index
    %c0_86 = arith.constant 0 : index
    %c0_87 = arith.constant 0 : index
    %151 = vector.load %arg13[%150, %c0_86, %c0_87] : memref<32x16x64xf32, #tpu.memory_space<vmem>>, vector<2x16x64xf32>
    %152 = arith.mulf %151, %146 : vector<2x16x64xf32>
    %153 = arith.index_cast %149 : i32 to index
    %c0_88 = arith.constant 0 : index
    %c0_89 = arith.constant 0 : index
    %154 = vector.load %arg14[%153, %c0_88, %c0_89] : memref<32x16x64xf32, #tpu.memory_space<vmem>>, vector<2x16x64xf32>
    %155 = arith.addf %152, %154 : vector<2x16x64xf32>
    %156 = arith.index_cast %149 : i32 to index
    %c0_90 = arith.constant 0 : index
    %c0_91 = arith.constant 0 : index
    %157 = vector.load %arg15[%156, %c0_90, %c0_91] : memref<32x16x64xf32, #tpu.memory_space<vmem>>, vector<2x16x64xf32>
    tpu.vector_store %arg15[%156, %c0_90, %c0_91], %155 {strides = array<i32>} : memref<32x16x64xf32, #tpu.memory_space<vmem>>, vector<2x16x64xf32>,
    %c8_i32 = arith.constant 8 : i32
    %c2_i32_92 = arith.constant 2 : i32
    %158 = arith.muli %c8_i32, %c2_i32_92 : i32
    %159 = arith.index_cast %158 : i32 to index
    %c0_93 = arith.constant 0 : index
    %c0_94 = arith.constant 0 : index
    %160 = vector.load %arg13[%159, %c0_93, %c0_94] : memref<32x16x64xf32, #tpu.memory_space<vmem>>, vector<2x16x64xf32>
    %161 = arith.mulf %160, %155 : vector<2x16x64xf32>
    %162 = arith.index_cast %158 : i32 to index
    %c0_95 = arith.constant 0 : index
    %c0_96 = arith.constant 0 : index
    %163 = vector.load %arg14[%162, %c0_95, %c0_96] : memref<32x16x64xf32, #tpu.memory_space<vmem>>, vector<2x16x64xf32>
    %164 = arith.addf %161, %163 : vector<2x16x64xf32>
    %165 = arith.index_cast %158 : i32 to index
    %c0_97 = arith.constant 0 : index
    %c0_98 = arith.constant 0 : index
    %166 = vector.load %arg15[%165, %c0_97, %c0_98] : memref<32x16x64xf32, #tpu.memory_space<vmem>>, vector<2x16x64xf32>
    tpu.vector_store %arg15[%165, %c0_97, %c0_98], %164 {strides = array<i32>} : memref<32x16x64xf32, #tpu.memory_space<vmem>>, vector<2x16x64xf32>,
    %c9_i32 = arith.constant 9 : i32
    %c2_i32_99 = arith.constant 2 : i32
    %167 = arith.muli %c9_i32, %c2_i32_99 : i32
    %168 = arith.index_cast %167 : i32 to index
    %c0_100 = arith.constant 0 : index
    %c0_101 = arith.constant 0 : index
    %169 = vector.load %arg13[%168, %c0_100, %c0_101] : memref<32x16x64xf32, #tpu.memory_space<vmem>>, vector<2x16x64xf32>
    %170 = arith.mulf %169, %164 : vector<2x16x64xf32>
    %171 = arith.index_cast %167 : i32 to index
    %c0_102 = arith.constant 0 : index
    %c0_103 = arith.constant 0 : index
    %172 = vector.load %arg14[%171, %c0_102, %c0_103] : memref<32x16x64xf32, #tpu.memory_space<vmem>>, vector<2x16x64xf32>
    %173 = arith.addf %170, %172 : vector<2x16x64xf32>
    %174 = arith.index_cast %167 : i32 to index
    %c0_104 = arith.constant 0 : index
    %c0_105 = arith.constant 0 : index
    %175 = vector.load %arg15[%174, %c0_104, %c0_105] : memref<32x16x64xf32, #tpu.memory_space<vmem>>, vector<2x16x64xf32>
    tpu.vector_store %arg15[%174, %c0_104, %c0_105], %173 {strides = array<i32>} : memref<32x16x64xf32, #tpu.memory_space<vmem>>, vector<2x16x64xf32>,
    %c10_i32 = arith.constant 10 : i32
    %c2_i32_106 = arith.constant 2 : i32
    %176 = arith.muli %c10_i32, %c2_i32_106 : i32
    %177 = arith.index_cast %176 : i32 to index
    %c0_107 = arith.constant 0 : index
    %c0_108 = arith.constant 0 : index
    %178 = vector.load %arg13[%177, %c0_107, %c0_108] : memref<32x16x64xf32, #tpu.memory_space<vmem>>, vector<2x16x64xf32>
    %179 = arith.mulf %178, %173 : vector<2x16x64xf32>
    %180 = arith.index_cast %176 : i32 to index
    %c0_109 = arith.constant 0 : index
    %c0_110 = arith.constant 0 : index
    %181 = vector.load %arg14[%180, %c0_109, %c0_110] : memref<32x16x64xf32, #tpu.memory_space<vmem>>, vector<2x16x64xf32>
    %182 = arith.addf %179, %181 : vector<2x16x64xf32>
    %183 = arith.index_cast %176 : i32 to index
    %c0_111 = arith.constant 0 : index
    %c0_112 = arith.constant 0 : index
    %184 = vector.load %arg15[%183, %c0_111, %c0_112] : memref<32x16x64xf32, #tpu.memory_space<vmem>>, vector<2x16x64xf32>
    tpu.vector_store %arg15[%183, %c0_111, %c0_112], %182 {strides = array<i32>} : memref<32x16x64xf32, #tpu.memory_space<vmem>>, vector<2x16x64xf32>,
    %c11_i32 = arith.constant 11 : i32
    %c2_i32_113 = arith.constant 2 : i32
    %185 = arith.muli %c11_i32, %c2_i32_113 : i32
    %186 = arith.index_cast %185 : i32 to index
    %c0_114 = arith.constant 0 : index
    %c0_115 = arith.constant 0 : index
    %187 = vector.load %arg13[%186, %c0_114, %c0_115] : memref<32x16x64xf32, #tpu.memory_space<vmem>>, vector<2x16x64xf32>
    %188 = arith.mulf %187, %182 : vector<2x16x64xf32>
    %189 = arith.index_cast %185 : i32 to index
    %c0_116 = arith.constant 0 : index
    %c0_117 = arith.constant 0 : index
    %190 = vector.load %arg14[%189, %c0_116, %c0_117] : memref<32x16x64xf32, #tpu.memory_space<vmem>>, vector<2x16x64xf32>
    %191 = arith.addf %188, %190 : vector<2x16x64xf32>
    %192 = arith.index_cast %185 : i32 to index
    %c0_118 = arith.constant 0 : index
    %c0_119 = arith.constant 0 : index
    %193 = vector.load %arg15[%192, %c0_118, %c0_119] : memref<32x16x64xf32, #tpu.memory_space<vmem>>, vector<2x16x64xf32>
    tpu.vector_store %arg15[%192, %c0_118, %c0_119], %191 {strides = array<i32>} : memref<32x16x64xf32, #tpu.memory_space<vmem>>, vector<2x16x64xf32>,
    %c12_i32 = arith.constant 12 : i32
    %c2_i32_120 = arith.constant 2 : i32
    %194 = arith.muli %c12_i32, %c2_i32_120 : i32
    %195 = arith.index_cast %194 : i32 to index
    %c0_121 = arith.constant 0 : index
    %c0_122 = arith.constant 0 : index
    %196 = vector.load %arg13[%195, %c0_121, %c0_122] : memref<32x16x64xf32, #tpu.memory_space<vmem>>, vector<2x16x64xf32>
    %197 = arith.mulf %196, %191 : vector<2x16x64xf32>
    %198 = arith.index_cast %194 : i32 to index
    %c0_123 = arith.constant 0 : index
    %c0_124 = arith.constant 0 : index
    %199 = vector.load %arg14[%198, %c0_123, %c0_124] : memref<32x16x64xf32, #tpu.memory_space<vmem>>, vector<2x16x64xf32>
    %200 = arith.addf %197, %199 : vector<2x16x64xf32>
    %201 = arith.index_cast %194 : i32 to index
    %c0_125 = arith.constant 0 : index
    %c0_126 = arith.constant 0 : index
    %202 = vector.load %arg15[%201, %c0_125, %c0_126] : memref<32x16x64xf32, #tpu.memory_space<vmem>>, vector<2x16x64xf32>
    tpu.vector_store %arg15[%201, %c0_125, %c0_126], %200 {strides = array<i32>} : memref<32x16x64xf32, #tpu.memory_space<vmem>>, vector<2x16x64xf32>,
    %c13_i32 = arith.constant 13 : i32
    %c2_i32_127 = arith.constant 2 : i32
    %203 = arith.muli %c13_i32, %c2_i32_127 : i32
    %204 = arith.index_cast %203 : i32 to index
    %c0_128 = arith.constant 0 : index
    %c0_129 = arith.constant 0 : index
    %205 = vector.load %arg13[%204, %c0_128, %c0_129] : memref<32x16x64xf32, #tpu.memory_space<vmem>>, vector<2x16x64xf32>
    %206 = arith.mulf %205, %200 : vector<2x16x64xf32>
    %207 = arith.index_cast %203 : i32 to index
    %c0_130 = arith.constant 0 : index
    %c0_131 = arith.constant 0 : index
    %208 = vector.load %arg14[%207, %c0_130, %c0_131] : memref<32x16x64xf32, #tpu.memory_space<vmem>>, vector<2x16x64xf32>
    %209 = arith.addf %206, %208 : vector<2x16x64xf32>
    %210 = arith.index_cast %203 : i32 to index
    %c0_132 = arith.constant 0 : index
    %c0_133 = arith.constant 0 : index
    %211 = vector.load %arg15[%210, %c0_132, %c0_133] : memref<32x16x64xf32, #tpu.memory_space<vmem>>, vector<2x16x64xf32>
    tpu.vector_store %arg15[%210, %c0_132, %c0_133], %209 {strides = array<i32>} : memref<32x16x64xf32, #tpu.memory_space<vmem>>, vector<2x16x64xf32>,
    %c14_i32 = arith.constant 14 : i32
    %c2_i32_134 = arith.constant 2 : i32
    %212 = arith.muli %c14_i32, %c2_i32_134 : i32
    %213 = arith.index_cast %212 : i32 to index
    %c0_135 = arith.constant 0 : index
    %c0_136 = arith.constant 0 : index
    %214 = vector.load %arg13[%213, %c0_135, %c0_136] : memref<32x16x64xf32, #tpu.memory_space<vmem>>, vector<2x16x64xf32>
    %215 = arith.mulf %214, %209 : vector<2x16x64xf32>
    %216 = arith.index_cast %212 : i32 to index
    %c0_137 = arith.constant 0 : index
    %c0_138 = arith.constant 0 : index
    %217 = vector.load %arg14[%216, %c0_137, %c0_138] : memref<32x16x64xf32, #tpu.memory_space<vmem>>, vector<2x16x64xf32>
    %218 = arith.addf %215, %217 : vector<2x16x64xf32>
    %219 = arith.index_cast %212 : i32 to index
    %c0_139 = arith.constant 0 : index
    %c0_140 = arith.constant 0 : index
    %220 = vector.load %arg15[%219, %c0_139, %c0_140] : memref<32x16x64xf32, #tpu.memory_space<vmem>>, vector<2x16x64xf32>
    tpu.vector_store %arg15[%219, %c0_139, %c0_140], %218 {strides = array<i32>} : memref<32x16x64xf32, #tpu.memory_space<vmem>>, vector<2x16x64xf32>,
    %c15_i32 = arith.constant 15 : i32
    %c2_i32_141 = arith.constant 2 : i32
    %221 = arith.muli %c15_i32, %c2_i32_141 : i32
    %222 = arith.index_cast %221 : i32 to index
    %c0_142 = arith.constant 0 : index
    %c0_143 = arith.constant 0 : index
    %223 = vector.load %arg13[%222, %c0_142, %c0_143] : memref<32x16x64xf32, #tpu.memory_space<vmem>>, vector<2x16x64xf32>
    %224 = arith.mulf %223, %218 : vector<2x16x64xf32>
    %225 = arith.index_cast %221 : i32 to index
    %c0_144 = arith.constant 0 : index
    %c0_145 = arith.constant 0 : index
    %226 = vector.load %arg14[%225, %c0_144, %c0_145] : memref<32x16x64xf32, #tpu.memory_space<vmem>>, vector<2x16x64xf32>
    %227 = arith.addf %224, %226 : vector<2x16x64xf32>
    %228 = arith.index_cast %221 : i32 to index
    %c0_146 = arith.constant 0 : index
    %c0_147 = arith.constant 0 : index
    %229 = vector.load %arg15[%228, %c0_146, %c0_147] : memref<32x16x64xf32, #tpu.memory_space<vmem>>, vector<2x16x64xf32>
    tpu.vector_store %arg15[%228, %c0_146, %c0_147], %227 {strides = array<i32>} : memref<32x16x64xf32, #tpu.memory_space<vmem>>, vector<2x16x64xf32>,
    %c16_i32 = arith.constant 16 : i32
    %c0_148 = arith.constant 0 : index
    %c0_149 = arith.constant 0 : index
    %c0_150 = arith.constant 0 : index
    %230 = vector.load %arg15[%c0_148, %c0_149, %c0_150] : memref<32x16x64xf32, #tpu.memory_space<vmem>>, vector<32x16x64xf32>
    %231 = vector.shape_cast %69 : vector<32x16xf32> to vector<32x16x1xf32>
    %232 = vector.broadcast %231 : vector<32x16x1xf32> to vector<32x16x64xf32>
    %233 = arith.mulf %230, %232 : vector<32x16x64xf32>
    %cst_151 = arith.constant dense<0.000000e+00> : vector<32x64xf32>
    %234 = vector.multi_reduction <add>, %233, %cst_151 [1] : vector<32x16x64xf32> to vector<32x64xf32>
    %c0_152 = arith.constant 0 : index
    %c0_153 = arith.constant 0 : index
    %235 = vector.load %arg10[%c0_152, %c0_153] : memref<1x64xf32, #tpu.memory_space<vmem>>, vector<1x64xf32>
    %236 = vector.broadcast %235 : vector<1x64xf32> to vector<32x64xf32>
    %237 = arith.mulf %46, %236 : vector<32x64xf32>
    %238 = arith.addf %234, %237 : vector<32x64xf32>
    %239 = arith.negf %4 : vector<32x64xf32>
    %240 = math.exp %239 : vector<32x64xf32>
    %cst_154 = arith.constant 1.000000e+00 : f32
    %241 = vector.broadcast %cst_154 : f32 to vector<32x64xf32>
    %242 = arith.addf %241, %240 : vector<32x64xf32>
    %243 = arith.divf %241, %242 : vector<32x64xf32>
    %244 = arith.mulf %4, %243 : vector<32x64xf32>
    %245 = arith.mulf %238, %244 : vector<32x64xf32>
    %c0_155 = arith.constant 0 : index
    %c0_156 = arith.constant 0 : index
    %246 = vector.load %arg11[%c0_155, %c0_156] : memref<64x32xf32, #tpu.memory_space<vmem>>, vector<64x32xf32>
    %cst_157 = arith.constant dense<0.000000e+00> : vector<32x32xf32>
    %247 = tpu.matmul %245, %246, %cst_157 {dimension_numbers = #tpu.dot_dimension_numbers<[1], [0], [0], [1], [0, 0, 1, 1], [], []>} : vector<32x64xf32>, vector<64x32xf32>, vector<32x32xf32> -> vector<32x32xf32>
    %c0_158 = arith.constant 0 : index
    %c0_159 = arith.constant 0 : index
    %248 = vector.load %arg12[%c0_158, %c0_159] : memref<32x32xf32, #tpu.memory_space<vmem>>, vector<32x32xf32>
    tpu.vector_store %arg12[%c0_158, %c0_159], %247 {strides = array<i32>} : memref<32x32xf32, #tpu.memory_space<vmem>>, vector<32x32xf32>,
    return
  }
}

</mosaic_0001>

<llo_original>
// kernel: tpu_custom_call.1
$region0: #{tpu_custom_call.1}
  #allocation0 [shape = 'u32[]', space=smem, size = 0x4, offset = 0x4, fixed_abs, tag = 'smem constant byte address 0x4 - core index']
  #allocation1 [shape = 'u32[144,128]{1,0:T(1,128)}', space=vmem, size = 0x12000, scoped, tag = 'internal scratch']
  #allocation2 [shape = 'f32[32,16,64]{2,1,0:T(8,128)}', space=vmem, size = 0x40000, scoped, tag = 'scratch operand']
  #allocation3 [shape = 'f32[32,16,64]{2,1,0:T(8,128)}', space=vmem, size = 0x40000, scoped, tag = 'scratch operand']
  #allocation4 [shape = 'f32[32,16,64]{2,1,0:T(8,128)}', space=vmem, size = 0x40000, scoped, tag = 'scratch operand']
  %s0 = inlined_call_operand.vmem [shape: f32[32,32], index: 0, kind: input, shape index: {}]
  %s1 = inlined_call_operand.vmem [shape: f32[32,64], index: 1, kind: input, shape index: {}]
  %s2 = inlined_call_operand.vmem [shape: f32[32,64], index: 2, kind: input, shape index: {}]
  %s3 = inlined_call_operand.vmem [shape: f32[4,64], index: 3, kind: input, shape index: {}]
  %s4 = inlined_call_operand.vmem [shape: f32[1,64], index: 4, kind: input, shape index: {}]
  %s5 = inlined_call_operand.vmem [shape: f32[64,16], index: 5, kind: input, shape index: {}]
  %s6 = inlined_call_operand.vmem [shape: f32[64,16], index: 6, kind: input, shape index: {}]
  %s7 = inlined_call_operand.vmem [shape: f32[64,64], index: 7, kind: input, shape index: {}]
  %s8 = inlined_call_operand.vmem [shape: f32[1,64], index: 8, kind: input, shape index: {}]
  %s9 = inlined_call_operand.vmem [shape: f32[16,64], index: 9, kind: input, shape index: {}]
  %s10 = inlined_call_operand.vmem [shape: f32[1,64], index: 10, kind: input, shape index: {}]
  %s11 = inlined_call_operand.vmem [shape: f32[64,32], index: 11, kind: input, shape index: {}]
  %s12 = inlined_call_operand.hbm [shape: f32[32,32], index: 12, kind: output, shape index: {}]
  %s13 = sld [smem:[#allocation0]]
  $region58: #{tpu_custom_call.1} parent=0
    _
  %s15 = ssub.s32 1, %s13
  %s16 = scalar_select 0, %s15, %s13
  $region1: #{tpu_custom_call.1} parent=0
    #allocation5 [shape = 'u8[16384]{0}', space=vmem, size = 0x4000, scoped, tag = 'output window, operand 0, single buffered']
    #allocation6 [shape = 's32[1]{0}', space=sflag, size = 0x4, scoped, tag = 'scoped memory for tpu_custom_call.1']
    %17 = vsyncpa [#allocation6], 0
    // Predicated region
    $region2: #{tpu_custom_call.1} parent=1 // pred_check
      _
    $region3: #{tpu_custom_call.1} parent=1 // pred_check_branch
      %19 = sbr.rel (0) target = $region5
    $region4: #{tpu_custom_call.1} parent=1 // pred_region
      _
    $region5: #{tpu_custom_call.1} parent=1 // pred_fallthru
      _
    // Predicated region
    $region6: #{tpu_custom_call.1} parent=1 // pred_check
      _
    $region7: #{tpu_custom_call.1} parent=1 // pred_check_branch
      %21 = sbr.rel (0) target = $region9
    $region8: #{tpu_custom_call.1} parent=1 // pred_region
      _
    $region9: #{tpu_custom_call.1} parent=1 // pred_fallthru
      _
    // Predicated region
    $region10: #{tpu_custom_call.1} parent=1 // pred_check
      _
    $region11: #{tpu_custom_call.1} parent=1 // pred_check_branch
      %23 = sbr.rel (0) target = $region13
    $region12: #{tpu_custom_call.1} parent=1 // pred_region
      _
    $region13: #{tpu_custom_call.1} parent=1 // pred_fallthru
      _
    // Predicated region
    $region14: #{tpu_custom_call.1} parent=1 // pred_check
      _
    $region15: #{tpu_custom_call.1} parent=1 // pred_check_branch
      %25 = sbr.rel (0) target = $region17
    $region16: #{tpu_custom_call.1} parent=1 // pred_region
      _
    $region17: #{tpu_custom_call.1} parent=1 // pred_fallthru
      _
    // Predicated region
    $region18: #{tpu_custom_call.1} parent=1 // pred_check
      _
    $region19: #{tpu_custom_call.1} parent=1 // pred_check_branch
      %27 = sbr.rel (0) target = $region21
    $region20: #{tpu_custom_call.1} parent=1 // pred_region
      _
    $region21: #{tpu_custom_call.1} parent=1 // pred_fallthru
      _
    // Predicated region
    $region22: #{tpu_custom_call.1} parent=1 // pred_check
      _
    $region23: #{tpu_custom_call.1} parent=1 // pred_check_branch
      %29 = sbr.rel (0) target = $region25
    $region24: #{tpu_custom_call.1} parent=1 // pred_region
      _
    $region25: #{tpu_custom_call.1} parent=1 // pred_fallthru
      _
    // Predicated region
    $region26: #{tpu_custom_call.1} parent=1 // pred_check
      _
    $region27: #{tpu_custom_call.1} parent=1 // pred_check_branch
      %31 = sbr.rel (0) target = $region29
    $region28: #{tpu_custom_call.1} parent=1 // pred_region
      _
    $region29: #{tpu_custom_call.1} parent=1 // pred_fallthru
      _
    // Predicated region
    $region30: #{tpu_custom_call.1} parent=1 // pred_check
      _
    $region31: #{tpu_custom_call.1} parent=1 // pred_check_branch
      %33 = sbr.rel (0) target = $region33
    $region32: #{tpu_custom_call.1} parent=1 // pred_region
      _
    $region33: #{tpu_custom_call.1} parent=1 // pred_fallthru
      _
    // Predicated region
    $region34: #{tpu_custom_call.1} parent=1 // pred_check
      _
    $region35: #{tpu_custom_call.1} parent=1 // pred_check_branch
      %35 = sbr.rel (0) target = $region37
    $region36: #{tpu_custom_call.1} parent=1 // pred_region
      _
    $region37: #{tpu_custom_call.1} parent=1 // pred_fallthru
      _
    // Predicated region
    $region38: #{tpu_custom_call.1} parent=1 // pred_check
      _
    $region39: #{tpu_custom_call.1} parent=1 // pred_check_branch
      %37 = sbr.rel (0) target = $region41
    $region40: #{tpu_custom_call.1} parent=1 // pred_region
      _
    $region41: #{tpu_custom_call.1} parent=1 // pred_fallthru
      _
    // Predicated region
    $region42: #{tpu_custom_call.1} parent=1 // pred_check
      _
    $region43: #{tpu_custom_call.1} parent=1 // pred_check_branch
      %39 = sbr.rel (0) target = $region45
    $region44: #{tpu_custom_call.1} parent=1 // pred_region
      _
    $region45: #{tpu_custom_call.1} parent=1 // pred_fallthru
      _
    // Predicated region
    $region46: #{tpu_custom_call.1} parent=1 // pred_check
      _
    $region47: #{tpu_custom_call.1} parent=1 // pred_check_branch
      %41 = sbr.rel (0) target = $region49
    $region48: #{tpu_custom_call.1} parent=1 // pred_region
      _
    $region49: #{tpu_custom_call.1} parent=1 // pred_fallthru
      _
    %v42 = vld [vmem:[%s0] sm:$0xff]
    %v43 = vld [vmem:[%s0 + $0x8] sm:$0xff]
    %v44 = vld [vmem:[%s0 + $0x10] sm:$0xff]
    %v45 = vld [vmem:[%s0 + $0x18] sm:$0xff]
    %v46 = vld [vmem:[%s1] sm:$0xff]
    %v47 = vld [vmem:[%s1 + $0x8] sm:$0xff]
    %v48 = vld [vmem:[%s1 + $0x10] sm:$0xff]
    %v49 = vld [vmem:[%s1 + $0x18] sm:$0xff]
    %vm50 = vcmask 261120
    %v52 = vsel %vm50, %v42, 0
    %v55 = vsel %vm50, %v43, 0
    %v58 = vsel %vm50, %v44, 0
    %v61 = vsel %vm50, %v45, 0
    %63 = vmatprep.subr.mxu0 0.0
    %64 = vmatpush1.msra.mxu0 %v46
    %65 = vmatprep.subr.mxu0 0.0
    %66 = vmatpush1.msra.mxu0 %v47
    %67 = vmatprep.subr.mxu0 0.0
    %68 = vmatpush1.msra.mxu0 %v48
    %69 = vmatprep.subr.mxu0 0.0
    %70 = vmatpush1.msra.mxu0 %v49
    %71 = vmatprep.subr.mxu0 0.0
    %72 = vmatpush1.msra.mxu0 0.0
    %73 = vmatprep.subr.mxu0 0.0
    %74 = vmatpush1.msra.mxu0 0.0
    %75 = vmatprep.subr.mxu0 0.0
    %76 = vmatpush1.msra.mxu0 0.0
    %77 = vmatprep.subr.mxu0 0.0
    %78 = vmatpush1.msra.mxu0 0.0
    %79 = vmatprep.subr.mxu0 0.0
    %80 = vmatpush1.msra.mxu0 0.0
    %81 = vmatprep.subr.mxu0 0.0
    %82 = vmatpush1.msra.mxu0 0.0
    %83 = vmatprep.subr.mxu0 0.0
    %84 = vmatpush1.msra.mxu0 0.0
    %85 = vmatprep.subr.mxu0 0.0
    %86 = vmatpush1.msra.mxu0 0.0
    %87 = vmatprep.subr.mxu0 0.0
    %88 = vmatpush1.msra.mxu0 0.0
    %89 = vmatprep.subr.mxu0 0.0
    %90 = vmatpush1.msra.mxu0 0.0
    %91 = vmatprep.subr.mxu0 0.0
    %92 = vmatpush1.msra.mxu0 0.0
    %93 = vmatprep.subr.mxu0 0.0
    %94 = vmatpush1.msra.mxu0 0.0
    %95 = vmatprep.subr.mxu0 0.0
    %96 = vmatpush1.msra.mxu0 0.0
    %97 = vmatprep.subr.mxu0 0.0
    %98 = vmatpush1.msra.mxu0 0.0
    %99 = vmatprep.subr.mxu0 0.0
    %100 = vmatpush1.msra.mxu0 0.0
    %101 = vmatprep.subr.mxu0 0.0
    %102 = vmatpush1.msra.mxu0 0.0
    %103 = vmatprep.subr.mxu0 0.0
    %104 = vmatpush1.msra.mxu0 0.0
    %105 = vmatprep.subr.mxu0 0.0
    %106 = vmatpush1.msra.mxu0 0.0
    %107 = vmatprep.subr.mxu0 0.0
    %108 = vmatpush1.msra.mxu0 0.0
    %109 = vmatprep.subr.mxu0 0.0
    %110 = vmatpush1.msra.mxu0 0.0
    %111 = vmatprep.subr.mxu0 0.0
    %112 = vmatpush1.msra.mxu0 0.0
    %113 = vmatprep.subr.mxu0 0.0
    %114 = vmatpush1.msra.mxu0 0.0
    %115 = vmatprep.subr.mxu0 0.0
    %116 = vmatpush1.msra.mxu0 0.0
    %117 = vmatprep.subr.mxu0 0.0
    %118 = vmatpush1.msra.mxu0 0.0
    %119 = vmatprep.subr.mxu0 0.0
    %120 = vmatpush1.msra.mxu0 0.0
    %121 = vmatprep.subr.mxu0 0.0
    %122 = vmatpush1.msra.mxu0 0.0
    %123 = vmatprep.subr.mxu0 0.0
    %124 = vmatpush1.msra.mxu0 0.0
    %125 = vmatprep.subr.mxu0 0.0
    %126 = vmatpush1.msra.mxu0 0.0
    %127 = vmatprep.mubr.f32.mxu0 0.0
    %128 = vmatmul.mubr.f32.gmra.mrb[0].mxu0 %v52
    %v129 = vpop.f32.mrb[0].mxu0
    %v130 = vadd.f32 0.0, %v129
    %v131 = vpop.f32.mrb[0].mxu0
    %132 = vmatprep.mubr.f32.mxu0 0.0
    %133 = vmatmul.mubr.f32.gmra.mrb[0].mxu0 %v55
    %v134 = vpop.f32.mrb[0].mxu0
    %v135 = vadd.f32 0.0, %v134
    %v136 = vpop.f32.mrb[0].mxu0
    %137 = vmatprep.mubr.f32.mxu0 0.0
    %138 = vmatmul.mubr.f32.gmra.mrb[0].mxu0 %v58
    %v139 = vpop.f32.mrb[0].mxu0
    %v140 = vadd.f32 0.0, %v139
    %v141 = vpop.f32.mrb[0].mxu0
    %142 = vmatprep.mubr.f32.mxu0 0.0
    %143 = vmatmul.mubr.f32.gmra.mrb[0].mxu0 %v61
    %v144 = vpop.f32.mrb[0].mxu0
    %v145 = vadd.f32 0.0, %v144
    %v146 = vpop.f32.mrb[0].mxu0
    %147 = vdwg.mxu0
    %v148 = vld [vmem:[%s2] sm:$0xff]
    %v149 = vld [vmem:[%s2 + $0x8] sm:$0xff]
    %v150 = vld [vmem:[%s2 + $0x10] sm:$0xff]
    %v151 = vld [vmem:[%s2 + $0x18] sm:$0xff]
    %152 = vmatprep.subr.mxu0 0.0
    %153 = vmatpush1.msra.mxu0 %v148
    %154 = vmatprep.subr.mxu0 0.0
    %155 = vmatpush1.msra.mxu0 %v149
    %156 = vmatprep.subr.mxu0 0.0
    %157 = vmatpush1.msra.mxu0 %v150
    %158 = vmatprep.subr.mxu0 0.0
    %159 = vmatpush1.msra.mxu0 %v151
    %160 = vmatprep.subr.mxu0 0.0
    %161 = vmatpush1.msra.mxu0 0.0
    %162 = vmatprep.subr.mxu0 0.0
    %163 = vmatpush1.msra.mxu0 0.0
    %164 = vmatprep.subr.mxu0 0.0
    %165 = vmatpush1.msra.mxu0 0.0
    %166 = vmatprep.subr.mxu0 0.0
    %167 = vmatpush1.msra.mxu0 0.0
    %168 = vmatprep.subr.mxu0 0.0
    %169 = vmatpush1.msra.mxu0 0.0
    %170 = vmatprep.subr.mxu0 0.0
    %171 = vmatpush1.msra.mxu0 0.0
    %172 = vmatprep.subr.mxu0 0.0
    %173 = vmatpush1.msra.mxu0 0.0
    %174 = vmatprep.subr.mxu0 0.0
    %175 = vmatpush1.msra.mxu0 0.0
    %176 = vmatprep.subr.mxu0 0.0
    %177 = vmatpush1.msra.mxu0 0.0
    %178 = vmatprep.subr.mxu0 0.0
    %179 = vmatpush1.msra.mxu0 0.0
    %180 = vmatprep.subr.mxu0 0.0
    %181 = vmatpush1.msra.mxu0 0.0
    %182 = vmatprep.subr.mxu0 0.0
    %183 = vmatpush1.msra.mxu0 0.0
    %184 = vmatprep.subr.mxu0 0.0
    %185 = vmatpush1.msra.mxu0 0.0
    %186 = vmatprep.subr.mxu0 0.0
    %187 = vmatpush1.msra.mxu0 0.0
    %188 = vmatprep.subr.mxu0 0.0
    %189 = vmatpush1.msra.mxu0 0.0
    %190 = vmatprep.subr.mxu0 0.0
    %191 = vmatpush1.msra.mxu0 0.0
    %192 = vmatprep.subr.mxu0 0.0
    %193 = vmatpush1.msra.mxu0 0.0
    %194 = vmatprep.subr.mxu0 0.0
    %195 = vmatpush1.msra.mxu0 0.0
    %196 = vmatprep.subr.mxu0 0.0
    %197 = vmatpush1.msra.mxu0 0.0
    %198 = vmatprep.subr.mxu0 0.0
    %199 = vmatpush1.msra.mxu0 0.0
    %200 = vmatprep.subr.mxu0 0.0
    %201 = vmatpush1.msra.mxu0 0.0
    %202 = vmatprep.subr.mxu0 0.0
    %203 = vmatpush1.msra.mxu0 0.0
    %204 = vmatprep.subr.mxu0 0.0
    %205 = vmatpush1.msra.mxu0 0.0
    %206 = vmatprep.subr.mxu0 0.0
    %207 = vmatpush1.msra.mxu0 0.0
    %208 = vmatprep.subr.mxu0 0.0
    %209 = vmatpush1.msra.mxu0 0.0
    %210 = vmatprep.subr.mxu0 0.0
    %211 = vmatpush1.msra.mxu0 0.0
    %212 = vmatprep.subr.mxu0 0.0
    %213 = vmatpush1.msra.mxu0 0.0
    %214 = vmatprep.subr.mxu0 0.0
    %215 = vmatpush1.msra.mxu0 0.0
    %216 = vmatprep.mubr.f32.mxu0 0.0
    %217 = vmatmul.mubr.f32.gmra.mrb[0].mxu0 %v52
    %v218 = vpop.f32.mrb[0].mxu0
    %v219 = vadd.f32 0.0, %v218
    %v220 = vpop.f32.mrb[0].mxu0
    %221 = vmatprep.mubr.f32.mxu0 0.0
    %222 = vmatmul.mubr.f32.gmra.mrb[0].mxu0 %v55
    %v223 = vpop.f32.mrb[0].mxu0
    %v224 = vadd.f32 0.0, %v223
    %v225 = vpop.f32.mrb[0].mxu0
    %226 = vmatprep.mubr.f32.mxu0 0.0
    %227 = vmatmul.mubr.f32.gmra.mrb[0].mxu0 %v58
    %v228 = vpop.f32.mrb[0].mxu0
    %v229 = vadd.f32 0.0, %v228
    %v230 = vpop.f32.mrb[0].mxu0
    %231 = vmatprep.mubr.f32.mxu0 0.0
    %232 = vmatmul.mubr.f32.gmra.mrb[0].mxu0 %v61
    %v233 = vpop.f32.mrb[0].mxu0
    %v234 = vadd.f32 0.0, %v233
    %v235 = vpop.f32.mrb[0].mxu0
    %236 = vdwg.mxu0
    %v237 = vld [vmem:[%s3] sm:$0xf]
    %v238 = vld [vmem:[%s4] sm:$0x1]
    %v239 = vlaneseq
    %v240 = vshrl.u32 %v239, 7
    %v241 = vsub.s32 3, %v240
    %v242 = vrot.slane %v237, %v241
    %v243 = vmul.f32 %v130, %v242
    %v244 = vmul.f32 %v135, %v242
    %v245 = vmul.f32 %v140, %v242
    %v246 = vmul.f32 %v145, %v242
    %v248 = vlaneseq
    %v249 = vshrl.u32 %v248, 7
    %v250 = vsub.s32 0, %v249
    %v251 = vrot.slane %v238, %v250
    %v253 = vadd.f32 %v251, %v243
    %v254 = vadd.f32 %v251, %v244
    %v255 = vadd.f32 %v251, %v245
    %v256 = vadd.f32 %v251, %v246
    %vm261 = vcmask 1041408
    %v262 = vrot.slane %v130, 6
    %v263 = vrot.slane %v135, 6
    %v264 = vsel %vm261, %v262, %v263
    %v265 = vrot.slane %v140, 6
    %v266 = vsel %vm261, %v263, %v265
    %v267 = vrot.slane %v145, 6
    %v268 = vsel %vm261, %v265, %v267
    %v273 = vsel %vm261, 0.0, %v262
    %v274 = vlaneseq
    %v275 = vshrl.u32 %v274, 7
    %v276 = vsub.s32 2, %v275
    %v277 = vrot.slane %v237, %v276
    %v278 = vmul.f32 %v273, %v277
    %v279 = vmul.f32 %v264, %v277
    %v280 = vmul.f32 %v266, %v277
    %v281 = vmul.f32 %v268, %v277
    %v282 = vadd.f32 %v253, %v278
    %v283 = vadd.f32 %v254, %v279
    %v284 = vadd.f32 %v255, %v280
    %v285 = vadd.f32 %v256, %v281
    %vm286 = vcmask 1043456
    %v287 = vrot.slane %v130, 4
    %v288 = vrot.slane %v135, 4
    %v289 = vsel %vm286, %v287, %v288
    %v290 = vrot.slane %v140, 4
    %v291 = vsel %vm286, %v288, %v290
    %v292 = vrot.slane %v145, 4
    %v293 = vsel %vm286, %v290, %v292
    %v298 = vsel %vm286, 0.0, %v287
    %v299 = vlaneseq
    %v300 = vshrl.u32 %v299, 7
    %v301 = vsub.s32 1, %v300
    %v302 = vrot.slane %v237, %v301
    %v303 = vmul.f32 %v298, %v302
    %v304 = vmul.f32 %v289, %v302
    %v305 = vmul.f32 %v291, %v302
    %v306 = vmul.f32 %v293, %v302
    %v307 = vadd.f32 %v282, %v303
    %v308 = vadd.f32 %v283, %v304
    %v309 = vadd.f32 %v284, %v305
    %v310 = vadd.f32 %v285, %v306
    %vm311 = vcmask 1045504
    %v312 = vrot.slane %v130, 2
    %v313 = vrot.slane %v135, 2
    %v314 = vsel %vm311, %v312, %v313
    %v315 = vrot.slane %v140, 2
    %v316 = vsel %vm311, %v313, %v315
    %v317 = vrot.slane %v145, 2
    %v318 = vsel %vm311, %v315, %v317
    %v323 = vsel %vm311, 0.0, %v312
    %v324 = vlaneseq
    %v325 = vshrl.u32 %v324, 7
    %v326 = vsub.s32 0, %v325
    %v327 = vrot.slane %v237, %v326
    %v328 = vmul.f32 %v323, %v327
    %v329 = vmul.f32 %v314, %v327
    %v330 = vmul.f32 %v316, %v327
    %v331 = vmul.f32 %v318, %v327
    %v332 = vadd.f32 %v307, %v328
    %v333 = vadd.f32 %v308, %v329
    %v334 = vadd.f32 %v309, %v330
    %v335 = vadd.f32 %v310, %v331
    %v336 = vxor.u32 %v332, 2147483648
    %v337 = vxor.u32 %v333, 2147483648
    %v338 = vxor.u32 %v334, 2147483648
    %v339 = vxor.u32 %v335, 2147483648
    %v340 = vmul.f32 %v336, 1.442695
    %v341 = vpow.pop %v340
    %v342 = vmul.f32 %v337, 1.442695
    %v343 = vpow.pop %v342
    %v344 = vmul.f32 %v338, 1.442695
    %v345 = vpow.pop %v344
    %v346 = vmul.f32 %v339, 1.442695
    %v347 = vpow.pop %v346
    %v348 = vadd.f32 %v341, 1.0
    %v349 = vadd.f32 %v343, 1.0
    %v350 = vadd.f32 %v345, 1.0
    %v351 = vadd.f32 %v347, 1.0
    %v352 = vrcp.pop %v348
    %v353 = vmul.f32 1.0, %v352
    %v354 = vrcp.pop %v349
    %v355 = vmul.f32 1.0, %v354
    %v356 = vrcp.pop %v350
    %v357 = vmul.f32 1.0, %v356
    %v358 = vrcp.pop %v351
    %v359 = vmul.f32 1.0, %v358
    %v360 = vmul.f32 %v332, %v353
    %v361 = vmul.f32 %v333, %v355
    %v362 = vmul.f32 %v334, %v357
    %v363 = vmul.f32 %v335, %v359
    %v364 = vld [vmem:[%s7] sm:$0xff]
    %v365 = vld [vmem:[%s7 + $0x8] sm:$0xff]
    %v366 = vld [vmem:[%s7 + $0x10] sm:$0xff]
    %v367 = vld [vmem:[%s7 + $0x18] sm:$0xff]
    %v368 = vld [vmem:[%s7 + $0x20] sm:$0xff]
    %v369 = vld [vmem:[%s7 + $0x28] sm:$0xff]
    %v370 = vld [vmem:[%s7 + $0x30] sm:$0xff]
    %v371 = vld [vmem:[%s7 + $0x38] sm:$0xff]
    %v372 = vld [vmem:[%s8] sm:$0x1]
    %v374 = vlaneseq
    %v375 = vshrl.u32 %v374, 7
    %v376 = vsub.s32 0, %v375
    %v377 = vrot.slane %v372, %v376
    %vm379 = vcmask 523264
    %v381 = vsel %vm379, %v360, 0
    %v384 = vsel %vm379, %v361, 0
    %v387 = vsel %vm379, %v362, 0
    %v390 = vsel %vm379, %v363, 0
    %392 = vmatprep.subr.mxu0 0.0
    %393 = vmatpush1.msra.mxu0 %v364
    %394 = vmatprep.subr.mxu0 0.0
    %395 = vmatpush1.msra.mxu0 %v365
    %396 = vmatprep.subr.mxu0 0.0
    %397 = vmatpush1.msra.mxu0 %v366
    %398 = vmatprep.subr.mxu0 0.0
    %399 = vmatpush1.msra.mxu0 %v367
    %400 = vmatprep.subr.mxu0 0.0
    %401 = vmatpush1.msra.mxu0 %v368
    %402 = vmatprep.subr.mxu0 0.0
    %403 = vmatpush1.msra.mxu0 %v369
    %404 = vmatprep.subr.mxu0 0.0
    %405 = vmatpush1.msra.mxu0 %v370
    %406 = vmatprep.subr.mxu0 0.0
    %407 = vmatpush1.msra.mxu0 %v371
    %408 = vmatprep.subr.mxu0 0.0
    %409 = vmatpush1.msra.mxu0 0.0
    %410 = vmatprep.subr.mxu0 0.0
    %411 = vmatpush1.msra.mxu0 0.0
    %412 = vmatprep.subr.mxu0 0.0
    %413 = vmatpush1.msra.mxu0 0.0
    %414 = vmatprep.subr.mxu0 0.0
    %415 = vmatpush1.msra.mxu0 0.0
    %416 = vmatprep.subr.mxu0 0.0
    %417 = vmatpush1.msra.mxu0 0.0
    %418 = vmatprep.subr.mxu0 0.0
    %419 = vmatpush1.msra.mxu0 0.0
    %420 = vmatprep.subr.mxu0 0.0
    %421 = vmatpush1.msra.mxu0 0.0
    %422 = vmatprep.subr.mxu0 0.0
    %423 = vmatpush1.msra.mxu0 0.0
    %424 = vmatprep.subr.mxu0 0.0
    %425 = vmatpush1.msra.mxu0 0.0
    %426 = vmatprep.subr.mxu0 0.0
    %427 = vmatpush1.msra.mxu0 0.0
    %428 = vmatprep.subr.mxu0 0.0
    %429 = vmatpush1.msra.mxu0 0.0
    %430 = vmatprep.subr.mxu0 0.0
    %431 = vmatpush1.msra.mxu0 0.0
    %432 = vmatprep.subr.mxu0 0.0
    %433 = vmatpush1.msra.mxu0 0.0
    %434 = vmatprep.subr.mxu0 0.0
    %435 = vmatpush1.msra.mxu0 0.0
    %436 = vmatprep.subr.mxu0 0.0
    %437 = vmatpush1.msra.mxu0 0.0
    %438 = vmatprep.subr.mxu0 0.0
    %439 = vmatpush1.msra.mxu0 0.0
    %440 = vmatprep.subr.mxu0 0.0
    %441 = vmatpush1.msra.mxu0 0.0
    %442 = vmatprep.subr.mxu0 0.0
    %443 = vmatpush1.msra.mxu0 0.0
    %444 = vmatprep.subr.mxu0 0.0
    %445 = vmatpush1.msra.mxu0 0.0
    %446 = vmatprep.subr.mxu0 0.0
    %447 = vmatpush1.msra.mxu0 0.0
    %448 = vmatprep.subr.mxu0 0.0
    %449 = vmatpush1.msra.mxu0 0.0
    %450 = vmatprep.subr.mxu0 0.0
    %451 = vmatpush1.msra.mxu0 0.0
    %452 = vmatprep.subr.mxu0 0.0
    %453 = vmatpush1.msra.mxu0 0.0
    %454 = vmatprep.subr.mxu0 0.0
    %455 = vmatpush1.msra.mxu0 0.0
    %456 = vmatprep.mubr.f32.mxu0 0.0
    %457 = vmatmul.mubr.f32.gmra.mrb[0].mxu0 %v381
    %v458 = vpop.f32.mrb[0].mxu0
    %v459 = vadd.f32 %v377, %v458
    %v460 = vpop.f32.mrb[0].mxu0
    %461 = vmatprep.mubr.f32.mxu0 0.0
    %462 = vmatmul.mubr.f32.gmra.mrb[0].mxu0 %v384
    %v463 = vpop.f32.mrb[0].mxu0
    %v464 = vadd.f32 %v377, %v463
    %v465 = vpop.f32.mrb[0].mxu0
    %466 = vmatprep.mubr.f32.mxu0 0.0
    %467 = vmatmul.mubr.f32.gmra.mrb[0].mxu0 %v387
    %v468 = vpop.f32.mrb[0].mxu0
    %v469 = vadd.f32 %v377, %v468
    %v470 = vpop.f32.mrb[0].mxu0
    %471 = vmatprep.mubr.f32.mxu0 0.0
    %472 = vmatmul.mubr.f32.gmra.mrb[0].mxu0 %v390
    %v473 = vpop.f32.mrb[0].mxu0
    %v474 = vadd.f32 %v377, %v473
    %v475 = vpop.f32.mrb[0].mxu0
    %476 = vdwg.mxu0
    %v477 = vmax.f32 %v459, 0.0
    %v478 = vmax.f32 %v464, 0.0
    %v479 = vmax.f32 %v469, 0.0
    %v480 = vmax.f32 %v474, 0.0
    %vm481 = vcmp.ne.f32.partialorder %v459, %v459
    %vm482 = vcmp.ne.f32.partialorder %v464, %v464
    %vm483 = vcmp.ne.f32.partialorder %v469, %v469
    %vm484 = vcmp.ne.f32.partialorder %v474, %v474
    %v485 = vadd.f32 %v459, 0.0
    %v486 = vadd.f32 %v464, 0.0
    %v487 = vadd.f32 %v469, 0.0
    %v488 = vadd.f32 %v474, 0.0
    %v489 = vand.u32 2147483647, %v459
    %v490 = vand.u32 2147483647, %v464
    %v491 = vand.u32 2147483647, %v469
    %v492 = vand.u32 2147483647, %v474
    %v493 = vsub.f32 0.0, %v489
    %v494 = vsub.f32 0.0, %v490
    %v495 = vsub.f32 0.0, %v491
    %v496 = vsub.f32 0.0, %v492
    %v497 = vmul.f32 %v493, 1.442695
    %v498 = vpow.pop %v497
    %v499 = vmul.f32 %v494, 1.442695
    %v500 = vpow.pop %v499
    %v501 = vmul.f32 %v495, 1.442695
    %v502 = vpow.pop %v501
    %v503 = vmul.f32 %v496, 1.442695
    %v504 = vpow.pop %v503
    %v505 = vadd.f32 %v498, 1.0
    %v506 = vlog2.pop %v505
    %v507 = vmul.f32 %v506, 0.6931472
    %v508 = vmul.f32 -0.5, %v498
    %v509 = vadd.f32 %v508, 1.0
    %v510 = vmul.f32 %v509, %v498
    %v511 = vand.u32 2147483647, %v498
    %vm512 = vcmp.lt.f32.partialorder %v511, 0.0004427343
    %v513 = vsel %vm512, %v510, %v507
    %v514 = vadd.f32 %v500, 1.0
    %v515 = vlog2.pop %v514
    %v516 = vmul.f32 %v515, 0.6931472
    %v517 = vmul.f32 -0.5, %v500
    %v518 = vadd.f32 %v517, 1.0
    %v519 = vmul.f32 %v518, %v500
    %v520 = vand.u32 2147483647, %v500
    %vm521 = vcmp.lt.f32.partialorder %v520, 0.0004427343
    %v522 = vsel %vm521, %v519, %v516
    %v523 = vadd.f32 %v502, 1.0
    %v524 = vlog2.pop %v523
    %v525 = vmul.f32 %v524, 0.6931472
    %v526 = vmul.f32 -0.5, %v502
    %v527 = vadd.f32 %v526, 1.0
    %v528 = vmul.f32 %v527, %v502
    %v529 = vand.u32 2147483647, %v502
    %vm530 = vcmp.lt.f32.partialorder %v529, 0.0004427343
    %v531 = vsel %vm530, %v528, %v525
    %v532 = vadd.f32 %v504, 1.0
    %v533 = vlog2.pop %v532
    %v534 = vmul.f32 %v533, 0.6931472
    %v535 = vmul.f32 -0.5, %v504
    %v536 = vadd.f32 %v535, 1.0
    %v537 = vmul.f32 %v536, %v504
    %v538 = vand.u32 2147483647, %v504
    %vm539 = vcmp.lt.f32.partialorder %v538, 0.0004427343
    %v540 = vsel %vm539, %v537, %v534
    %v541 = vadd.f32 %v477, %v513
    %v542 = vadd.f32 %v478, %v522
    %v543 = vadd.f32 %v479, %v531
    %v544 = vadd.f32 %v480, %v540
    %v545 = vsel %vm481, %v485, %v541
    %v546 = vsel %vm482, %v486, %v542
    %v547 = vsel %vm483, %v487, %v543
    %v548 = vsel %vm484, %v488, %v544
    %v549 = vld [vmem:[%s5] sm:$0xff]
    %v550 = vld [vmem:[%s5 + $0x8] sm:$0xff]
    %v551 = vld [vmem:[%s5 + $0x10] sm:$0xff]
    %v552 = vld [vmem:[%s5 + $0x18] sm:$0xff]
    %v553 = vld [vmem:[%s5 + $0x20] sm:$0xff]
    %v554 = vld [vmem:[%s5 + $0x28] sm:$0xff]
    %v555 = vld [vmem:[%s5 + $0x30] sm:$0xff]
    %v556 = vld [vmem:[%s5 + $0x38] sm:$0xff]
    %557 = vmatprep.subr.mxu0 0.0
    %558 = vmatpush1.msra.mxu0 %v549
    %559 = vmatprep.subr.mxu0 0.0
    %560 = vmatpush1.msra.mxu0 %v550
    %561 = vmatprep.subr.mxu0 0.0
    %562 = vmatpush1.msra.mxu0 %v551
    %563 = vmatprep.subr.mxu0 0.0
    %564 = vmatpush1.msra.mxu0 %v552
    %565 = vmatprep.subr.mxu0 0.0
    %566 = vmatpush1.msra.mxu0 %v553
    %567 = vmatprep.subr.mxu0 0.0
    %568 = vmatpush1.msra.mxu0 %v554
    %569 = vmatprep.subr.mxu0 0.0
    %570 = vmatpush1.msra.mxu0 %v555
    %571 = vmatprep.subr.mxu0 0.0
    %572 = vmatpush1.msra.mxu0 %v556
    %573 = vmatprep.subr.mxu0 0.0
    %574 = vmatpush1.msra.mxu0 0.0
    %575 = vmatprep.subr.mxu0 0.0
    %576 = vmatpush1.msra.mxu0 0.0
    %577 = vmatprep.subr.mxu0 0.0
    %578 = vmatpush1.msra.mxu0 0.0
    %579 = vmatprep.subr.mxu0 0.0
    %580 = vmatpush1.msra.mxu0 0.0
    %581 = vmatprep.subr.mxu0 0.0
    %582 = vmatpush1.msra.mxu0 0.0
    %583 = vmatprep.subr.mxu0 0.0
    %584 = vmatpush1.msra.mxu0 0.0
    %585 = vmatprep.subr.mxu0 0.0
    %586 = vmatpush1.msra.mxu0 0.0
    %587 = vmatprep.subr.mxu0 0.0
    %588 = vmatpush1.msra.mxu0 0.0
    %589 = vmatprep.subr.mxu0 0.0
    %590 = vmatpush1.msra.mxu0 0.0
    %591 = vmatprep.subr.mxu0 0.0
    %592 = vmatpush1.msra.mxu0 0.0
    %593 = vmatprep.subr.mxu0 0.0
    %594 = vmatpush1.msra.mxu0 0.0
    %595 = vmatprep.subr.mxu0 0.0
    %596 = vmatpush1.msra.mxu0 0.0
    %597 = vmatprep.subr.mxu0 0.0
    %598 = vmatpush1.msra.mxu0 0.0
    %599 = vmatprep.subr.mxu0 0.0
    %600 = vmatpush1.msra.mxu0 0.0
    %601 = vmatprep.subr.mxu0 0.0
    %602 = vmatpush1.msra.mxu0 0.0
    %603 = vmatprep.subr.mxu0 0.0
    %604 = vmatpush1.msra.mxu0 0.0
    %605 = vmatprep.subr.mxu0 0.0
    %606 = vmatpush1.msra.mxu0 0.0
    %607 = vmatprep.subr.mxu0 0.0
    %608 = vmatpush1.msra.mxu0 0.0
    %609 = vmatprep.subr.mxu0 0.0
    %610 = vmatpush1.msra.mxu0 0.0
    %611 = vmatprep.subr.mxu0 0.0
    %612 = vmatpush1.msra.mxu0 0.0
    %613 = vmatprep.subr.mxu0 0.0
    %614 = vmatpush1.msra.mxu0 0.0
    %615 = vmatprep.subr.mxu0 0.0
    %616 = vmatpush1.msra.mxu0 0.0
    %617 = vmatprep.subr.mxu0 0.0
    %618 = vmatpush1.msra.mxu0 0.0
    %619 = vmatprep.subr.mxu0 0.0
    %620 = vmatpush1.msra.mxu0 0.0
    %621 = vmatprep.mubr.f32.mxu0 0.0
    %622 = vmatmul.mubr.f32.gmra.mrb[0].mxu0 %v381
    %v623 = vpop.f32.mrb[0].mxu0
    %v624 = vadd.f32 0.0, %v623
    %v625 = vpop.f32.mrb[0].mxu0
    %626 = vmatprep.mubr.f32.mxu0 0.0
    %627 = vmatmul.mubr.f32.gmra.mrb[0].mxu0 %v384
    %v628 = vpop.f32.mrb[0].mxu0
    %v629 = vadd.f32 0.0, %v628
    %v630 = vpop.f32.mrb[0].mxu0
    %631 = vmatprep.mubr.f32.mxu0 0.0
    %632 = vmatmul.mubr.f32.gmra.mrb[0].mxu0 %v387
    %v633 = vpop.f32.mrb[0].mxu0
    %v634 = vadd.f32 0.0, %v633
    %v635 = vpop.f32.mrb[0].mxu0
    %636 = vmatprep.mubr.f32.mxu0 0.0
    %637 = vmatmul.mubr.f32.gmra.mrb[0].mxu0 %v390
    %v638 = vpop.f32.mrb[0].mxu0
    %v639 = vadd.f32 0.0, %v638
    %v640 = vpop.f32.mrb[0].mxu0
    %641 = vdwg.mxu0
    %v642 = vld [vmem:[%s6] sm:$0xff]
    %v643 = vld [vmem:[%s6 + $0x8] sm:$0xff]
    %v644 = vld [vmem:[%s6 + $0x10] sm:$0xff]
    %v645 = vld [vmem:[%s6 + $0x18] sm:$0xff]
    %v646 = vld [vmem:[%s6 + $0x20] sm:$0xff]
    %v647 = vld [vmem:[%s6 + $0x28] sm:$0xff]
    %v648 = vld [vmem:[%s6 + $0x30] sm:$0xff]
    %v649 = vld [vmem:[%s6 + $0x38] sm:$0xff]
    %650 = vmatprep.subr.mxu0 0.0
    %651 = vmatpush1.msra.mxu0 %v642
    %652 = vmatprep.subr.mxu0 0.0
    %653 = vmatpush1.msra.mxu0 %v643
    %654 = vmatprep.subr.mxu0 0.0
    %655 = vmatpush1.msra.mxu0 %v644
    %656 = vmatprep.subr.mxu0 0.0
    %657 = vmatpush1.msra.mxu0 %v645
    %658 = vmatprep.subr.mxu0 0.0
    %659 = vmatpush1.msra.mxu0 %v646
    %660 = vmatprep.subr.mxu0 0.0
    %661 = vmatpush1.msra.mxu0 %v647
    %662 = vmatprep.subr.mxu0 0.0
    %663 = vmatpush1.msra.mxu0 %v648
    %664 = vmatprep.subr.mxu0 0.0
    %665 = vmatpush1.msra.mxu0 %v649
    %666 = vmatprep.subr.mxu0 0.0
    %667 = vmatpush1.msra.mxu0 0.0
    %668 = vmatprep.subr.mxu0 0.0
    %669 = vmatpush1.msra.mxu0 0.0
    %670 = vmatprep.subr.mxu0 0.0
    %671 = vmatpush1.msra.mxu0 0.0
    %672 = vmatprep.subr.mxu0 0.0
    %673 = vmatpush1.msra.mxu0 0.0
    %674 = vmatprep.subr.mxu0 0.0
    %675 = vmatpush1.msra.mxu0 0.0
    %676 = vmatprep.subr.mxu0 0.0
    %677 = vmatpush1.msra.mxu0 0.0
    %678 = vmatprep.subr.mxu0 0.0
    %679 = vmatpush1.msra.mxu0 0.0
    %680 = vmatprep.subr.mxu0 0.0
    %681 = vmatpush1.msra.mxu0 0.0
    %682 = vmatprep.subr.mxu0 0.0
    %683 = vmatpush1.msra.mxu0 0.0
    %684 = vmatprep.subr.mxu0 0.0
    %685 = vmatpush1.msra.mxu0 0.0
    %686 = vmatprep.subr.mxu0 0.0
    %687 = vmatpush1.msra.mxu0 0.0
    %688 = vmatprep.subr.mxu0 0.0
    %689 = vmatpush1.msra.mxu0 0.0
    %690 = vmatprep.subr.mxu0 0.0
    %691 = vmatpush1.msra.mxu0 0.0
    %692 = vmatprep.subr.mxu0 0.0
    %693 = vmatpush1.msra.mxu0 0.0
    %694 = vmatprep.subr.mxu0 0.0
    %695 = vmatpush1.msra.mxu0 0.0
    %696 = vmatprep.subr.mxu0 0.0
    %697 = vmatpush1.msra.mxu0 0.0
    %698 = vmatprep.subr.mxu0 0.0
    %699 = vmatpush1.msra.mxu0 0.0
    %700 = vmatprep.subr.mxu0 0.0
    %701 = vmatpush1.msra.mxu0 0.0
    %702 = vmatprep.subr.mxu0 0.0
    %703 = vmatpush1.msra.mxu0 0.0
    %704 = vmatprep.subr.mxu0 0.0
    %705 = vmatpush1.msra.mxu0 0.0
    %706 = vmatprep.subr.mxu0 0.0
    %707 = vmatpush1.msra.mxu0 0.0
    %708 = vmatprep.subr.mxu0 0.0
    %709 = vmatpush1.msra.mxu0 0.0
    %710 = vmatprep.subr.mxu0 0.0
    %711 = vmatpush1.msra.mxu0 0.0
    %712 = vmatprep.subr.mxu0 0.0
    %713 = vmatpush1.msra.mxu0 0.0
    %714 = vmatprep.mubr.f32.mxu0 0.0
    %715 = vmatmul.mubr.f32.gmra.mrb[0].mxu0 %v381
    %v716 = vpop.f32.mrb[0].mxu0
    %v717 = vadd.f32 0.0, %v716
    %v718 = vpop.f32.mrb[0].mxu0
    %719 = vmatprep.mubr.f32.mxu0 0.0
    %720 = vmatmul.mubr.f32.gmra.mrb[0].mxu0 %v384
    %v721 = vpop.f32.mrb[0].mxu0
    %v722 = vadd.f32 0.0, %v721
    %v723 = vpop.f32.mrb[0].mxu0
    %724 = vmatprep.mubr.f32.mxu0 0.0
    %725 = vmatmul.mubr.f32.gmra.mrb[0].mxu0 %v387
    %v726 = vpop.f32.mrb[0].mxu0
    %v727 = vadd.f32 0.0, %v726
    %v728 = vpop.f32.mrb[0].mxu0
    %729 = vmatprep.mubr.f32.mxu0 0.0
    %730 = vmatmul.mubr.f32.gmra.mrb[0].mxu0 %v390
    %v731 = vpop.f32.mrb[0].mxu0
    %v732 = vadd.f32 0.0, %v731
    %v733 = vpop.f32.mrb[0].mxu0
    %734 = vdwg.mxu0
    %v739 = vcombine.high %v545, %v545
    %v741 = vunpack.c.l.s4 1966171168
    %v742 = vunpack.c.0.s8 %v741
    %v743 = vlaneseq
    %v744 = vshrl.u32 %v743, 7
    %v745 = vsub.s32 %v742, %v744
    %v746 = vrot.slane %v545, %v745
    %v748 = vunpack.c.l.s4 1966171168
    %v749 = vunpack.c.0.s8 %v748
    %v750 = vlaneseq
    %v751 = vshrl.u32 %v750, 7
    %v752 = vsub.s32 %v749, %v751
    %v753 = vrot.slane %v739, %v752
    %v754 = vcombine.high %v746, %v746
    %v755 = vcombine.high %v753, %v753
    %v757 = vunpack.c.l.s4 1966171168
    %v758 = vunpack.c.0.s8 %v757
    %v759 = vlaneseq
    %v760 = vshrl.u32 %v759, 7
    %v761 = vsub.s32 %v758, %v760
    %v762 = vrot.slane %v746, %v761
    %v764 = vunpack.c.l.s4 1966171168
    %v765 = vunpack.c.0.s8 %v764
    %v766 = vlaneseq
    %v767 = vshrl.u32 %v766, 7
    %v768 = vsub.s32 %v765, %v767
    %v769 = vrot.slane %v753, %v768
    %v771 = vunpack.c.l.s4 1966171168
    %v772 = vunpack.c.0.s8 %v771
    %v773 = vlaneseq
    %v774 = vshrl.u32 %v773, 7
    %v775 = vsub.s32 %v772, %v774
    %v776 = vrot.slane %v754, %v775
    %v778 = vunpack.c.l.s4 1966171168
    %v779 = vunpack.c.0.s8 %v778
    %v780 = vlaneseq
    %v781 = vshrl.u32 %v780, 7
    %v782 = vsub.s32 %v779, %v781
    %v783 = vrot.slane %v755, %v782
    %v784 = vcombine.high %v762, %v762
    %v785 = vcombine.high %v769, %v769
    %v786 = vcombine.high %v776, %v776
    %v787 = vcombine.high %v783, %v783
    %v788 = vcombine.high %v546, %v546
    %v790 = vunpack.c.l.s4 1966171168
    %v791 = vunpack.c.0.s8 %v790
    %v792 = vlaneseq
    %v793 = vshrl.u32 %v792, 7
    %v794 = vsub.s32 %v791, %v793
    %v795 = vrot.slane %v546, %v794
    %v797 = vunpack.c.l.s4 1966171168
    %v798 = vunpack.c.0.s8 %v797
    %v799 = vlaneseq
    %v800 = vshrl.u32 %v799, 7
    %v801 = vsub.s32 %v798, %v800
    %v802 = vrot.slane %v788, %v801
    %v803 = vcombine.high %v795, %v795
    %v804 = vcombine.high %v802, %v802
    %v806 = vunpack.c.l.s4 1966171168
    %v807 = vunpack.c.0.s8 %v806
    %v808 = vlaneseq
    %v809 = vshrl.u32 %v808, 7
    %v810 = vsub.s32 %v807, %v809
    %v811 = vrot.slane %v795, %v810
    %v813 = vunpack.c.l.s4 1966171168
    %v814 = vunpack.c.0.s8 %v813
    %v815 = vlaneseq
    %v816 = vshrl.u32 %v815, 7
    %v817 = vsub.s32 %v814, %v816
    %v818 = vrot.slane %v802, %v817
    %v820 = vunpack.c.l.s4 1966171168
    %v821 = vunpack.c.0.s8 %v820
    %v822 = vlaneseq
    %v823 = vshrl.u32 %v822, 7
    %v824 = vsub.s32 %v821, %v823
    %v825 = vrot.slane %v803, %v824
    %v827 = vunpack.c.l.s4 1966171168
    %v828 = vunpack.c.0.s8 %v827
    %v829 = vlaneseq
    %v830 = vshrl.u32 %v829, 7
    %v831 = vsub.s32 %v828, %v830
    %v832 = vrot.slane %v804, %v831
    %v833 = vcombine.high %v811, %v811
    %v834 = vcombine.high %v818, %v818
    %v835 = vcombine.high %v825, %v825
    %v836 = vcombine.high %v832, %v832
    %v837 = vcombine.high %v547, %v547
    %v839 = vunpack.c.l.s4 1966171168
    %v840 = vunpack.c.0.s8 %v839
    %v841 = vlaneseq
    %v842 = vshrl.u32 %v841, 7
    %v843 = vsub.s32 %v840, %v842
    %v844 = vrot.slane %v547, %v843
    %v846 = vunpack.c.l.s4 1966171168
    %v847 = vunpack.c.0.s8 %v846
    %v848 = vlaneseq
    %v849 = vshrl.u32 %v848, 7
    %v850 = vsub.s32 %v847, %v849
    %v851 = vrot.slane %v837, %v850
    %v852 = vcombine.high %v844, %v844
    %v853 = vcombine.high %v851, %v851
    %v855 = vunpack.c.l.s4 1966171168
    %v856 = vunpack.c.0.s8 %v855
    %v857 = vlaneseq
    %v858 = vshrl.u32 %v857, 7
    %v859 = vsub.s32 %v856, %v858
    %v860 = vrot.slane %v844, %v859
    %v862 = vunpack.c.l.s4 1966171168
    %v863 = vunpack.c.0.s8 %v862
    %v864 = vlaneseq
    %v865 = vshrl.u32 %v864, 7
    %v866 = vsub.s32 %v863, %v865
    %v867 = vrot.slane %v851, %v866
    %v869 = vunpack.c.l.s4 1966171168
    %v870 = vunpack.c.0.s8 %v869
    %v871 = vlaneseq
    %v872 = vshrl.u32 %v871, 7
    %v873 = vsub.s32 %v870, %v872
    %v874 = vrot.slane %v852, %v873
    %v876 = vunpack.c.l.s4 1966171168
    %v877 = vunpack.c.0.s8 %v876
    %v878 = vlaneseq
    %v879 = vshrl.u32 %v878, 7
    %v880 = vsub.s32 %v877, %v879
    %v881 = vrot.slane %v853, %v880
    %v882 = vcombine.high %v860, %v860
    %v883 = vcombine.high %v867, %v867
    %v884 = vcombine.high %v874, %v874
    %v885 = vcombine.high %v881, %v881
    %v886 = vcombine.high %v548, %v548
    %v888 = vunpack.c.l.s4 1966171168
    %v889 = vunpack.c.0.s8 %v888
    %v890 = vlaneseq
    %v891 = vshrl.u32 %v890, 7
    %v892 = vsub.s32 %v889, %v891
    %v893 = vrot.slane %v548, %v892
    %v895 = vunpack.c.l.s4 1966171168
    %v896 = vunpack.c.0.s8 %v895
    %v897 = vlaneseq
    %v898 = vshrl.u32 %v897, 7
    %v899 = vsub.s32 %v896, %v898
    %v900 = vrot.slane %v886, %v899
    %v901 = vcombine.high %v893, %v893
    %v902 = vcombine.high %v900, %v900
    %v904 = vunpack.c.l.s4 1966171168
    %v905 = vunpack.c.0.s8 %v904
    %v906 = vlaneseq
    %v907 = vshrl.u32 %v906, 7
    %v908 = vsub.s32 %v905, %v907
    %v909 = vrot.slane %v893, %v908
    %v911 = vunpack.c.l.s4 1966171168
    %v912 = vunpack.c.0.s8 %v911
    %v913 = vlaneseq
    %v914 = vshrl.u32 %v913, 7
    %v915 = vsub.s32 %v912, %v914
    %v916 = vrot.slane %v900, %v915
    %v918 = vunpack.c.l.s4 1966171168
    %v919 = vunpack.c.0.s8 %v918
    %v920 = vlaneseq
    %v921 = vshrl.u32 %v920, 7
    %v922 = vsub.s32 %v919, %v921
    %v923 = vrot.slane %v901, %v922
    %v925 = vunpack.c.l.s4 1966171168
    %v926 = vunpack.c.0.s8 %v925
    %v927 = vlaneseq
    %v928 = vshrl.u32 %v927, 7
    %v929 = vsub.s32 %v926, %v928
    %v930 = vrot.slane %v902, %v929
    %v931 = vcombine.high %v909, %v909
    %v932 = vcombine.high %v916, %v916
    %v933 = vcombine.high %v923, %v923
    %v934 = vcombine.high %v930, %v930
    %v935 = vld [vmem:[%s9] sm:$0xff]
    %v936 = vld [vmem:[%s9 + $0x8] sm:$0xff]
    %v937 = vlaneseq
    %v938 = vshrl.u32 %v937, 7
    %v939 = vsub.s32 0, %v938
    %v940 = vrot.slane %v762, %v939
    %v941 = vlaneseq
    %v942 = vshrl.u32 %v941, 7
    %v943 = vsub.s32 0, %v942
    %v944 = vrot.slane %v776, %v943
    %v945 = vlaneseq
    %v946 = vshrl.u32 %v945, 7
    %v947 = vsub.s32 0, %v946
    %v948 = vrot.slane %v784, %v947
    %v949 = vlaneseq
    %v950 = vshrl.u32 %v949, 7
    %v951 = vsub.s32 0, %v950
    %v952 = vrot.slane %v786, %v951
    %v953 = vlaneseq
    %v954 = vshrl.u32 %v953, 7
    %v955 = vsub.s32 0, %v954
    %v956 = vrot.slane %v769, %v955
    %v957 = vlaneseq
    %v958 = vshrl.u32 %v957, 7
    %v959 = vsub.s32 0, %v958
    %v960 = vrot.slane %v783, %v959
    %v961 = vlaneseq
    %v962 = vshrl.u32 %v961, 7
    %v963 = vsub.s32 0, %v962
    %v964 = vrot.slane %v785, %v963
    %v965 = vlaneseq
    %v966 = vshrl.u32 %v965, 7
    %v967 = vsub.s32 0, %v966
    %v968 = vrot.slane %v787, %v967
    %v969 = vlaneseq
    %v970 = vshrl.u32 %v969, 7
    %v971 = vsub.s32 0, %v970
    %v972 = vrot.slane %v811, %v971
    %v973 = vlaneseq
    %v974 = vshrl.u32 %v973, 7
    %v975 = vsub.s32 0, %v974
    %v976 = vrot.slane %v825, %v975
    %v977 = vlaneseq
    %v978 = vshrl.u32 %v977, 7
    %v979 = vsub.s32 0, %v978
    %v980 = vrot.slane %v833, %v979
    %v981 = vlaneseq
    %v982 = vshrl.u32 %v981, 7
    %v983 = vsub.s32 0, %v982
    %v984 = vrot.slane %v835, %v983
    %v985 = vlaneseq
    %v986 = vshrl.u32 %v985, 7
    %v987 = vsub.s32 0, %v986
    %v988 = vrot.slane %v818, %v987
    %v989 = vlaneseq
    %v990 = vshrl.u32 %v989, 7
    %v991 = vsub.s32 0, %v990
    %v992 = vrot.slane %v832, %v991
    %v993 = vlaneseq
    %v994 = vshrl.u32 %v993, 7
    %v995 = vsub.s32 0, %v994
    %v996 = vrot.slane %v834, %v995
    %v997 = vlaneseq
    %v998 = vshrl.u32 %v997, 7
    %v999 = vsub.s32 0, %v998
    %v1000 = vrot.slane %v836, %v999
    %v1001 = vlaneseq
    %v1002 = vshrl.u32 %v1001, 7
    %v1003 = vsub.s32 0, %v1002
    %v1004 = vrot.slane %v860, %v1003
    %v1005 = vlaneseq
    %v1006 = vshrl.u32 %v1005, 7
    %v1007 = vsub.s32 0, %v1006
    %v1008 = vrot.slane %v874, %v1007
    %v1009 = vlaneseq
    %v1010 = vshrl.u32 %v1009, 7
    %v1011 = vsub.s32 0, %v1010
    %v1012 = vrot.slane %v882, %v1011
    %v1013 = vlaneseq
    %v1014 = vshrl.u32 %v1013, 7
    %v1015 = vsub.s32 0, %v1014
    %v1016 = vrot.slane %v884, %v1015
    %v1017 = vlaneseq
    %v1018 = vshrl.u32 %v1017, 7
    %v1019 = vsub.s32 0, %v1018
    %v1020 = vrot.slane %v867, %v1019
    %v1021 = vlaneseq
    %v1022 = vshrl.u32 %v1021, 7
    %v1023 = vsub.s32 0, %v1022
    %v1024 = vrot.slane %v881, %v1023
    %v1025 = vlaneseq
    %v1026 = vshrl.u32 %v1025, 7
    %v1027 = vsub.s32 0, %v1026
    %v1028 = vrot.slane %v883, %v1027
    %v1029 = vlaneseq
    %v1030 = vshrl.u32 %v1029, 7
    %v1031 = vsub.s32 0, %v1030
    %v1032 = vrot.slane %v885, %v1031
    %v1033 = vlaneseq
    %v1034 = vshrl.u32 %v1033, 7
    %v1035 = vsub.s32 0, %v1034
    %v1036 = vrot.slane %v909, %v1035
    %v1037 = vlaneseq
    %v1038 = vshrl.u32 %v1037, 7
    %v1039 = vsub.s32 0, %v1038
    %v1040 = vrot.slane %v923, %v1039
    %v1041 = vlaneseq
    %v1042 = vshrl.u32 %v1041, 7
    %v1043 = vsub.s32 0, %v1042
    %v1044 = vrot.slane %v931, %v1043
    %v1045 = vlaneseq
    %v1046 = vshrl.u32 %v1045, 7
    %v1047 = vsub.s32 0, %v1046
    %v1048 = vrot.slane %v933, %v1047
    %v1049 = vlaneseq
    %v1050 = vshrl.u32 %v1049, 7
    %v1051 = vsub.s32 0, %v1050
    %v1052 = vrot.slane %v916, %v1051
    %v1053 = vlaneseq
    %v1054 = vshrl.u32 %v1053, 7
    %v1055 = vsub.s32 0, %v1054
    %v1056 = vrot.slane %v930, %v1055
    %v1057 = vlaneseq
    %v1058 = vshrl.u32 %v1057, 7
    %v1059 = vsub.s32 0, %v1058
    %v1060 = vrot.slane %v932, %v1059
    %v1061 = vlaneseq
    %v1062 = vshrl.u32 %v1061, 7
    %v1063 = vsub.s32 0, %v1062
    %v1064 = vrot.slane %v934, %v1063
    %v1097 = vmul.f32 %v940, %v935
    %v1098 = vmul.f32 %v940, %v936
    %v1099 = vmul.f32 %v944, %v935
    %v1100 = vmul.f32 %v944, %v936
    %v1101 = vmul.f32 %v948, %v935
    %v1102 = vmul.f32 %v948, %v936
    %v1103 = vmul.f32 %v952, %v935
    %v1104 = vmul.f32 %v952, %v936
    %v1105 = vmul.f32 %v956, %v935
    %v1106 = vmul.f32 %v956, %v936
    %v1107 = vmul.f32 %v960, %v935
    %v1108 = vmul.f32 %v960, %v936
    %v1109 = vmul.f32 %v964, %v935
    %v1110 = vmul.f32 %v964, %v936
    %v1111 = vmul.f32 %v968, %v935
    %v1112 = vmul.f32 %v968, %v936
    %v1113 = vmul.f32 %v972, %v935
    %v1114 = vmul.f32 %v972, %v936
    %v1115 = vmul.f32 %v976, %v935
    %v1116 = vmul.f32 %v976, %v936
    %v1117 = vmul.f32 %v980, %v935
    %v1118 = vmul.f32 %v980, %v936
    %v1119 = vmul.f32 %v984, %v935
    %v1120 = vmul.f32 %v984, %v936
    %v1121 = vmul.f32 %v988, %v935
    %v1122 = vmul.f32 %v988, %v936
    %v1123 = vmul.f32 %v992, %v935
    %v1124 = vmul.f32 %v992, %v936
    %v1125 = vmul.f32 %v996, %v935
    %v1126 = vmul.f32 %v996, %v936
    %v1127 = vmul.f32 %v1000, %v935
    %v1128 = vmul.f32 %v1000, %v936
    %v1129 = vmul.f32 %v1004, %v935
    %v1130 = vmul.f32 %v1004, %v936
    %v1131 = vmul.f32 %v1008, %v935
    %v1132 = vmul.f32 %v1008, %v936
    %v1133 = vmul.f32 %v1012, %v935
    %v1134 = vmul.f32 %v1012, %v936
    %v1135 = vmul.f32 %v1016, %v935
    %v1136 = vmul.f32 %v1016, %v936
    %v1137 = vmul.f32 %v1020, %v935
    %v1138 = vmul.f32 %v1020, %v936
    %v1139 = vmul.f32 %v1024, %v935
    %v1140 = vmul.f32 %v1024, %v936
    %v1141 = vmul.f32 %v1028, %v935
    %v1142 = vmul.f32 %v1028, %v936
    %v1143 = vmul.f32 %v1032, %v935
    %v1144 = vmul.f32 %v1032, %v936
    %v1145 = vmul.f32 %v1036, %v935
    %v1146 = vmul.f32 %v1036, %v936
    %v1147 = vmul.f32 %v1040, %v935
    %v1148 = vmul.f32 %v1040, %v936
    %v1149 = vmul.f32 %v1044, %v935
    %v1150 = vmul.f32 %v1044, %v936
    %v1151 = vmul.f32 %v1048, %v935
    %v1152 = vmul.f32 %v1048, %v936
    %v1153 = vmul.f32 %v1052, %v935
    %v1154 = vmul.f32 %v1052, %v936
    %v1155 = vmul.f32 %v1056, %v935
    %v1156 = vmul.f32 %v1056, %v936
    %v1157 = vmul.f32 %v1060, %v935
    %v1158 = vmul.f32 %v1060, %v936
    %v1159 = vmul.f32 %v1064, %v935
    %v1160 = vmul.f32 %v1064, %v936
    %v1161 = vmul.f32 %v1097, 1.442695
    %v1162 = vpow.pop %v1161
    %v1163 = vmul.f32 %v1098, 1.442695
    %v1164 = vpow.pop %v1163
    %v1165 = vmul.f32 %v1099, 1.442695
    %v1166 = vpow.pop %v1165
    %v1167 = vmul.f32 %v1100, 1.442695
    %v1168 = vpow.pop %v1167
    %v1169 = vmul.f32 %v1101, 1.442695
    %v1170 = vpow.pop %v1169
    %v1171 = vmul.f32 %v1102, 1.442695
    %v1172 = vpow.pop %v1171
    %v1173 = vmul.f32 %v1103, 1.442695
    %v1174 = vpow.pop %v1173
    %v1175 = vmul.f32 %v1104, 1.442695
    %v1176 = vpow.pop %v1175
    %v1177 = vmul.f32 %v1105, 1.442695
    %v1178 = vpow.pop %v1177
    %v1179 = vmul.f32 %v1106, 1.442695
    %v1180 = vpow.pop %v1179
    %v1181 = vmul.f32 %v1107, 1.442695
    %v1182 = vpow.pop %v1181
    %v1183 = vmul.f32 %v1108, 1.442695
    %v1184 = vpow.pop %v1183
    %v1185 = vmul.f32 %v1109, 1.442695
    %v1186 = vpow.pop %v1185
    %v1187 = vmul.f32 %v1110, 1.442695
    %v1188 = vpow.pop %v1187
    %v1189 = vmul.f32 %v1111, 1.442695
    %v1190 = vpow.pop %v1189
    %v1191 = vmul.f32 %v1112, 1.442695
    %v1192 = vpow.pop %v1191
    %v1193 = vmul.f32 %v1113, 1.442695
    %v1194 = vpow.pop %v1193
    %v1195 = vmul.f32 %v1114, 1.442695
    %v1196 = vpow.pop %v1195
    %v1197 = vmul.f32 %v1115, 1.442695
    %v1198 = vpow.pop %v1197
    %v1199 = vmul.f32 %v1116, 1.442695
    %v1200 = vpow.pop %v1199
    %v1201 = vmul.f32 %v1117, 1.442695
    %v1202 = vpow.pop %v1201
    %v1203 = vmul.f32 %v1118, 1.442695
    %v1204 = vpow.pop %v1203
    %v1205 = vmul.f32 %v1119, 1.442695
    %v1206 = vpow.pop %v1205
    %v1207 = vmul.f32 %v1120, 1.442695
    %v1208 = vpow.pop %v1207
    %v1209 = vmul.f32 %v1121, 1.442695
    %v1210 = vpow.pop %v1209
    %v1211 = vmul.f32 %v1122, 1.442695
    %v1212 = vpow.pop %v1211
    %v1213 = vmul.f32 %v1123, 1.442695
    %v1214 = vpow.pop %v1213
    %v1215 = vmul.f32 %v1124, 1.442695
    %v1216 = vpow.pop %v1215
    %v1217 = vmul.f32 %v1125, 1.442695
    %v1218 = vpow.pop %v1217
    %v1219 = vmul.f32 %v1126, 1.442695
    %v1220 = vpow.pop %v1219
    %v1221 = vmul.f32 %v1127, 1.442695
    %v1222 = vpow.pop %v1221
    %v1223 = vmul.f32 %v1128, 1.442695
    %v1224 = vpow.pop %v1223
    %v1225 = vmul.f32 %v1129, 1.442695
    %v1226 = vpow.pop %v1225
    %v1227 = vmul.f32 %v1130, 1.442695
    %v1228 = vpow.pop %v1227
    %v1229 = vmul.f32 %v1131, 1.442695
    %v1230 = vpow.pop %v1229
    %v1231 = vmul.f32 %v1132, 1.442695
    %v1232 = vpow.pop %v1231
    %v1233 = vmul.f32 %v1133, 1.442695
    %v1234 = vpow.pop %v1233
    %v1235 = vmul.f32 %v1134, 1.442695
    %v1236 = vpow.pop %v1235
    %v1237 = vmul.f32 %v1135, 1.442695
    %v1238 = vpow.pop %v1237
    %v1239 = vmul.f32 %v1136, 1.442695
    %v1240 = vpow.pop %v1239
    %v1241 = vmul.f32 %v1137, 1.442695
    %v1242 = vpow.pop %v1241
    %v1243 = vmul.f32 %v1138, 1.442695
    %v1244 = vpow.pop %v1243
    %v1245 = vmul.f32 %v1139, 1.442695
    %v1246 = vpow.pop %v1245
    %v1247 = vmul.f32 %v1140, 1.442695
    %v1248 = vpow.pop %v1247
    %v1249 = vmul.f32 %v1141, 1.442695
    %v1250 = vpow.pop %v1249
    %v1251 = vmul.f32 %v1142, 1.442695
    %v1252 = vpow.pop %v1251
    %v1253 = vmul.f32 %v1143, 1.442695
    %v1254 = vpow.pop %v1253
    %v1255 = vmul.f32 %v1144, 1.442695
    %v1256 = vpow.pop %v1255
    %v1257 = vmul.f32 %v1145, 1.442695
    %v1258 = vpow.pop %v1257
    %v1259 = vmul.f32 %v1146, 1.442695
    %v1260 = vpow.pop %v1259
    %v1261 = vmul.f32 %v1147, 1.442695
    %v1262 = vpow.pop %v1261
    %v1263 = vmul.f32 %v1148, 1.442695
    %v1264 = vpow.pop %v1263
    %v1265 = vmul.f32 %v1149, 1.442695
    %v1266 = vpow.pop %v1265
    %v1267 = vmul.f32 %v1150, 1.442695
    %v1268 = vpow.pop %v1267
    %v1269 = vmul.f32 %v1151, 1.442695
    %v1270 = vpow.pop %v1269
    %v1271 = vmul.f32 %v1152, 1.442695
    %v1272 = vpow.pop %v1271
    %v1273 = vmul.f32 %v1153, 1.442695
    %v1274 = vpow.pop %v1273
    %v1275 = vmul.f32 %v1154, 1.442695
    %v1276 = vpow.pop %v1275
    %v1277 = vmul.f32 %v1155, 1.442695
    %v1278 = vpow.pop %v1277
    %v1279 = vmul.f32 %v1156, 1.442695
    %v1280 = vpow.pop %v1279
    %v1281 = vmul.f32 %v1157, 1.442695
    %v1282 = vpow.pop %v1281
    %v1283 = vmul.f32 %v1158, 1.442695
    %v1284 = vpow.pop %v1283
    %v1285 = vmul.f32 %v1159, 1.442695
    %v1286 = vpow.pop %v1285
    %v1287 = vmul.f32 %v1160, 1.442695
    %v1288 = vpow.pop %v1287
    %1289 = vst.msk [vmem:[#allocation2] sm:$0xff] %vm379, %v1162
    %1290 = vst.msk [vmem:[#allocation2 + $0x8] sm:$0xff] %vm379, %v1164
    %1291 = vst.msk [vmem:[#allocation2 + $0x10] sm:$0xff] %vm379, %v1166
    %1292 = vst.msk [vmem:[#allocation2 + $0x18] sm:$0xff] %vm379, %v1168
    %1293 = vst.msk [vmem:[#allocation2 + $0x20] sm:$0xff] %vm379, %v1170
    %1294 = vst.msk [vmem:[#allocation2 + $0x28] sm:$0xff] %vm379, %v1172
    %1295 = vst.msk [vmem:[#allocation2 + $0x30] sm:$0xff] %vm379, %v1174
    %1296 = vst.msk [vmem:[#allocation2 + $0x38] sm:$0xff] %vm379, %v1176
    %1297 = vst.msk [vmem:[#allocation2 + $0x40] sm:$0xff] %vm379, %v1178
    %1298 = vst.msk [vmem:[#allocation2 + $0x48] sm:$0xff] %vm379, %v1180
    %1299 = vst.msk [vmem:[#allocation2 + $0x50] sm:$0xff] %vm379, %v1182
    %1300 = vst.msk [vmem:[#allocation2 + $0x58] sm:$0xff] %vm379, %v1184
    %1301 = vst.msk [vmem:[#allocation2 + $0x60] sm:$0xff] %vm379, %v1186
    %1302 = vst.msk [vmem:[#allocation2 + $0x68] sm:$0xff] %vm379, %v1188
    %1303 = vst.msk [vmem:[#allocation2 + $0x70] sm:$0xff] %vm379, %v1190
    %1304 = vst.msk [vmem:[#allocation2 + $0x78] sm:$0xff] %vm379, %v1192
    %1305 = vst.msk [vmem:[#allocation2 + $0x80] sm:$0xff] %vm379, %v1194
    %1306 = vst.msk [vmem:[#allocation2 + $0x88] sm:$0xff] %vm379, %v1196
    %1307 = vst.msk [vmem:[#allocation2 + $0x90] sm:$0xff] %vm379, %v1198
    %1308 = vst.msk [vmem:[#allocation2 + $0x98] sm:$0xff] %vm379, %v1200
    %1309 = vst.msk [vmem:[#allocation2 + $0xa0] sm:$0xff] %vm379, %v1202
    %1310 = vst.msk [vmem:[#allocation2 + $0xa8] sm:$0xff] %vm379, %v1204
    %1311 = vst.msk [vmem:[#allocation2 + $0xb0] sm:$0xff] %vm379, %v1206
    %1312 = vst.msk [vmem:[#allocation2 + $0xb8] sm:$0xff] %vm379, %v1208
    %1313 = vst.msk [vmem:[#allocation2 + $0xc0] sm:$0xff] %vm379, %v1210
    %1314 = vst.msk [vmem:[#allocation2 + $0xc8] sm:$0xff] %vm379, %v1212
    %1315 = vst.msk [vmem:[#allocation2 + $0xd0] sm:$0xff] %vm379, %v1214
    %1316 = vst.msk [vmem:[#allocation2 + $0xd8] sm:$0xff] %vm379, %v1216
    %1317 = vst.msk [vmem:[#allocation2 + $0xe0] sm:$0xff] %vm379, %v1218
    %1318 = vst.msk [vmem:[#allocation2 + $0xe8] sm:$0xff] %vm379, %v1220
    %1319 = vst.msk [vmem:[#allocation2 + $0xf0] sm:$0xff] %vm379, %v1222
    %1320 = vst.msk [vmem:[#allocation2 + $0xf8] sm:$0xff] %vm379, %v1224
    %1321 = vst.msk [vmem:[#allocation2 + $0x100] sm:$0xff] %vm379, %v1226
    %1322 = vst.msk [vmem:[#allocation2 + $0x108] sm:$0xff] %vm379, %v1228
    %1323 = vst.msk [vmem:[#allocation2 + $0x110] sm:$0xff] %vm379, %v1230
    %1324 = vst.msk [vmem:[#allocation2 + $0x118] sm:$0xff] %vm379, %v1232
    %1325 = vst.msk [vmem:[#allocation2 + $0x120] sm:$0xff] %vm379, %v1234
    %1326 = vst.msk [vmem:[#allocation2 + $0x128] sm:$0xff] %vm379, %v1236
    %1327 = vst.msk [vmem:[#allocation2 + $0x130] sm:$0xff] %vm379, %v1238
    %1328 = vst.msk [vmem:[#allocation2 + $0x138] sm:$0xff] %vm379, %v1240
    %1329 = vst.msk [vmem:[#allocation2 + $0x140] sm:$0xff] %vm379, %v1242
    %1330 = vst.msk [vmem:[#allocation2 + $0x148] sm:$0xff] %vm379, %v1244
    %1331 = vst.msk [vmem:[#allocation2 + $0x150] sm:$0xff] %vm379, %v1246
    %1332 = vst.msk [vmem:[#allocation2 + $0x158] sm:$0xff] %vm379, %v1248
    %1333 = vst.msk [vmem:[#allocation2 + $0x160] sm:$0xff] %vm379, %v1250
    %1334 = vst.msk [vmem:[#allocation2 + $0x168] sm:$0xff] %vm379, %v1252
    %1335 = vst.msk [vmem:[#allocation2 + $0x170] sm:$0xff] %vm379, %v1254
    %1336 = vst.msk [vmem:[#allocation2 + $0x178] sm:$0xff] %vm379, %v1256
    %1337 = vst.msk [vmem:[#allocation2 + $0x180] sm:$0xff] %vm379, %v1258
    %1338 = vst.msk [vmem:[#allocation2 + $0x188] sm:$0xff] %vm379, %v1260
    %1339 = vst.msk [vmem:[#allocation2 + $0x190] sm:$0xff] %vm379, %v1262
    %1340 = vst.msk [vmem:[#allocation2 + $0x198] sm:$0xff] %vm379, %v1264
    %1341 = vst.msk [vmem:[#allocation2 + $0x1a0] sm:$0xff] %vm379, %v1266
    %1342 = vst.msk [vmem:[#allocation2 + $0x1a8] sm:$0xff] %vm379, %v1268
    %1343 = vst.msk [vmem:[#allocation2 + $0x1b0] sm:$0xff] %vm379, %v1270
    %1344 = vst.msk [vmem:[#allocation2 + $0x1b8] sm:$0xff] %vm379, %v1272
    %1345 = vst.msk [vmem:[#allocation2 + $0x1c0] sm:$0xff] %vm379, %v1274
    %1346 = vst.msk [vmem:[#allocation2 + $0x1c8] sm:$0xff] %vm379, %v1276
    %1347 = vst.msk [vmem:[#allocation2 + $0x1d0] sm:$0xff] %vm379, %v1278
    %1348 = vst.msk [vmem:[#allocation2 + $0x1d8] sm:$0xff] %vm379, %v1280
    %1349 = vst.msk [vmem:[#allocation2 + $0x1e0] sm:$0xff] %vm379, %v1282
    %1350 = vst.msk [vmem:[#allocation2 + $0x1e8] sm:$0xff] %vm379, %v1284
    %1351 = vst.msk [vmem:[#allocation2 + $0x1f0] sm:$0xff] %vm379, %v1286
    %1352 = vst.msk [vmem:[#allocation2 + $0x1f8] sm:$0xff] %vm379, %v1288
    %v1353 = vmul.f32 %v545, %v360
    %v1354 = vmul.f32 %v546, %v361
    %v1355 = vmul.f32 %v547, %v362
    %v1356 = vmul.f32 %v548, %v363
    %v1361 = vcombine.high %v1353, %v1353
    %v1363 = vunpack.c.l.s4 1966171168
    %v1364 = vunpack.c.0.s8 %v1363
    %v1365 = vlaneseq
    %v1366 = vshrl.u32 %v1365, 7
    %v1367 = vsub.s32 %v1364, %v1366
    %v1368 = vrot.slane %v1353, %v1367
    %v1370 = vunpack.c.l.s4 1966171168
    %v1371 = vunpack.c.0.s8 %v1370
    %v1372 = vlaneseq
    %v1373 = vshrl.u32 %v1372, 7
    %v1374 = vsub.s32 %v1371, %v1373
    %v1375 = vrot.slane %v1361, %v1374
    %v1376 = vcombine.high %v1368, %v1368
    %v1377 = vcombine.high %v1375, %v1375
    %v1379 = vunpack.c.l.s4 1966171168
    %v1380 = vunpack.c.0.s8 %v1379
    %v1381 = vlaneseq
    %v1382 = vshrl.u32 %v1381, 7
    %v1383 = vsub.s32 %v1380, %v1382
    %v1384 = vrot.slane %v1368, %v1383
    %v1386 = vunpack.c.l.s4 1966171168
    %v1387 = vunpack.c.0.s8 %v1386
    %v1388 = vlaneseq
    %v1389 = vshrl.u32 %v1388, 7
    %v1390 = vsub.s32 %v1387, %v1389
    %v1391 = vrot.slane %v1375, %v1390
    %v1393 = vunpack.c.l.s4 1966171168
    %v1394 = vunpack.c.0.s8 %v1393
    %v1395 = vlaneseq
    %v1396 = vshrl.u32 %v1395, 7
    %v1397 = vsub.s32 %v1394, %v1396
    %v1398 = vrot.slane %v1376, %v1397
    %v1400 = vunpack.c.l.s4 1966171168
    %v1401 = vunpack.c.0.s8 %v1400
    %v1402 = vlaneseq
    %v1403 = vshrl.u32 %v1402, 7
    %v1404 = vsub.s32 %v1401, %v1403
    %v1405 = vrot.slane %v1377, %v1404
    %v1406 = vcombine.high %v1384, %v1384
    %v1407 = vcombine.high %v1391, %v1391
    %v1408 = vcombine.high %v1398, %v1398
    %v1409 = vcombine.high %v1405, %v1405
    %v1410 = vcombine.high %v1354, %v1354
    %v1412 = vunpack.c.l.s4 1966171168
    %v1413 = vunpack.c.0.s8 %v1412
    %v1414 = vlaneseq
    %v1415 = vshrl.u32 %v1414, 7
    %v1416 = vsub.s32 %v1413, %v1415
    %v1417 = vrot.slane %v1354, %v1416
    %v1419 = vunpack.c.l.s4 1966171168
    %v1420 = vunpack.c.0.s8 %v1419
    %v1421 = vlaneseq
    %v1422 = vshrl.u32 %v1421, 7
    %v1423 = vsub.s32 %v1420, %v1422
    %v1424 = vrot.slane %v1410, %v1423
    %v1425 = vcombine.high %v1417, %v1417
    %v1426 = vcombine.high %v1424, %v1424
    %v1428 = vunpack.c.l.s4 1966171168
    %v1429 = vunpack.c.0.s8 %v1428
    %v1430 = vlaneseq
    %v1431 = vshrl.u32 %v1430, 7
    %v1432 = vsub.s32 %v1429, %v1431
    %v1433 = vrot.slane %v1417, %v1432
    %v1435 = vunpack.c.l.s4 1966171168
    %v1436 = vunpack.c.0.s8 %v1435
    %v1437 = vlaneseq
    %v1438 = vshrl.u32 %v1437, 7
    %v1439 = vsub.s32 %v1436, %v1438
    %v1440 = vrot.slane %v1424, %v1439
    %v1442 = vunpack.c.l.s4 1966171168
    %v1443 = vunpack.c.0.s8 %v1442
    %v1444 = vlaneseq
    %v1445 = vshrl.u32 %v1444, 7
    %v1446 = vsub.s32 %v1443, %v1445
    %v1447 = vrot.slane %v1425, %v1446
    %v1449 = vunpack.c.l.s4 1966171168
    %v1450 = vunpack.c.0.s8 %v1449
    %v1451 = vlaneseq
    %v1452 = vshrl.u32 %v1451, 7
    %v1453 = vsub.s32 %v1450, %v1452
    %v1454 = vrot.slane %v1426, %v1453
    %v1455 = vcombine.high %v1433, %v1433
    %v1456 = vcombine.high %v1440, %v1440
    %v1457 = vcombine.high %v1447, %v1447
    %v1458 = vcombine.high %v1454, %v1454
    %v1459 = vcombine.high %v1355, %v1355
    %v1461 = vunpack.c.l.s4 1966171168
    %v1462 = vunpack.c.0.s8 %v1461
    %v1463 = vlaneseq
    %v1464 = vshrl.u32 %v1463, 7
    %v1465 = vsub.s32 %v1462, %v1464
    %v1466 = vrot.slane %v1355, %v1465
    %v1468 = vunpack.c.l.s4 1966171168
    %v1469 = vunpack.c.0.s8 %v1468
    %v1470 = vlaneseq
    %v1471 = vshrl.u32 %v1470, 7
    %v1472 = vsub.s32 %v1469, %v1471
    %v1473 = vrot.slane %v1459, %v1472
    %v1474 = vcombine.high %v1466, %v1466
    %v1475 = vcombine.high %v1473, %v1473
    %v1477 = vunpack.c.l.s4 1966171168
    %v1478 = vunpack.c.0.s8 %v1477
    %v1479 = vlaneseq
    %v1480 = vshrl.u32 %v1479, 7
    %v1481 = vsub.s32 %v1478, %v1480
    %v1482 = vrot.slane %v1466, %v1481
    %v1484 = vunpack.c.l.s4 1966171168
    %v1485 = vunpack.c.0.s8 %v1484
    %v1486 = vlaneseq
    %v1487 = vshrl.u32 %v1486, 7
    %v1488 = vsub.s32 %v1485, %v1487
    %v1489 = vrot.slane %v1473, %v1488
    %v1491 = vunpack.c.l.s4 1966171168
    %v1492 = vunpack.c.0.s8 %v1491
    %v1493 = vlaneseq
    %v1494 = vshrl.u32 %v1493, 7
    %v1495 = vsub.s32 %v1492, %v1494
    %v1496 = vrot.slane %v1474, %v1495
    %v1498 = vunpack.c.l.s4 1966171168
    %v1499 = vunpack.c.0.s8 %v1498
    %v1500 = vlaneseq
    %v1501 = vshrl.u32 %v1500, 7
    %v1502 = vsub.s32 %v1499, %v1501
    %v1503 = vrot.slane %v1475, %v1502
    %v1504 = vcombine.high %v1482, %v1482
    %v1505 = vcombine.high %v1489, %v1489
    %v1506 = vcombine.high %v1496, %v1496
    %v1507 = vcombine.high %v1503, %v1503
    %v1508 = vcombine.high %v1356, %v1356
    %v1510 = vunpack.c.l.s4 1966171168
    %v1511 = vunpack.c.0.s8 %v1510
    %v1512 = vlaneseq
    %v1513 = vshrl.u32 %v1512, 7
    %v1514 = vsub.s32 %v1511, %v1513
    %v1515 = vrot.slane %v1356, %v1514
    %v1517 = vunpack.c.l.s4 1966171168
    %v1518 = vunpack.c.0.s8 %v1517
    %v1519 = vlaneseq
    %v1520 = vshrl.u32 %v1519, 7
    %v1521 = vsub.s32 %v1518, %v1520
    %v1522 = vrot.slane %v1508, %v1521
    %v1523 = vcombine.high %v1515, %v1515
    %v1524 = vcombine.high %v1522, %v1522
    %v1526 = vunpack.c.l.s4 1966171168
    %v1527 = vunpack.c.0.s8 %v1526
    %v1528 = vlaneseq
    %v1529 = vshrl.u32 %v1528, 7
    %v1530 = vsub.s32 %v1527, %v1529
    %v1531 = vrot.slane %v1515, %v1530
    %v1533 = vunpack.c.l.s4 1966171168
    %v1534 = vunpack.c.0.s8 %v1533
    %v1535 = vlaneseq
    %v1536 = vshrl.u32 %v1535, 7
    %v1537 = vsub.s32 %v1534, %v1536
    %v1538 = vrot.slane %v1522, %v1537
    %v1540 = vunpack.c.l.s4 1966171168
    %v1541 = vunpack.c.0.s8 %v1540
    %v1542 = vlaneseq
    %v1543 = vshrl.u32 %v1542, 7
    %v1544 = vsub.s32 %v1541, %v1543
    %v1545 = vrot.slane %v1523, %v1544
    %v1547 = vunpack.c.l.s4 1966171168
    %v1548 = vunpack.c.0.s8 %v1547
    %v1549 = vlaneseq
    %v1550 = vshrl.u32 %v1549, 7
    %v1551 = vsub.s32 %v1548, %v1550
    %v1552 = vrot.slane %v1524, %v1551
    %v1553 = vcombine.high %v1531, %v1531
    %v1554 = vcombine.high %v1538, %v1538
    %v1555 = vcombine.high %v1545, %v1545
    %v1556 = vcombine.high %v1552, %v1552
    %v1557 = vlaneseq
    %v1558 = vshrl.u32 %v1557, 7
    %v1559 = vsub.s32 0, %v1558
    %v1560 = vrot.slane %v624, %v1559
    %1562 = vbcast.lane.b32.xlu0 %v1560, 256
    %v1563 = vpop.permute.xlu0 %1562
    %s1565 = sor.u32 256, 8
    %1566 = vbcast.lane.b32.xlu0 %v1560, %s1565
    %v1567 = vpop.permute.xlu0 %1566
    %v1568 = vlaneseq
    %v1569 = vshrl.u32 %v1568, 7
    %v1570 = vsub.s32 1, %v1569
    %v1571 = vrot.slane %v624, %v1570
    %1573 = vbcast.lane.b32.xlu0 %v1571, 256
    %v1574 = vpop.permute.xlu0 %1573
    %s1576 = sor.u32 256, 8
    %1577 = vbcast.lane.b32.xlu0 %v1571, %s1576
    %v1578 = vpop.permute.xlu0 %1577
    %v1579 = vlaneseq
    %v1580 = vshrl.u32 %v1579, 7
    %v1581 = vsub.s32 2, %v1580
    %v1582 = vrot.slane %v624, %v1581
    %1584 = vbcast.lane.b32.xlu0 %v1582, 256
    %v1585 = vpop.permute.xlu0 %1584
    %s1587 = sor.u32 256, 8
    %1588 = vbcast.lane.b32.xlu0 %v1582, %s1587
    %v1589 = vpop.permute.xlu0 %1588
    %v1590 = vlaneseq
    %v1591 = vshrl.u32 %v1590, 7
    %v1592 = vsub.s32 3, %v1591
    %v1593 = vrot.slane %v624, %v1592
    %1595 = vbcast.lane.b32.xlu0 %v1593, 256
    %v1596 = vpop.permute.xlu0 %1595
    %s1598 = sor.u32 256, 8
    %1599 = vbcast.lane.b32.xlu0 %v1593, %s1598
    %v1600 = vpop.permute.xlu0 %1599
    %v1601 = vlaneseq
    %v1602 = vshrl.u32 %v1601, 7
    %v1603 = vsub.s32 4, %v1602
    %v1604 = vrot.slane %v624, %v1603
    %1606 = vbcast.lane.b32.xlu0 %v1604, 256
    %v1607 = vpop.permute.xlu0 %1606
    %s1609 = sor.u32 256, 8
    %1610 = vbcast.lane.b32.xlu0 %v1604, %s1609
    %v1611 = vpop.permute.xlu0 %1610
    %v1612 = vlaneseq
    %v1613 = vshrl.u32 %v1612, 7
    %v1614 = vsub.s32 5, %v1613
    %v1615 = vrot.slane %v624, %v1614
    %1617 = vbcast.lane.b32.xlu0 %v1615, 256
    %v1618 = vpop.permute.xlu0 %1617
    %s1620 = sor.u32 256, 8
    %1621 = vbcast.lane.b32.xlu0 %v1615, %s1620
    %v1622 = vpop.permute.xlu0 %1621
    %v1623 = vlaneseq
    %v1624 = vshrl.u32 %v1623, 7
    %v1625 = vsub.s32 6, %v1624
    %v1626 = vrot.slane %v624, %v1625
    %1628 = vbcast.lane.b32.xlu0 %v1626, 256
    %v1629 = vpop.permute.xlu0 %1628
    %s1631 = sor.u32 256, 8
    %1632 = vbcast.lane.b32.xlu0 %v1626, %s1631
    %v1633 = vpop.permute.xlu0 %1632
    %v1634 = vlaneseq
    %v1635 = vshrl.u32 %v1634, 7
    %v1636 = vsub.s32 7, %v1635
    %v1637 = vrot.slane %v624, %v1636
    %1639 = vbcast.lane.b32.xlu0 %v1637, 256
    %v1640 = vpop.permute.xlu0 %1639
    %s1642 = sor.u32 256, 8
    %1643 = vbcast.lane.b32.xlu0 %v1637, %s1642
    %v1644 = vpop.permute.xlu0 %1643
    %v1645 = vlaneseq
    %v1646 = vshrl.u32 %v1645, 7
    %v1647 = vsub.s32 0, %v1646
    %v1648 = vrot.slane %v629, %v1647
    %1650 = vbcast.lane.b32.xlu0 %v1648, 256
    %v1651 = vpop.permute.xlu0 %1650
    %s1653 = sor.u32 256, 8
    %1654 = vbcast.lane.b32.xlu0 %v1648, %s1653
    %v1655 = vpop.permute.xlu0 %1654
    %v1656 = vlaneseq
    %v1657 = vshrl.u32 %v1656, 7
    %v1658 = vsub.s32 1, %v1657
    %v1659 = vrot.slane %v629, %v1658
    %1661 = vbcast.lane.b32.xlu0 %v1659, 256
    %v1662 = vpop.permute.xlu0 %1661
    %s1664 = sor.u32 256, 8
    %1665 = vbcast.lane.b32.xlu0 %v1659, %s1664
    %v1666 = vpop.permute.xlu0 %1665
    %v1667 = vlaneseq
    %v1668 = vshrl.u32 %v1667, 7
    %v1669 = vsub.s32 2, %v1668
    %v1670 = vrot.slane %v629, %v1669
    %1672 = vbcast.lane.b32.xlu0 %v1670, 256
    %v1673 = vpop.permute.xlu0 %1672
    %s1675 = sor.u32 256, 8
    %1676 = vbcast.lane.b32.xlu0 %v1670, %s1675
    %v1677 = vpop.permute.xlu0 %1676
    %v1678 = vlaneseq
    %v1679 = vshrl.u32 %v1678, 7
    %v1680 = vsub.s32 3, %v1679
    %v1681 = vrot.slane %v629, %v1680
    %1683 = vbcast.lane.b32.xlu0 %v1681, 256
    %v1684 = vpop.permute.xlu0 %1683
    %s1686 = sor.u32 256, 8
    %1687 = vbcast.lane.b32.xlu0 %v1681, %s1686
    %v1688 = vpop.permute.xlu0 %1687
    %v1689 = vlaneseq
    %v1690 = vshrl.u32 %v1689, 7
    %v1691 = vsub.s32 4, %v1690
    %v1692 = vrot.slane %v629, %v1691
    %1694 = vbcast.lane.b32.xlu0 %v1692, 256
    %v1695 = vpop.permute.xlu0 %1694
    %s1697 = sor.u32 256, 8
    %1698 = vbcast.lane.b32.xlu0 %v1692, %s1697
    %v1699 = vpop.permute.xlu0 %1698
    %v1700 = vlaneseq
    %v1701 = vshrl.u32 %v1700, 7
    %v1702 = vsub.s32 5, %v1701
    %v1703 = vrot.slane %v629, %v1702
    %1705 = vbcast.lane.b32.xlu0 %v1703, 256
    %v1706 = vpop.permute.xlu0 %1705
    %s1708 = sor.u32 256, 8
    %1709 = vbcast.lane.b32.xlu0 %v1703, %s1708
    %v1710 = vpop.permute.xlu0 %1709
    %v1711 = vlaneseq
    %v1712 = vshrl.u32 %v1711, 7
    %v1713 = vsub.s32 6, %v1712
    %v1714 = vrot.slane %v629, %v1713
    %1716 = vbcast.lane.b32.xlu0 %v1714, 256
    %v1717 = vpop.permute.xlu0 %1716
    %s1719 = sor.u32 256, 8
    %1720 = vbcast.lane.b32.xlu0 %v1714, %s1719
    %v1721 = vpop.permute.xlu0 %1720
    %v1722 = vlaneseq
    %v1723 = vshrl.u32 %v1722, 7
    %v1724 = vsub.s32 7, %v1723
    %v1725 = vrot.slane %v629, %v1724
    %1727 = vbcast.lane.b32.xlu0 %v1725, 256
    %v1728 = vpop.permute.xlu0 %1727
    %s1730 = sor.u32 256, 8
    %1731 = vbcast.lane.b32.xlu0 %v1725, %s1730
    %v1732 = vpop.permute.xlu0 %1731
    %v1733 = vlaneseq
    %v1734 = vshrl.u32 %v1733, 7
    %v1735 = vsub.s32 0, %v1734
    %v1736 = vrot.slane %v634, %v1735
    %1738 = vbcast.lane.b32.xlu0 %v1736, 256
    %v1739 = vpop.permute.xlu0 %1738
    %s1741 = sor.u32 256, 8
    %1742 = vbcast.lane.b32.xlu0 %v1736, %s1741
    %v1743 = vpop.permute.xlu0 %1742
    %v1744 = vlaneseq
    %v1745 = vshrl.u32 %v1744, 7
    %v1746 = vsub.s32 1, %v1745
    %v1747 = vrot.slane %v634, %v1746
    %1749 = vbcast.lane.b32.xlu0 %v1747, 256
    %v1750 = vpop.permute.xlu0 %1749
    %s1752 = sor.u32 256, 8
    %1753 = vbcast.lane.b32.xlu0 %v1747, %s1752
    %v1754 = vpop.permute.xlu0 %1753
    %v1755 = vlaneseq
    %v1756 = vshrl.u32 %v1755, 7
    %v1757 = vsub.s32 2, %v1756
    %v1758 = vrot.slane %v634, %v1757
    %1760 = vbcast.lane.b32.xlu0 %v1758, 256
    %v1761 = vpop.permute.xlu0 %1760
    %s1763 = sor.u32 256, 8
    %1764 = vbcast.lane.b32.xlu0 %v1758, %s1763
    %v1765 = vpop.permute.xlu0 %1764
    %v1766 = vlaneseq
    %v1767 = vshrl.u32 %v1766, 7
    %v1768 = vsub.s32 3, %v1767
    %v1769 = vrot.slane %v634, %v1768
    %1771 = vbcast.lane.b32.xlu0 %v1769, 256
    %v1772 = vpop.permute.xlu0 %1771
    %s1774 = sor.u32 256, 8
    %1775 = vbcast.lane.b32.xlu0 %v1769, %s1774
    %v1776 = vpop.permute.xlu0 %1775
    %v1777 = vlaneseq
    %v1778 = vshrl.u32 %v1777, 7
    %v1779 = vsub.s32 4, %v1778
    %v1780 = vrot.slane %v634, %v1779
    %1782 = vbcast.lane.b32.xlu0 %v1780, 256
    %v1783 = vpop.permute.xlu0 %1782
    %s1785 = sor.u32 256, 8
    %1786 = vbcast.lane.b32.xlu0 %v1780, %s1785
    %v1787 = vpop.permute.xlu0 %1786
    %v1788 = vlaneseq
    %v1789 = vshrl.u32 %v1788, 7
    %v1790 = vsub.s32 5, %v1789
    %v1791 = vrot.slane %v634, %v1790
    %1793 = vbcast.lane.b32.xlu0 %v1791, 256
    %v1794 = vpop.permute.xlu0 %1793
    %s1796 = sor.u32 256, 8
    %1797 = vbcast.lane.b32.xlu0 %v1791, %s1796
    %v1798 = vpop.permute.xlu0 %1797
    %v1799 = vlaneseq
    %v1800 = vshrl.u32 %v1799, 7
    %v1801 = vsub.s32 6, %v1800
    %v1802 = vrot.slane %v634, %v1801
    %1804 = vbcast.lane.b32.xlu0 %v1802, 256
    %v1805 = vpop.permute.xlu0 %1804
    %s1807 = sor.u32 256, 8
    %1808 = vbcast.lane.b32.xlu0 %v1802, %s1807
    %v1809 = vpop.permute.xlu0 %1808
    %v1810 = vlaneseq
    %v1811 = vshrl.u32 %v1810, 7
    %v1812 = vsub.s32 7, %v1811
    %v1813 = vrot.slane %v634, %v1812
    %1815 = vbcast.lane.b32.xlu0 %v1813, 256
    %v1816 = vpop.permute.xlu0 %1815
    %s1818 = sor.u32 256, 8
    %1819 = vbcast.lane.b32.xlu0 %v1813, %s1818
    %v1820 = vpop.permute.xlu0 %1819
    %v1821 = vlaneseq
    %v1822 = vshrl.u32 %v1821, 7
    %v1823 = vsub.s32 0, %v1822
    %v1824 = vrot.slane %v639, %v1823
    %1826 = vbcast.lane.b32.xlu0 %v1824, 256
    %v1827 = vpop.permute.xlu0 %1826
    %s1829 = sor.u32 256, 8
    %1830 = vbcast.lane.b32.xlu0 %v1824, %s1829
    %v1831 = vpop.permute.xlu0 %1830
    %v1832 = vlaneseq
    %v1833 = vshrl.u32 %v1832, 7
    %v1834 = vsub.s32 1, %v1833
    %v1835 = vrot.slane %v639, %v1834
    %1837 = vbcast.lane.b32.xlu0 %v1835, 256
    %v1838 = vpop.permute.xlu0 %1837
    %s1840 = sor.u32 256, 8
    %1841 = vbcast.lane.b32.xlu0 %v1835, %s1840
    %v1842 = vpop.permute.xlu0 %1841
    %v1843 = vlaneseq
    %v1844 = vshrl.u32 %v1843, 7
    %v1845 = vsub.s32 2, %v1844
    %v1846 = vrot.slane %v639, %v1845
    %1848 = vbcast.lane.b32.xlu0 %v1846, 256
    %v1849 = vpop.permute.xlu0 %1848
    %s1851 = sor.u32 256, 8
    %1852 = vbcast.lane.b32.xlu0 %v1846, %s1851
    %v1853 = vpop.permute.xlu0 %1852
    %v1854 = vlaneseq
    %v1855 = vshrl.u32 %v1854, 7
    %v1856 = vsub.s32 3, %v1855
    %v1857 = vrot.slane %v639, %v1856
    %1859 = vbcast.lane.b32.xlu0 %v1857, 256
    %v1860 = vpop.permute.xlu0 %1859
    %s1862 = sor.u32 256, 8
    %1863 = vbcast.lane.b32.xlu0 %v1857, %s1862
    %v1864 = vpop.permute.xlu0 %1863
    %v1865 = vlaneseq
    %v1866 = vshrl.u32 %v1865, 7
    %v1867 = vsub.s32 4, %v1866
    %v1868 = vrot.slane %v639, %v1867
    %1870 = vbcast.lane.b32.xlu0 %v1868, 256
    %v1871 = vpop.permute.xlu0 %1870
    %s1873 = sor.u32 256, 8
    %1874 = vbcast.lane.b32.xlu0 %v1868, %s1873
    %v1875 = vpop.permute.xlu0 %1874
    %v1876 = vlaneseq
    %v1877 = vshrl.u32 %v1876, 7
    %v1878 = vsub.s32 5, %v1877
    %v1879 = vrot.slane %v639, %v1878
    %1881 = vbcast.lane.b32.xlu0 %v1879, 256
    %v1882 = vpop.permute.xlu0 %1881
    %s1884 = sor.u32 256, 8
    %1885 = vbcast.lane.b32.xlu0 %v1879, %s1884
    %v1886 = vpop.permute.xlu0 %1885
    %v1887 = vlaneseq
    %v1888 = vshrl.u32 %v1887, 7
    %v1889 = vsub.s32 6, %v1888
    %v1890 = vrot.slane %v639, %v1889
    %1892 = vbcast.lane.b32.xlu0 %v1890, 256
    %v1893 = vpop.permute.xlu0 %1892
    %s1895 = sor.u32 256, 8
    %1896 = vbcast.lane.b32.xlu0 %v1890, %s1895
    %v1897 = vpop.permute.xlu0 %1896
    %v1898 = vlaneseq
    %v1899 = vshrl.u32 %v1898, 7
    %v1900 = vsub.s32 7, %v1899
    %v1901 = vrot.slane %v639, %v1900
    %1903 = vbcast.lane.b32.xlu0 %v1901, 256
    %v1904 = vpop.permute.xlu0 %1903
    %s1906 = sor.u32 256, 8
    %1907 = vbcast.lane.b32.xlu0 %v1901, %s1906
    %v1908 = vpop.permute.xlu0 %1907
    %v1909 = vlaneseq
    %v1910 = vshrl.u32 %v1909, 7
    %v1911 = vsub.s32 0, %v1910
    %v1912 = vrot.slane %v1384, %v1911
    %v1913 = vlaneseq
    %v1914 = vshrl.u32 %v1913, 7
    %v1915 = vsub.s32 0, %v1914
    %v1916 = vrot.slane %v1398, %v1915
    %v1917 = vlaneseq
    %v1918 = vshrl.u32 %v1917, 7
    %v1919 = vsub.s32 0, %v1918
    %v1920 = vrot.slane %v1406, %v1919
    %v1921 = vlaneseq
    %v1922 = vshrl.u32 %v1921, 7
    %v1923 = vsub.s32 0, %v1922
    %v1924 = vrot.slane %v1408, %v1923
    %v1925 = vlaneseq
    %v1926 = vshrl.u32 %v1925, 7
    %v1927 = vsub.s32 0, %v1926
    %v1928 = vrot.slane %v1391, %v1927
    %v1929 = vlaneseq
    %v1930 = vshrl.u32 %v1929, 7
    %v1931 = vsub.s32 0, %v1930
    %v1932 = vrot.slane %v1405, %v1931
    %v1933 = vlaneseq
    %v1934 = vshrl.u32 %v1933, 7
    %v1935 = vsub.s32 0, %v1934
    %v1936 = vrot.slane %v1407, %v1935
    %v1937 = vlaneseq
    %v1938 = vshrl.u32 %v1937, 7
    %v1939 = vsub.s32 0, %v1938
    %v1940 = vrot.slane %v1409, %v1939
    %v1941 = vlaneseq
    %v1942 = vshrl.u32 %v1941, 7
    %v1943 = vsub.s32 0, %v1942
    %v1944 = vrot.slane %v1433, %v1943
    %v1945 = vlaneseq
    %v1946 = vshrl.u32 %v1945, 7
    %v1947 = vsub.s32 0, %v1946
    %v1948 = vrot.slane %v1447, %v1947
    %v1949 = vlaneseq
    %v1950 = vshrl.u32 %v1949, 7
    %v1951 = vsub.s32 0, %v1950
    %v1952 = vrot.slane %v1455, %v1951
    %v1953 = vlaneseq
    %v1954 = vshrl.u32 %v1953, 7
    %v1955 = vsub.s32 0, %v1954
    %v1956 = vrot.slane %v1457, %v1955
    %v1957 = vlaneseq
    %v1958 = vshrl.u32 %v1957, 7
    %v1959 = vsub.s32 0, %v1958
    %v1960 = vrot.slane %v1440, %v1959
    %v1961 = vlaneseq
    %v1962 = vshrl.u32 %v1961, 7
    %v1963 = vsub.s32 0, %v1962
    %v1964 = vrot.slane %v1454, %v1963
    %v1965 = vlaneseq
    %v1966 = vshrl.u32 %v1965, 7
    %v1967 = vsub.s32 0, %v1966
    %v1968 = vrot.slane %v1456, %v1967
    %v1969 = vlaneseq
    %v1970 = vshrl.u32 %v1969, 7
    %v1971 = vsub.s32 0, %v1970
    %v1972 = vrot.slane %v1458, %v1971
    %v1973 = vlaneseq
    %v1974 = vshrl.u32 %v1973, 7
    %v1975 = vsub.s32 0, %v1974
    %v1976 = vrot.slane %v1482, %v1975
    %v1977 = vlaneseq
    %v1978 = vshrl.u32 %v1977, 7
    %v1979 = vsub.s32 0, %v1978
    %v1980 = vrot.slane %v1496, %v1979
    %v1981 = vlaneseq
    %v1982 = vshrl.u32 %v1981, 7
    %v1983 = vsub.s32 0, %v1982
    %v1984 = vrot.slane %v1504, %v1983
    %v1985 = vlaneseq
    %v1986 = vshrl.u32 %v1985, 7
    %v1987 = vsub.s32 0, %v1986
    %v1988 = vrot.slane %v1506, %v1987
    %v1989 = vlaneseq
    %v1990 = vshrl.u32 %v1989, 7
    %v1991 = vsub.s32 0, %v1990
    %v1992 = vrot.slane %v1489, %v1991
    %v1993 = vlaneseq
    %v1994 = vshrl.u32 %v1993, 7
    %v1995 = vsub.s32 0, %v1994
    %v1996 = vrot.slane %v1503, %v1995
    %v1997 = vlaneseq
    %v1998 = vshrl.u32 %v1997, 7
    %v1999 = vsub.s32 0, %v1998
    %v2000 = vrot.slane %v1505, %v1999
    %v2001 = vlaneseq
    %v2002 = vshrl.u32 %v2001, 7
    %v2003 = vsub.s32 0, %v2002
    %v2004 = vrot.slane %v1507, %v2003
    %v2005 = vlaneseq
    %v2006 = vshrl.u32 %v2005, 7
    %v2007 = vsub.s32 0, %v2006
    %v2008 = vrot.slane %v1531, %v2007
    %v2009 = vlaneseq
    %v2010 = vshrl.u32 %v2009, 7
    %v2011 = vsub.s32 0, %v2010
    %v2012 = vrot.slane %v1545, %v2011
    %v2013 = vlaneseq
    %v2014 = vshrl.u32 %v2013, 7
    %v2015 = vsub.s32 0, %v2014
    %v2016 = vrot.slane %v1553, %v2015
    %v2017 = vlaneseq
    %v2018 = vshrl.u32 %v2017, 7
    %v2019 = vsub.s32 0, %v2018
    %v2020 = vrot.slane %v1555, %v2019
    %v2021 = vlaneseq
    %v2022 = vshrl.u32 %v2021, 7
    %v2023 = vsub.s32 0, %v2022
    %v2024 = vrot.slane %v1538, %v2023
    %v2025 = vlaneseq
    %v2026 = vshrl.u32 %v2025, 7
    %v2027 = vsub.s32 0, %v2026
    %v2028 = vrot.slane %v1552, %v2027
    %v2029 = vlaneseq
    %v2030 = vshrl.u32 %v2029, 7
    %v2031 = vsub.s32 0, %v2030
    %v2032 = vrot.slane %v1554, %v2031
    %v2033 = vlaneseq
    %v2034 = vshrl.u32 %v2033, 7
    %v2035 = vsub.s32 0, %v2034
    %v2036 = vrot.slane %v1556, %v2035
    %v2069 = vmul.f32 %v1912, %v1563
    %v2070 = vmul.f32 %v1912, %v1567
    %v2071 = vmul.f32 %v1916, %v1574
    %v2072 = vmul.f32 %v1916, %v1578
    %v2073 = vmul.f32 %v1920, %v1585
    %v2074 = vmul.f32 %v1920, %v1589
    %v2075 = vmul.f32 %v1924, %v1596
    %v2076 = vmul.f32 %v1924, %v1600
    %v2077 = vmul.f32 %v1928, %v1607
    %v2078 = vmul.f32 %v1928, %v1611
    %v2079 = vmul.f32 %v1932, %v1618
    %v2080 = vmul.f32 %v1932, %v1622
    %v2081 = vmul.f32 %v1936, %v1629
    %v2082 = vmul.f32 %v1936, %v1633
    %v2083 = vmul.f32 %v1940, %v1640
    %v2084 = vmul.f32 %v1940, %v1644
    %v2085 = vmul.f32 %v1944, %v1651
    %v2086 = vmul.f32 %v1944, %v1655
    %v2087 = vmul.f32 %v1948, %v1662
    %v2088 = vmul.f32 %v1948, %v1666
    %v2089 = vmul.f32 %v1952, %v1673
    %v2090 = vmul.f32 %v1952, %v1677
    %v2091 = vmul.f32 %v1956, %v1684
    %v2092 = vmul.f32 %v1956, %v1688
    %v2093 = vmul.f32 %v1960, %v1695
    %v2094 = vmul.f32 %v1960, %v1699
    %v2095 = vmul.f32 %v1964, %v1706
    %v2096 = vmul.f32 %v1964, %v1710
    %v2097 = vmul.f32 %v1968, %v1717
    %v2098 = vmul.f32 %v1968, %v1721
    %v2099 = vmul.f32 %v1972, %v1728
    %v2100 = vmul.f32 %v1972, %v1732
    %v2101 = vmul.f32 %v1976, %v1739
    %v2102 = vmul.f32 %v1976, %v1743
    %v2103 = vmul.f32 %v1980, %v1750
    %v2104 = vmul.f32 %v1980, %v1754
    %v2105 = vmul.f32 %v1984, %v1761
    %v2106 = vmul.f32 %v1984, %v1765
    %v2107 = vmul.f32 %v1988, %v1772
    %v2108 = vmul.f32 %v1988, %v1776
    %v2109 = vmul.f32 %v1992, %v1783
    %v2110 = vmul.f32 %v1992, %v1787
    %v2111 = vmul.f32 %v1996, %v1794
    %v2112 = vmul.f32 %v1996, %v1798
    %v2113 = vmul.f32 %v2000, %v1805
    %v2114 = vmul.f32 %v2000, %v1809
    %v2115 = vmul.f32 %v2004, %v1816
    %v2116 = vmul.f32 %v2004, %v1820
    %v2117 = vmul.f32 %v2008, %v1827
    %v2118 = vmul.f32 %v2008, %v1831
    %v2119 = vmul.f32 %v2012, %v1838
    %v2120 = vmul.f32 %v2012, %v1842
    %v2121 = vmul.f32 %v2016, %v1849
    %v2122 = vmul.f32 %v2016, %v1853
    %v2123 = vmul.f32 %v2020, %v1860
    %v2124 = vmul.f32 %v2020, %v1864
    %v2125 = vmul.f32 %v2024, %v1871
    %v2126 = vmul.f32 %v2024, %v1875
    %v2127 = vmul.f32 %v2028, %v1882
    %v2128 = vmul.f32 %v2028, %v1886
    %v2129 = vmul.f32 %v2032, %v1893
    %v2130 = vmul.f32 %v2032, %v1897
    %v2131 = vmul.f32 %v2036, %v1904
    %v2132 = vmul.f32 %v2036, %v1908
    %2133 = vst.msk [vmem:[#allocation3] sm:$0xff] %vm379, %v2069
    %2134 = vst.msk [vmem:[#allocation3 + $0x8] sm:$0xff] %vm379, %v2070
    %2135 = vst.msk [vmem:[#allocation3 + $0x10] sm:$0xff] %vm379, %v2071
    %2136 = vst.msk [vmem:[#allocation3 + $0x18] sm:$0xff] %vm379, %v2072
    %2137 = vst.msk [vmem:[#allocation3 + $0x20] sm:$0xff] %vm379, %v2073
    %2138 = vst.msk [vmem:[#allocation3 + $0x28] sm:$0xff] %vm379, %v2074
    %2139 = vst.msk [vmem:[#allocation3 + $0x30] sm:$0xff] %vm379, %v2075
    %2140 = vst.msk [vmem:[#allocation3 + $0x38] sm:$0xff] %vm379, %v2076
    %2141 = vst.msk [vmem:[#allocation3 + $0x40] sm:$0xff] %vm379, %v2077
    %2142 = vst.msk [vmem:[#allocation3 + $0x48] sm:$0xff] %vm379, %v2078
    %2143 = vst.msk [vmem:[#allocation3 + $0x50] sm:$0xff] %vm379, %v2079
    %2144 = vst.msk [vmem:[#allocation3 + $0x58] sm:$0xff] %vm379, %v2080
    %2145 = vst.msk [vmem:[#allocation3 + $0x60] sm:$0xff] %vm379, %v2081
    %2146 = vst.msk [vmem:[#allocation3 + $0x68] sm:$0xff] %vm379, %v2082
    %2147 = vst.msk [vmem:[#allocation3 + $0x70] sm:$0xff] %vm379, %v2083
    %2148 = vst.msk [vmem:[#allocation3 + $0x78] sm:$0xff] %vm379, %v2084
    %2149 = vst.msk [vmem:[#allocation3 + $0x80] sm:$0xff] %vm379, %v2085
    %2150 = vst.msk [vmem:[#allocation3 + $0x88] sm:$0xff] %vm379, %v2086
    %2151 = vst.msk [vmem:[#allocation3 + $0x90] sm:$0xff] %vm379, %v2087
    %2152 = vst.msk [vmem:[#allocation3 + $0x98] sm:$0xff] %vm379, %v2088
    %2153 = vst.msk [vmem:[#allocation3 + $0xa0] sm:$0xff] %vm379, %v2089
    %2154 = vst.msk [vmem:[#allocation3 + $0xa8] sm:$0xff] %vm379, %v2090
    %2155 = vst.msk [vmem:[#allocation3 + $0xb0] sm:$0xff] %vm379, %v2091
    %2156 = vst.msk [vmem:[#allocation3 + $0xb8] sm:$0xff] %vm379, %v2092
    %2157 = vst.msk [vmem:[#allocation3 + $0xc0] sm:$0xff] %vm379, %v2093
    %2158 = vst.msk [vmem:[#allocation3 + $0xc8] sm:$0xff] %vm379, %v2094
    %2159 = vst.msk [vmem:[#allocation3 + $0xd0] sm:$0xff] %vm379, %v2095
    %2160 = vst.msk [vmem:[#allocation3 + $0xd8] sm:$0xff] %vm379, %v2096
    %2161 = vst.msk [vmem:[#allocation3 + $0xe0] sm:$0xff] %vm379, %v2097
    %2162 = vst.msk [vmem:[#allocation3 + $0xe8] sm:$0xff] %vm379, %v2098
    %2163 = vst.msk [vmem:[#allocation3 + $0xf0] sm:$0xff] %vm379, %v2099
    %2164 = vst.msk [vmem:[#allocation3 + $0xf8] sm:$0xff] %vm379, %v2100
    %2165 = vst.msk [vmem:[#allocation3 + $0x100] sm:$0xff] %vm379, %v2101
    %2166 = vst.msk [vmem:[#allocation3 + $0x108] sm:$0xff] %vm379, %v2102
    %2167 = vst.msk [vmem:[#allocation3 + $0x110] sm:$0xff] %vm379, %v2103
    %2168 = vst.msk [vmem:[#allocation3 + $0x118] sm:$0xff] %vm379, %v2104
    %2169 = vst.msk [vmem:[#allocation3 + $0x120] sm:$0xff] %vm379, %v2105
    %2170 = vst.msk [vmem:[#allocation3 + $0x128] sm:$0xff] %vm379, %v2106
    %2171 = vst.msk [vmem:[#allocation3 + $0x130] sm:$0xff] %vm379, %v2107
    %2172 = vst.msk [vmem:[#allocation3 + $0x138] sm:$0xff] %vm379, %v2108
    %2173 = vst.msk [vmem:[#allocation3 + $0x140] sm:$0xff] %vm379, %v2109
    %2174 = vst.msk [vmem:[#allocation3 + $0x148] sm:$0xff] %vm379, %v2110
    %2175 = vst.msk [vmem:[#allocation3 + $0x150] sm:$0xff] %vm379, %v2111
    %2176 = vst.msk [vmem:[#allocation3 + $0x158] sm:$0xff] %vm379, %v2112
    %2177 = vst.msk [vmem:[#allocation3 + $0x160] sm:$0xff] %vm379, %v2113
    %2178 = vst.msk [vmem:[#allocation3 + $0x168] sm:$0xff] %vm379, %v2114
    %2179 = vst.msk [vmem:[#allocation3 + $0x170] sm:$0xff] %vm379, %v2115
    %2180 = vst.msk [vmem:[#allocation3 + $0x178] sm:$0xff] %vm379, %v2116
    %2181 = vst.msk [vmem:[#allocation3 + $0x180] sm:$0xff] %vm379, %v2117
    %2182 = vst.msk [vmem:[#allocation3 + $0x188] sm:$0xff] %vm379, %v2118
    %2183 = vst.msk [vmem:[#allocation3 + $0x190] sm:$0xff] %vm379, %v2119
    %2184 = vst.msk [vmem:[#allocation3 + $0x198] sm:$0xff] %vm379, %v2120
    %2185 = vst.msk [vmem:[#allocation3 + $0x1a0] sm:$0xff] %vm379, %v2121
    %2186 = vst.msk [vmem:[#allocation3 + $0x1a8] sm:$0xff] %vm379, %v2122
    %2187 = vst.msk [vmem:[#allocation3 + $0x1b0] sm:$0xff] %vm379, %v2123
    %2188 = vst.msk [vmem:[#allocation3 + $0x1b8] sm:$0xff] %vm379, %v2124
    %2189 = vst.msk [vmem:[#allocation3 + $0x1c0] sm:$0xff] %vm379, %v2125
    %2190 = vst.msk [vmem:[#allocation3 + $0x1c8] sm:$0xff] %vm379, %v2126
    %2191 = vst.msk [vmem:[#allocation3 + $0x1d0] sm:$0xff] %vm379, %v2127
    %2192 = vst.msk [vmem:[#allocation3 + $0x1d8] sm:$0xff] %vm379, %v2128
    %2193 = vst.msk [vmem:[#allocation3 + $0x1e0] sm:$0xff] %vm379, %v2129
    %2194 = vst.msk [vmem:[#allocation3 + $0x1e8] sm:$0xff] %vm379, %v2130
    %2195 = vst.msk [vmem:[#allocation3 + $0x1f0] sm:$0xff] %vm379, %v2131
    %2196 = vst.msk [vmem:[#allocation3 + $0x1f8] sm:$0xff] %vm379, %v2132
    %v2197 = vld [vmem:[#allocation2] sm:$0xff]
    %v2198 = vld [vmem:[#allocation2 + $0x8] sm:$0xff]
    %v2199 = vld [vmem:[#allocation2 + $0x10] sm:$0xff]
    %v2200 = vld [vmem:[#allocation2 + $0x18] sm:$0xff]
    %v2201 = vmul.f32 %v2197, 0.0
    %v2202 = vmul.f32 %v2198, 0.0
    %v2203 = vmul.f32 %v2199, 0.0
    %v2204 = vmul.f32 %v2200, 0.0
    %v2205 = vld [vmem:[#allocation3] sm:$0xff]
    %v2206 = vld [vmem:[#allocation3 + $0x8] sm:$0xff]
    %v2207 = vld [vmem:[#allocation3 + $0x10] sm:$0xff]
    %v2208 = vld [vmem:[#allocation3 + $0x18] sm:$0xff]
    %v2209 = vadd.f32 %v2201, %v2205
    %v2210 = vadd.f32 %v2202, %v2206
    %v2211 = vadd.f32 %v2203, %v2207
    %v2212 = vadd.f32 %v2204, %v2208
    %2213 = vst.msk [vmem:[#allocation4] sm:$0xff] %vm379, %v2209
    %2214 = vst.msk [vmem:[#allocation4 + $0x8] sm:$0xff] %vm379, %v2210
    %2215 = vst.msk [vmem:[#allocation4 + $0x10] sm:$0xff] %vm379, %v2211
    %2216 = vst.msk [vmem:[#allocation4 + $0x18] sm:$0xff] %vm379, %v2212
    %s2217 = scalar_lea.vmem [#allocation2], 32
    %v2218 = vld [vmem:[%s2217] sm:$0xff]
    %v2219 = vld [vmem:[%s2217 + $0x8] sm:$0xff]
    %v2220 = vld [vmem:[%s2217 + $0x10] sm:$0xff]
    %v2221 = vld [vmem:[%s2217 + $0x18] sm:$0xff]
    %v2222 = vmul.f32 %v2218, %v2209
    %v2223 = vmul.f32 %v2219, %v2210
    %v2224 = vmul.f32 %v2220, %v2211
    %v2225 = vmul.f32 %v2221, %v2212
    %s2226 = scalar_lea.vmem [#allocation3], 32
    %v2227 = vld [vmem:[%s2226] sm:$0xff]
    %v2228 = vld [vmem:[%s2226 + $0x8] sm:$0xff]
    %v2229 = vld [vmem:[%s2226 + $0x10] sm:$0xff]
    %v2230 = vld [vmem:[%s2226 + $0x18] sm:$0xff]
    %v2231 = vadd.f32 %v2222, %v2227
    %v2232 = vadd.f32 %v2223, %v2228
    %v2233 = vadd.f32 %v2224, %v2229
    %v2234 = vadd.f32 %v2225, %v2230
    %s2235 = scalar_lea.vmem [#allocation4], 32
    %2236 = vst.msk [vmem:[%s2235] sm:$0xff] %vm379, %v2231
    %2237 = vst.msk [vmem:[%s2235 + $0x8] sm:$0xff] %vm379, %v2232
    %2238 = vst.msk [vmem:[%s2235 + $0x10] sm:$0xff] %vm379, %v2233
    %2239 = vst.msk [vmem:[%s2235 + $0x18] sm:$0xff] %vm379, %v2234
    %s2240 = scalar_lea.vmem [#allocation2], 64
    %v2241 = vld [vmem:[%s2240] sm:$0xff]
    %v2242 = vld [vmem:[%s2240 + $0x8] sm:$0xff]
    %v2243 = vld [vmem:[%s2240 + $0x10] sm:$0xff]
    %v2244 = vld [vmem:[%s2240 + $0x18] sm:$0xff]
    %v2245 = vmul.f32 %v2241, %v2231
    %v2246 = vmul.f32 %v2242, %v2232
    %v2247 = vmul.f32 %v2243, %v2233
    %v2248 = vmul.f32 %v2244, %v2234
    %s2249 = scalar_lea.vmem [#allocation3], 64
    %v2250 = vld [vmem:[%s2249] sm:$0xff]
    %v2251 = vld [vmem:[%s2249 + $0x8] sm:$0xff]
    %v2252 = vld [vmem:[%s2249 + $0x10] sm:$0xff]
    %v2253 = vld [vmem:[%s2249 + $0x18] sm:$0xff]
    %v2254 = vadd.f32 %v2245, %v2250
    %v2255 = vadd.f32 %v2246, %v2251
    %v2256 = vadd.f32 %v2247, %v2252
    %v2257 = vadd.f32 %v2248, %v2253
    %s2258 = scalar_lea.vmem [#allocation4], 64
    %2259 = vst.msk [vmem:[%s2258] sm:$0xff] %vm379, %v2254
    %2260 = vst.msk [vmem:[%s2258 + $0x8] sm:$0xff] %vm379, %v2255
    %2261 = vst.msk [vmem:[%s2258 + $0x10] sm:$0xff] %vm379, %v2256
    %2262 = vst.msk [vmem:[%s2258 + $0x18] sm:$0xff] %vm379, %v2257
    %s2263 = scalar_lea.vmem [#allocation2], 96
    %v2264 = vld [vmem:[%s2263] sm:$0xff]
    %v2265 = vld [vmem:[%s2263 + $0x8] sm:$0xff]
    %v2266 = vld [vmem:[%s2263 + $0x10] sm:$0xff]
    %v2267 = vld [vmem:[%s2263 + $0x18] sm:$0xff]
    %v2268 = vmul.f32 %v2264, %v2254
    %v2269 = vmul.f32 %v2265, %v2255
    %v2270 = vmul.f32 %v2266, %v2256
    %v2271 = vmul.f32 %v2267, %v2257
    %s2272 = scalar_lea.vmem [#allocation3], 96
    %v2273 = vld [vmem:[%s2272] sm:$0xff]
    %v2274 = vld [vmem:[%s2272 + $0x8] sm:$0xff]
    %v2275 = vld [vmem:[%s2272 + $0x10] sm:$0xff]
    %v2276 = vld [vmem:[%s2272 + $0x18] sm:$0xff]
    %v2277 = vadd.f32 %v2268, %v2273
    %v2278 = vadd.f32 %v2269, %v2274
    %v2279 = vadd.f32 %v2270, %v2275
    %v2280 = vadd.f32 %v2271, %v2276
    %s2281 = scalar_lea.vmem [#allocation4], 96
    %2282 = vst.msk [vmem:[%s2281] sm:$0xff] %vm379, %v2277
    %2283 = vst.msk [vmem:[%s2281 + $0x8] sm:$0xff] %vm379, %v2278
    %2284 = vst.msk [vmem:[%s2281 + $0x10] sm:$0xff] %vm379, %v2279
    %2285 = vst.msk [vmem:[%s2281 + $0x18] sm:$0xff] %vm379, %v2280
    %s2286 = scalar_lea.vmem [#allocation2], 128
    %v2287 = vld [vmem:[%s2286] sm:$0xff]
    %v2288 = vld [vmem:[%s2286 + $0x8] sm:$0xff]
    %v2289 = vld [vmem:[%s2286 + $0x10] sm:$0xff]
    %v2290 = vld [vmem:[%s2286 + $0x18] sm:$0xff]
    %v2291 = vmul.f32 %v2287, %v2277
    %v2292 = vmul.f32 %v2288, %v2278
    %v2293 = vmul.f32 %v2289, %v2279
    %v2294 = vmul.f32 %v2290, %v2280
    %s2295 = scalar_lea.vmem [#allocation3], 128
    %v2296 = vld [vmem:[%s2295] sm:$0xff]
    %v2297 = vld [vmem:[%s2295 + $0x8] sm:$0xff]
    %v2298 = vld [vmem:[%s2295 + $0x10] sm:$0xff]
    %v2299 = vld [vmem:[%s2295 + $0x18] sm:$0xff]
    %v2300 = vadd.f32 %v2291, %v2296
    %v2301 = vadd.f32 %v2292, %v2297
    %v2302 = vadd.f32 %v2293, %v2298
    %v2303 = vadd.f32 %v2294, %v2299
    %s2304 = scalar_lea.vmem [#allocation4], 128
    %2305 = vst.msk [vmem:[%s2304] sm:$0xff] %vm379, %v2300
    %2306 = vst.msk [vmem:[%s2304 + $0x8] sm:$0xff] %vm379, %v2301
    %2307 = vst.msk [vmem:[%s2304 + $0x10] sm:$0xff] %vm379, %v2302
    %2308 = vst.msk [vmem:[%s2304 + $0x18] sm:$0xff] %vm379, %v2303
    %s2309 = scalar_lea.vmem [#allocation2], 160
    %v2310 = vld [vmem:[%s2309] sm:$0xff]
    %v2311 = vld [vmem:[%s2309 + $0x8] sm:$0xff]
    %v2312 = vld [vmem:[%s2309 + $0x10] sm:$0xff]
    %v2313 = vld [vmem:[%s2309 + $0x18] sm:$0xff]
    %v2314 = vmul.f32 %v2310, %v2300
    %v2315 = vmul.f32 %v2311, %v2301
    %v2316 = vmul.f32 %v2312, %v2302
    %v2317 = vmul.f32 %v2313, %v2303
    %s2318 = scalar_lea.vmem [#allocation3], 160
    %v2319 = vld [vmem:[%s2318] sm:$0xff]
    %v2320 = vld [vmem:[%s2318 + $0x8] sm:$0xff]
    %v2321 = vld [vmem:[%s2318 + $0x10] sm:$0xff]
    %v2322 = vld [vmem:[%s2318 + $0x18] sm:$0xff]
    %v2323 = vadd.f32 %v2314, %v2319
    %v2324 = vadd.f32 %v2315, %v2320
    %v2325 = vadd.f32 %v2316, %v2321
    %v2326 = vadd.f32 %v2317, %v2322
    %s2327 = scalar_lea.vmem [#allocation4], 160
    %2328 = vst.msk [vmem:[%s2327] sm:$0xff] %vm379, %v2323
    %2329 = vst.msk [vmem:[%s2327 + $0x8] sm:$0xff] %vm379, %v2324
    %2330 = vst.msk [vmem:[%s2327 + $0x10] sm:$0xff] %vm379, %v2325
    %2331 = vst.msk [vmem:[%s2327 + $0x18] sm:$0xff] %vm379, %v2326
    %s2332 = scalar_lea.vmem [#allocation2], 192
    %v2333 = vld [vmem:[%s2332] sm:$0xff]
    %v2334 = vld [vmem:[%s2332 + $0x8] sm:$0xff]
    %v2335 = vld [vmem:[%s2332 + $0x10] sm:$0xff]
    %v2336 = vld [vmem:[%s2332 + $0x18] sm:$0xff]
    %v2337 = vmul.f32 %v2333, %v2323
    %v2338 = vmul.f32 %v2334, %v2324
    %v2339 = vmul.f32 %v2335, %v2325
    %v2340 = vmul.f32 %v2336, %v2326
    %s2341 = scalar_lea.vmem [#allocation3], 192
    %v2342 = vld [vmem:[%s2341] sm:$0xff]
    %v2343 = vld [vmem:[%s2341 + $0x8] sm:$0xff]
    %v2344 = vld [vmem:[%s2341 + $0x10] sm:$0xff]
    %v2345 = vld [vmem:[%s2341 + $0x18] sm:$0xff]
    %v2346 = vadd.f32 %v2337, %v2342
    %v2347 = vadd.f32 %v2338, %v2343
    %v2348 = vadd.f32 %v2339, %v2344
    %v2349 = vadd.f32 %v2340, %v2345
    %s2350 = scalar_lea.vmem [#allocation4], 192
    %2351 = vst.msk [vmem:[%s2350] sm:$0xff] %vm379, %v2346
    %2352 = vst.msk [vmem:[%s2350 + $0x8] sm:$0xff] %vm379, %v2347
    %2353 = vst.msk [vmem:[%s2350 + $0x10] sm:$0xff] %vm379, %v2348
    %2354 = vst.msk [vmem:[%s2350 + $0x18] sm:$0xff] %vm379, %v2349
    %s2355 = scalar_lea.vmem [#allocation2], 224
    %v2356 = vld [vmem:[%s2355] sm:$0xff]
    %v2357 = vld [vmem:[%s2355 + $0x8] sm:$0xff]
    %v2358 = vld [vmem:[%s2355 + $0x10] sm:$0xff]
    %v2359 = vld [vmem:[%s2355 + $0x18] sm:$0xff]
    %v2360 = vmul.f32 %v2356, %v2346
    %v2361 = vmul.f32 %v2357, %v2347
    %v2362 = vmul.f32 %v2358, %v2348
    %v2363 = vmul.f32 %v2359, %v2349
    %s2364 = scalar_lea.vmem [#allocation3], 224
    %v2365 = vld [vmem:[%s2364] sm:$0xff]
    %v2366 = vld [vmem:[%s2364 + $0x8] sm:$0xff]
    %v2367 = vld [vmem:[%s2364 + $0x10] sm:$0xff]
    %v2368 = vld [vmem:[%s2364 + $0x18] sm:$0xff]
    %v2369 = vadd.f32 %v2360, %v2365
    %v2370 = vadd.f32 %v2361, %v2366
    %v2371 = vadd.f32 %v2362, %v2367
    %v2372 = vadd.f32 %v2363, %v2368
    %s2373 = scalar_lea.vmem [#allocation4], 224
    %2374 = vst.msk [vmem:[%s2373] sm:$0xff] %vm379, %v2369
    %2375 = vst.msk [vmem:[%s2373 + $0x8] sm:$0xff] %vm379, %v2370
    %2376 = vst.msk [vmem:[%s2373 + $0x10] sm:$0xff] %vm379, %v2371
    %2377 = vst.msk [vmem:[%s2373 + $0x18] sm:$0xff] %vm379, %v2372
    %s2378 = scalar_lea.vmem [#allocation2], 256
    %v2379 = vld [vmem:[%s2378] sm:$0xff]
    %v2380 = vld [vmem:[%s2378 + $0x8] sm:$0xff]
    %v2381 = vld [vmem:[%s2378 + $0x10] sm:$0xff]
    %v2382 = vld [vmem:[%s2378 + $0x18] sm:$0xff]
    %v2383 = vmul.f32 %v2379, %v2369
    %v2384 = vmul.f32 %v2380, %v2370
    %v2385 = vmul.f32 %v2381, %v2371
    %v2386 = vmul.f32 %v2382, %v2372
    %s2387 = scalar_lea.vmem [#allocation3], 256
    %v2388 = vld [vmem:[%s2387] sm:$0xff]
    %v2389 = vld [vmem:[%s2387 + $0x8] sm:$0xff]
    %v2390 = vld [vmem:[%s2387 + $0x10] sm:$0xff]
    %v2391 = vld [vmem:[%s2387 + $0x18] sm:$0xff]
    %v2392 = vadd.f32 %v2383, %v2388
    %v2393 = vadd.f32 %v2384, %v2389
    %v2394 = vadd.f32 %v2385, %v2390
    %v2395 = vadd.f32 %v2386, %v2391
    %s2396 = scalar_lea.vmem [#allocation4], 256
    %2397 = vst.msk [vmem:[%s2396] sm:$0xff] %vm379, %v2392
    %2398 = vst.msk [vmem:[%s2396 + $0x8] sm:$0xff] %vm379, %v2393
    %2399 = vst.msk [vmem:[%s2396 + $0x10] sm:$0xff] %vm379, %v2394
    %2400 = vst.msk [vmem:[%s2396 + $0x18] sm:$0xff] %vm379, %v2395
    %s2401 = scalar_lea.vmem [#allocation2], 288
    %v2402 = vld [vmem:[%s2401] sm:$0xff]
    %v2403 = vld [vmem:[%s2401 + $0x8] sm:$0xff]
    %v2404 = vld [vmem:[%s2401 + $0x10] sm:$0xff]
    %v2405 = vld [vmem:[%s2401 + $0x18] sm:$0xff]
    %v2406 = vmul.f32 %v2402, %v2392
    %v2407 = vmul.f32 %v2403, %v2393
    %v2408 = vmul.f32 %v2404, %v2394
    %v2409 = vmul.f32 %v2405, %v2395
    %s2410 = scalar_lea.vmem [#allocation3], 288
    %v2411 = vld [vmem:[%s2410] sm:$0xff]
    %v2412 = vld [vmem:[%s2410 + $0x8] sm:$0xff]
    %v2413 = vld [vmem:[%s2410 + $0x10] sm:$0xff]
    %v2414 = vld [vmem:[%s2410 + $0x18] sm:$0xff]
    %v2415 = vadd.f32 %v2406, %v2411
    %v2416 = vadd.f32 %v2407, %v2412
    %v2417 = vadd.f32 %v2408, %v2413
    %v2418 = vadd.f32 %v2409, %v2414
    %s2419 = scalar_lea.vmem [#allocation4], 288
    %2420 = vst.msk [vmem:[%s2419] sm:$0xff] %vm379, %v2415
    %2421 = vst.msk [vmem:[%s2419 + $0x8] sm:$0xff] %vm379, %v2416
    %2422 = vst.msk [vmem:[%s2419 + $0x10] sm:$0xff] %vm379, %v2417
    %2423 = vst.msk [vmem:[%s2419 + $0x18] sm:$0xff] %vm379, %v2418
    %s2424 = scalar_lea.vmem [#allocation2], 320
    %v2425 = vld [vmem:[%s2424] sm:$0xff]
    %v2426 = vld [vmem:[%s2424 + $0x8] sm:$0xff]
    %v2427 = vld [vmem:[%s2424 + $0x10] sm:$0xff]
    %v2428 = vld [vmem:[%s2424 + $0x18] sm:$0xff]
    %v2429 = vmul.f32 %v2425, %v2415
    %v2430 = vmul.f32 %v2426, %v2416
    %v2431 = vmul.f32 %v2427, %v2417
    %v2432 = vmul.f32 %v2428, %v2418
    %s2433 = scalar_lea.vmem [#allocation3], 320
    %v2434 = vld [vmem:[%s2433] sm:$0xff]
    %v2435 = vld [vmem:[%s2433 + $0x8] sm:$0xff]
    %v2436 = vld [vmem:[%s2433 + $0x10] sm:$0xff]
    %v2437 = vld [vmem:[%s2433 + $0x18] sm:$0xff]
    %v2438 = vadd.f32 %v2429, %v2434
    %v2439 = vadd.f32 %v2430, %v2435
    %v2440 = vadd.f32 %v2431, %v2436
    %v2441 = vadd.f32 %v2432, %v2437
    %s2442 = scalar_lea.vmem [#allocation4], 320
    %2443 = vst.msk [vmem:[%s2442] sm:$0xff] %vm379, %v2438
    %2444 = vst.msk [vmem:[%s2442 + $0x8] sm:$0xff] %vm379, %v2439
    %2445 = vst.msk [vmem:[%s2442 + $0x10] sm:$0xff] %vm379, %v2440
    %2446 = vst.msk [vmem:[%s2442 + $0x18] sm:$0xff] %vm379, %v2441
    %s2447 = scalar_lea.vmem [#allocation2], 352
    %v2448 = vld [vmem:[%s2447] sm:$0xff]
    %v2449 = vld [vmem:[%s2447 + $0x8] sm:$0xff]
    %v2450 = vld [vmem:[%s2447 + $0x10] sm:$0xff]
    %v2451 = vld [vmem:[%s2447 + $0x18] sm:$0xff]
    %v2452 = vmul.f32 %v2448, %v2438
    %v2453 = vmul.f32 %v2449, %v2439
    %v2454 = vmul.f32 %v2450, %v2440
    %v2455 = vmul.f32 %v2451, %v2441
    %s2456 = scalar_lea.vmem [#allocation3], 352
    %v2457 = vld [vmem:[%s2456] sm:$0xff]
    %v2458 = vld [vmem:[%s2456 + $0x8] sm:$0xff]
    %v2459 = vld [vmem:[%s2456 + $0x10] sm:$0xff]
    %v2460 = vld [vmem:[%s2456 + $0x18] sm:$0xff]
    %v2461 = vadd.f32 %v2452, %v2457
    %v2462 = vadd.f32 %v2453, %v2458
    %v2463 = vadd.f32 %v2454, %v2459
    %v2464 = vadd.f32 %v2455, %v2460
    %s2465 = scalar_lea.vmem [#allocation4], 352
    %2466 = vst.msk [vmem:[%s2465] sm:$0xff] %vm379, %v2461
    %2467 = vst.msk [vmem:[%s2465 + $0x8] sm:$0xff] %vm379, %v2462
    %2468 = vst.msk [vmem:[%s2465 + $0x10] sm:$0xff] %vm379, %v2463
    %2469 = vst.msk [vmem:[%s2465 + $0x18] sm:$0xff] %vm379, %v2464
    %s2470 = scalar_lea.vmem [#allocation2], 384
    %v2471 = vld [vmem:[%s2470] sm:$0xff]
    %v2472 = vld [vmem:[%s2470 + $0x8] sm:$0xff]
    %v2473 = vld [vmem:[%s2470 + $0x10] sm:$0xff]
    %v2474 = vld [vmem:[%s2470 + $0x18] sm:$0xff]
    %v2475 = vmul.f32 %v2471, %v2461
    %v2476 = vmul.f32 %v2472, %v2462
    %v2477 = vmul.f32 %v2473, %v2463
    %v2478 = vmul.f32 %v2474, %v2464
    %s2479 = scalar_lea.vmem [#allocation3], 384
    %v2480 = vld [vmem:[%s2479] sm:$0xff]
    %v2481 = vld [vmem:[%s2479 + $0x8] sm:$0xff]
    %v2482 = vld [vmem:[%s2479 + $0x10] sm:$0xff]
    %v2483 = vld [vmem:[%s2479 + $0x18] sm:$0xff]
    %v2484 = vadd.f32 %v2475, %v2480
    %v2485 = vadd.f32 %v2476, %v2481
    %v2486 = vadd.f32 %v2477, %v2482
    %v2487 = vadd.f32 %v2478, %v2483
    %s2488 = scalar_lea.vmem [#allocation4], 384
    %2489 = vst.msk [vmem:[%s2488] sm:$0xff] %vm379, %v2484
    %2490 = vst.msk [vmem:[%s2488 + $0x8] sm:$0xff] %vm379, %v2485
    %2491 = vst.msk [vmem:[%s2488 + $0x10] sm:$0xff] %vm379, %v2486
    %2492 = vst.msk [vmem:[%s2488 + $0x18] sm:$0xff] %vm379, %v2487
    %s2493 = scalar_lea.vmem [#allocation2], 416
    %v2494 = vld [vmem:[%s2493] sm:$0xff]
    %v2495 = vld [vmem:[%s2493 + $0x8] sm:$0xff]
    %v2496 = vld [vmem:[%s2493 + $0x10] sm:$0xff]
    %v2497 = vld [vmem:[%s2493 + $0x18] sm:$0xff]
    %v2498 = vmul.f32 %v2494, %v2484
    %v2499 = vmul.f32 %v2495, %v2485
    %v2500 = vmul.f32 %v2496, %v2486
    %v2501 = vmul.f32 %v2497, %v2487
    %s2502 = scalar_lea.vmem [#allocation3], 416
    %v2503 = vld [vmem:[%s2502] sm:$0xff]
    %v2504 = vld [vmem:[%s2502 + $0x8] sm:$0xff]
    %v2505 = vld [vmem:[%s2502 + $0x10] sm:$0xff]
    %v2506 = vld [vmem:[%s2502 + $0x18] sm:$0xff]
    %v2507 = vadd.f32 %v2498, %v2503
    %v2508 = vadd.f32 %v2499, %v2504
    %v2509 = vadd.f32 %v2500, %v2505
    %v2510 = vadd.f32 %v2501, %v2506
    %s2511 = scalar_lea.vmem [#allocation4], 416
    %2512 = vst.msk [vmem:[%s2511] sm:$0xff] %vm379, %v2507
    %2513 = vst.msk [vmem:[%s2511 + $0x8] sm:$0xff] %vm379, %v2508
    %2514 = vst.msk [vmem:[%s2511 + $0x10] sm:$0xff] %vm379, %v2509
    %2515 = vst.msk [vmem:[%s2511 + $0x18] sm:$0xff] %vm379, %v2510
    %s2516 = scalar_lea.vmem [#allocation2], 448
    %v2517 = vld [vmem:[%s2516] sm:$0xff]
    %v2518 = vld [vmem:[%s2516 + $0x8] sm:$0xff]
    %v2519 = vld [vmem:[%s2516 + $0x10] sm:$0xff]
    %v2520 = vld [vmem:[%s2516 + $0x18] sm:$0xff]
    %v2521 = vmul.f32 %v2517, %v2507
    %v2522 = vmul.f32 %v2518, %v2508
    %v2523 = vmul.f32 %v2519, %v2509
    %v2524 = vmul.f32 %v2520, %v2510
    %s2525 = scalar_lea.vmem [#allocation3], 448
    %v2526 = vld [vmem:[%s2525] sm:$0xff]
    %v2527 = vld [vmem:[%s2525 + $0x8] sm:$0xff]
    %v2528 = vld [vmem:[%s2525 + $0x10] sm:$0xff]
    %v2529 = vld [vmem:[%s2525 + $0x18] sm:$0xff]
    %v2530 = vadd.f32 %v2521, %v2526
    %v2531 = vadd.f32 %v2522, %v2527
    %v2532 = vadd.f32 %v2523, %v2528
    %v2533 = vadd.f32 %v2524, %v2529
    %s2534 = scalar_lea.vmem [#allocation4], 448
    %2535 = vst.msk [vmem:[%s2534] sm:$0xff] %vm379, %v2530
    %2536 = vst.msk [vmem:[%s2534 + $0x8] sm:$0xff] %vm379, %v2531
    %2537 = vst.msk [vmem:[%s2534 + $0x10] sm:$0xff] %vm379, %v2532
    %2538 = vst.msk [vmem:[%s2534 + $0x18] sm:$0xff] %vm379, %v2533
    %s2539 = scalar_lea.vmem [#allocation2], 480
    %v2540 = vld [vmem:[%s2539] sm:$0xff]
    %v2541 = vld [vmem:[%s2539 + $0x8] sm:$0xff]
    %v2542 = vld [vmem:[%s2539 + $0x10] sm:$0xff]
    %v2543 = vld [vmem:[%s2539 + $0x18] sm:$0xff]
    %v2544 = vmul.f32 %v2540, %v2530
    %v2545 = vmul.f32 %v2541, %v2531
    %v2546 = vmul.f32 %v2542, %v2532
    %v2547 = vmul.f32 %v2543, %v2533
    %s2548 = scalar_lea.vmem [#allocation3], 480
    %v2549 = vld [vmem:[%s2548] sm:$0xff]
    %v2550 = vld [vmem:[%s2548 + $0x8] sm:$0xff]
    %v2551 = vld [vmem:[%s2548 + $0x10] sm:$0xff]
    %v2552 = vld [vmem:[%s2548 + $0x18] sm:$0xff]
    %v2553 = vadd.f32 %v2544, %v2549
    %v2554 = vadd.f32 %v2545, %v2550
    %v2555 = vadd.f32 %v2546, %v2551
    %v2556 = vadd.f32 %v2547, %v2552
    %s2557 = scalar_lea.vmem [#allocation4], 480
    %2558 = vst.msk [vmem:[%s2557] sm:$0xff] %vm379, %v2553
    %2559 = vst.msk [vmem:[%s2557 + $0x8] sm:$0xff] %vm379, %v2554
    %2560 = vst.msk [vmem:[%s2557 + $0x10] sm:$0xff] %vm379, %v2555
    %2561 = vst.msk [vmem:[%s2557 + $0x18] sm:$0xff] %vm379, %v2556
    %v2562 = vld [vmem:[#allocation4] sm:$0xff]
    %v2563 = vld [vmem:[#allocation4 + $0x8] sm:$0xff]
    %v2564 = vld [vmem:[#allocation4 + $0x10] sm:$0xff]
    %v2565 = vld [vmem:[#allocation4 + $0x18] sm:$0xff]
    %v2566 = vld [vmem:[#allocation4 + $0x20] sm:$0xff]
    %v2567 = vld [vmem:[#allocation4 + $0x28] sm:$0xff]
    %v2568 = vld [vmem:[#allocation4 + $0x30] sm:$0xff]
    %v2569 = vld [vmem:[#allocation4 + $0x38] sm:$0xff]
    %v2570 = vld [vmem:[#allocation4 + $0x40] sm:$0xff]
    %v2571 = vld [vmem:[#allocation4 + $0x48] sm:$0xff]
    %v2572 = vld [vmem:[#allocation4 + $0x50] sm:$0xff]
    %v2573 = vld [vmem:[#allocation4 + $0x58] sm:$0xff]
    %v2574 = vld [vmem:[#allocation4 + $0x60] sm:$0xff]
    %v2575 = vld [vmem:[#allocation4 + $0x68] sm:$0xff]
    %v2576 = vld [vmem:[#allocation4 + $0x70] sm:$0xff]
    %v2577 = vld [vmem:[#allocation4 + $0x78] sm:$0xff]
    %v2578 = vld [vmem:[#allocation4 + $0x80] sm:$0xff]
    %v2579 = vld [vmem:[#allocation4 + $0x88] sm:$0xff]
    %v2580 = vld [vmem:[#allocation4 + $0x90] sm:$0xff]
    %v2581 = vld [vmem:[#allocation4 + $0x98] sm:$0xff]
    %v2582 = vld [vmem:[#allocation4 + $0xa0] sm:$0xff]
    %v2583 = vld [vmem:[#allocation4 + $0xa8] sm:$0xff]
    %v2584 = vld [vmem:[#allocation4 + $0xb0] sm:$0xff]
    %v2585 = vld [vmem:[#allocation4 + $0xb8] sm:$0xff]
    %v2586 = vld [vmem:[#allocation4 + $0xc0] sm:$0xff]
    %v2587 = vld [vmem:[#allocation4 + $0xc8] sm:$0xff]
    %v2588 = vld [vmem:[#allocation4 + $0xd0] sm:$0xff]
    %v2589 = vld [vmem:[#allocation4 + $0xd8] sm:$0xff]
    %v2590 = vld [vmem:[#allocation4 + $0xe0] sm:$0xff]
    %v2591 = vld [vmem:[#allocation4 + $0xe8] sm:$0xff]
    %v2592 = vld [vmem:[#allocation4 + $0xf0] sm:$0xff]
    %v2593 = vld [vmem:[#allocation4 + $0xf8] sm:$0xff]
    %v2594 = vld [vmem:[#allocation4 + $0x100] sm:$0xff]
    %v2595 = vld [vmem:[#allocation4 + $0x108] sm:$0xff]
    %v2596 = vld [vmem:[#allocation4 + $0x110] sm:$0xff]
    %v2597 = vld [vmem:[#allocation4 + $0x118] sm:$0xff]
    %v2598 = vld [vmem:[#allocation4 + $0x120] sm:$0xff]
    %v2599 = vld [vmem:[#allocation4 + $0x128] sm:$0xff]
    %v2600 = vld [vmem:[#allocation4 + $0x130] sm:$0xff]
    %v2601 = vld [vmem:[#allocation4 + $0x138] sm:$0xff]
    %v2602 = vld [vmem:[#allocation4 + $0x140] sm:$0xff]
    %v2603 = vld [vmem:[#allocation4 + $0x148] sm:$0xff]
    %v2604 = vld [vmem:[#allocation4 + $0x150] sm:$0xff]
    %v2605 = vld [vmem:[#allocation4 + $0x158] sm:$0xff]
    %v2606 = vld [vmem:[#allocation4 + $0x160] sm:$0xff]
    %v2607 = vld [vmem:[#allocation4 + $0x168] sm:$0xff]
    %v2608 = vld [vmem:[#allocation4 + $0x170] sm:$0xff]
    %v2609 = vld [vmem:[#allocation4 + $0x178] sm:$0xff]
    %v2610 = vld [vmem:[#allocation4 + $0x180] sm:$0xff]
    %v2611 = vld [vmem:[#allocation4 + $0x188] sm:$0xff]
    %v2612 = vld [vmem:[#allocation4 + $0x190] sm:$0xff]
    %v2613 = vld [vmem:[#allocation4 + $0x198] sm:$0xff]
    %v2614 = vld [vmem:[#allocation4 + $0x1a0] sm:$0xff]
    %v2615 = vld [vmem:[#allocation4 + $0x1a8] sm:$0xff]
    %v2616 = vld [vmem:[#allocation4 + $0x1b0] sm:$0xff]
    %v2617 = vld [vmem:[#allocation4 + $0x1b8] sm:$0xff]
    %v2618 = vld [vmem:[#allocation4 + $0x1c0] sm:$0xff]
    %v2619 = vld [vmem:[#allocation4 + $0x1c8] sm:$0xff]
    %v2620 = vld [vmem:[#allocation4 + $0x1d0] sm:$0xff]
    %v2621 = vld [vmem:[#allocation4 + $0x1d8] sm:$0xff]
    %v2622 = vld [vmem:[#allocation4 + $0x1e0] sm:$0xff]
    %v2623 = vld [vmem:[#allocation4 + $0x1e8] sm:$0xff]
    %v2624 = vld [vmem:[#allocation4 + $0x1f0] sm:$0xff]
    %v2625 = vld [vmem:[#allocation4 + $0x1f8] sm:$0xff]
    %v2626 = vlaneseq
    %v2627 = vshrl.u32 %v2626, 7
    %v2628 = vsub.s32 0, %v2627
    %v2629 = vrot.slane %v717, %v2628
    %2631 = vbcast.lane.b32.xlu0 %v2629, 256
    %v2632 = vpop.permute.xlu0 %2631
    %s2634 = sor.u32 256, 8
    %2635 = vbcast.lane.b32.xlu0 %v2629, %s2634
    %v2636 = vpop.permute.xlu0 %2635
    %v2637 = vlaneseq
    %v2638 = vshrl.u32 %v2637, 7
    %v2639 = vsub.s32 1, %v2638
    %v2640 = vrot.slane %v717, %v2639
    %2642 = vbcast.lane.b32.xlu0 %v2640, 256
    %v2643 = vpop.permute.xlu0 %2642
    %s2645 = sor.u32 256, 8
    %2646 = vbcast.lane.b32.xlu0 %v2640, %s2645
    %v2647 = vpop.permute.xlu0 %2646
    %v2648 = vlaneseq
    %v2649 = vshrl.u32 %v2648, 7
    %v2650 = vsub.s32 2, %v2649
    %v2651 = vrot.slane %v717, %v2650
    %2653 = vbcast.lane.b32.xlu0 %v2651, 256
    %v2654 = vpop.permute.xlu0 %2653
    %s2656 = sor.u32 256, 8
    %2657 = vbcast.lane.b32.xlu0 %v2651, %s2656
    %v2658 = vpop.permute.xlu0 %2657
    %v2659 = vlaneseq
    %v2660 = vshrl.u32 %v2659, 7
    %v2661 = vsub.s32 3, %v2660
    %v2662 = vrot.slane %v717, %v2661
    %2664 = vbcast.lane.b32.xlu0 %v2662, 256
    %v2665 = vpop.permute.xlu0 %2664
    %s2667 = sor.u32 256, 8
    %2668 = vbcast.lane.b32.xlu0 %v2662, %s2667
    %v2669 = vpop.permute.xlu0 %2668
    %v2670 = vlaneseq
    %v2671 = vshrl.u32 %v2670, 7
    %v2672 = vsub.s32 4, %v2671
    %v2673 = vrot.slane %v717, %v2672
    %2675 = vbcast.lane.b32.xlu0 %v2673, 256
    %v2676 = vpop.permute.xlu0 %2675
    %s2678 = sor.u32 256, 8
    %2679 = vbcast.lane.b32.xlu0 %v2673, %s2678
    %v2680 = vpop.permute.xlu0 %2679
    %v2681 = vlaneseq
    %v2682 = vshrl.u32 %v2681, 7
    %v2683 = vsub.s32 5, %v2682
    %v2684 = vrot.slane %v717, %v2683
    %2686 = vbcast.lane.b32.xlu0 %v2684, 256
    %v2687 = vpop.permute.xlu0 %2686
    %s2689 = sor.u32 256, 8
    %2690 = vbcast.lane.b32.xlu0 %v2684, %s2689
    %v2691 = vpop.permute.xlu0 %2690
    %v2692 = vlaneseq
    %v2693 = vshrl.u32 %v2692, 7
    %v2694 = vsub.s32 6, %v2693
    %v2695 = vrot.slane %v717, %v2694
    %2697 = vbcast.lane.b32.xlu0 %v2695, 256
    %v2698 = vpop.permute.xlu0 %2697
    %s2700 = sor.u32 256, 8
    %2701 = vbcast.lane.b32.xlu0 %v2695, %s2700
    %v2702 = vpop.permute.xlu0 %2701
    %v2703 = vlaneseq
    %v2704 = vshrl.u32 %v2703, 7
    %v2705 = vsub.s32 7, %v2704
    %v2706 = vrot.slane %v717, %v2705
    %2708 = vbcast.lane.b32.xlu0 %v2706, 256
    %v2709 = vpop.permute.xlu0 %2708
    %s2711 = sor.u32 256, 8
    %2712 = vbcast.lane.b32.xlu0 %v2706, %s2711
    %v2713 = vpop.permute.xlu0 %2712
    %v2714 = vlaneseq
    %v2715 = vshrl.u32 %v2714, 7
    %v2716 = vsub.s32 0, %v2715
    %v2717 = vrot.slane %v722, %v2716
    %2719 = vbcast.lane.b32.xlu0 %v2717, 256
    %v2720 = vpop.permute.xlu0 %2719
    %s2722 = sor.u32 256, 8
    %2723 = vbcast.lane.b32.xlu0 %v2717, %s2722
    %v2724 = vpop.permute.xlu0 %2723
    %v2725 = vlaneseq
    %v2726 = vshrl.u32 %v2725, 7
    %v2727 = vsub.s32 1, %v2726
    %v2728 = vrot.slane %v722, %v2727
    %2730 = vbcast.lane.b32.xlu0 %v2728, 256
    %v2731 = vpop.permute.xlu0 %2730
    %s2733 = sor.u32 256, 8
    %2734 = vbcast.lane.b32.xlu0 %v2728, %s2733
    %v2735 = vpop.permute.xlu0 %2734
    %v2736 = vlaneseq
    %v2737 = vshrl.u32 %v2736, 7
    %v2738 = vsub.s32 2, %v2737
    %v2739 = vrot.slane %v722, %v2738
    %2741 = vbcast.lane.b32.xlu0 %v2739, 256
    %v2742 = vpop.permute.xlu0 %2741
    %s2744 = sor.u32 256, 8
    %2745 = vbcast.lane.b32.xlu0 %v2739, %s2744
    %v2746 = vpop.permute.xlu0 %2745
    %v2747 = vlaneseq
    %v2748 = vshrl.u32 %v2747, 7
    %v2749 = vsub.s32 3, %v2748
    %v2750 = vrot.slane %v722, %v2749
    %2752 = vbcast.lane.b32.xlu0 %v2750, 256
    %v2753 = vpop.permute.xlu0 %2752
    %s2755 = sor.u32 256, 8
    %2756 = vbcast.lane.b32.xlu0 %v2750, %s2755
    %v2757 = vpop.permute.xlu0 %2756
    %v2758 = vlaneseq
    %v2759 = vshrl.u32 %v2758, 7
    %v2760 = vsub.s32 4, %v2759
    %v2761 = vrot.slane %v722, %v2760
    %2763 = vbcast.lane.b32.xlu0 %v2761, 256
    %v2764 = vpop.permute.xlu0 %2763
    %s2766 = sor.u32 256, 8
    %2767 = vbcast.lane.b32.xlu0 %v2761, %s2766
    %v2768 = vpop.permute.xlu0 %2767
    %v2769 = vlaneseq
    %v2770 = vshrl.u32 %v2769, 7
    %v2771 = vsub.s32 5, %v2770
    %v2772 = vrot.slane %v722, %v2771
    %2774 = vbcast.lane.b32.xlu0 %v2772, 256
    %v2775 = vpop.permute.xlu0 %2774
    %s2777 = sor.u32 256, 8
    %2778 = vbcast.lane.b32.xlu0 %v2772, %s2777
    %v2779 = vpop.permute.xlu0 %2778
    %v2780 = vlaneseq
    %v2781 = vshrl.u32 %v2780, 7
    %v2782 = vsub.s32 6, %v2781
    %v2783 = vrot.slane %v722, %v2782
    %2785 = vbcast.lane.b32.xlu0 %v2783, 256
    %v2786 = vpop.permute.xlu0 %2785
    %s2788 = sor.u32 256, 8
    %2789 = vbcast.lane.b32.xlu0 %v2783, %s2788
    %v2790 = vpop.permute.xlu0 %2789
    %v2791 = vlaneseq
    %v2792 = vshrl.u32 %v2791, 7
    %v2793 = vsub.s32 7, %v2792
    %v2794 = vrot.slane %v722, %v2793
    %2796 = vbcast.lane.b32.xlu0 %v2794, 256
    %v2797 = vpop.permute.xlu0 %2796
    %s2799 = sor.u32 256, 8
    %2800 = vbcast.lane.b32.xlu0 %v2794, %s2799
    %v2801 = vpop.permute.xlu0 %2800
    %v2802 = vlaneseq
    %v2803 = vshrl.u32 %v2802, 7
    %v2804 = vsub.s32 0, %v2803
    %v2805 = vrot.slane %v727, %v2804
    %2807 = vbcast.lane.b32.xlu0 %v2805, 256
    %v2808 = vpop.permute.xlu0 %2807
    %s2810 = sor.u32 256, 8
    %2811 = vbcast.lane.b32.xlu0 %v2805, %s2810
    %v2812 = vpop.permute.xlu0 %2811
    %v2813 = vlaneseq
    %v2814 = vshrl.u32 %v2813, 7
    %v2815 = vsub.s32 1, %v2814
    %v2816 = vrot.slane %v727, %v2815
    %2818 = vbcast.lane.b32.xlu0 %v2816, 256
    %v2819 = vpop.permute.xlu0 %2818
    %s2821 = sor.u32 256, 8
    %2822 = vbcast.lane.b32.xlu0 %v2816, %s2821
    %v2823 = vpop.permute.xlu0 %2822
    %v2824 = vlaneseq
    %v2825 = vshrl.u32 %v2824, 7
    %v2826 = vsub.s32 2, %v2825
    %v2827 = vrot.slane %v727, %v2826
    %2829 = vbcast.lane.b32.xlu0 %v2827, 256
    %v2830 = vpop.permute.xlu0 %2829
    %s2832 = sor.u32 256, 8
    %2833 = vbcast.lane.b32.xlu0 %v2827, %s2832
    %v2834 = vpop.permute.xlu0 %2833
    %v2835 = vlaneseq
    %v2836 = vshrl.u32 %v2835, 7
    %v2837 = vsub.s32 3, %v2836
    %v2838 = vrot.slane %v727, %v2837
    %2840 = vbcast.lane.b32.xlu0 %v2838, 256
    %v2841 = vpop.permute.xlu0 %2840
    %s2843 = sor.u32 256, 8
    %2844 = vbcast.lane.b32.xlu0 %v2838, %s2843
    %v2845 = vpop.permute.xlu0 %2844
    %v2846 = vlaneseq
    %v2847 = vshrl.u32 %v2846, 7
    %v2848 = vsub.s32 4, %v2847
    %v2849 = vrot.slane %v727, %v2848
    %2851 = vbcast.lane.b32.xlu0 %v2849, 256
    %v2852 = vpop.permute.xlu0 %2851
    %s2854 = sor.u32 256, 8
    %2855 = vbcast.lane.b32.xlu0 %v2849, %s2854
    %v2856 = vpop.permute.xlu0 %2855
    %v2857 = vlaneseq
    %v2858 = vshrl.u32 %v2857, 7
    %v2859 = vsub.s32 5, %v2858
    %v2860 = vrot.slane %v727, %v2859
    %2862 = vbcast.lane.b32.xlu0 %v2860, 256
    %v2863 = vpop.permute.xlu0 %2862
    %s2865 = sor.u32 256, 8
    %2866 = vbcast.lane.b32.xlu0 %v2860, %s2865
    %v2867 = vpop.permute.xlu0 %2866
    %v2868 = vlaneseq
    %v2869 = vshrl.u32 %v2868, 7
    %v2870 = vsub.s32 6, %v2869
    %v2871 = vrot.slane %v727, %v2870
    %2873 = vbcast.lane.b32.xlu0 %v2871, 256
    %v2874 = vpop.permute.xlu0 %2873
    %s2876 = sor.u32 256, 8
    %2877 = vbcast.lane.b32.xlu0 %v2871, %s2876
    %v2878 = vpop.permute.xlu0 %2877
    %v2879 = vlaneseq
    %v2880 = vshrl.u32 %v2879, 7
    %v2881 = vsub.s32 7, %v2880
    %v2882 = vrot.slane %v727, %v2881
    %2884 = vbcast.lane.b32.xlu0 %v2882, 256
    %v2885 = vpop.permute.xlu0 %2884
    %s2887 = sor.u32 256, 8
    %2888 = vbcast.lane.b32.xlu0 %v2882, %s2887
    %v2889 = vpop.permute.xlu0 %2888
    %v2890 = vlaneseq
    %v2891 = vshrl.u32 %v2890, 7
    %v2892 = vsub.s32 0, %v2891
    %v2893 = vrot.slane %v732, %v2892
    %2895 = vbcast.lane.b32.xlu0 %v2893, 256
    %v2896 = vpop.permute.xlu0 %2895
    %s2898 = sor.u32 256, 8
    %2899 = vbcast.lane.b32.xlu0 %v2893, %s2898
    %v2900 = vpop.permute.xlu0 %2899
    %v2901 = vlaneseq
    %v2902 = vshrl.u32 %v2901, 7
    %v2903 = vsub.s32 1, %v2902
    %v2904 = vrot.slane %v732, %v2903
    %2906 = vbcast.lane.b32.xlu0 %v2904, 256
    %v2907 = vpop.permute.xlu0 %2906
    %s2909 = sor.u32 256, 8
    %2910 = vbcast.lane.b32.xlu0 %v2904, %s2909
    %v2911 = vpop.permute.xlu0 %2910
    %v2912 = vlaneseq
    %v2913 = vshrl.u32 %v2912, 7
    %v2914 = vsub.s32 2, %v2913
    %v2915 = vrot.slane %v732, %v2914
    %2917 = vbcast.lane.b32.xlu0 %v2915, 256
    %v2918 = vpop.permute.xlu0 %2917
    %s2920 = sor.u32 256, 8
    %2921 = vbcast.lane.b32.xlu0 %v2915, %s2920
    %v2922 = vpop.permute.xlu0 %2921
    %v2923 = vlaneseq
    %v2924 = vshrl.u32 %v2923, 7
    %v2925 = vsub.s32 3, %v2924
    %v2926 = vrot.slane %v732, %v2925
    %2928 = vbcast.lane.b32.xlu0 %v2926, 256
    %v2929 = vpop.permute.xlu0 %2928
    %s2931 = sor.u32 256, 8
    %2932 = vbcast.lane.b32.xlu0 %v2926, %s2931
    %v2933 = vpop.permute.xlu0 %2932
    %v2934 = vlaneseq
    %v2935 = vshrl.u32 %v2934, 7
    %v2936 = vsub.s32 4, %v2935
    %v2937 = vrot.slane %v732, %v2936
    %2939 = vbcast.lane.b32.xlu0 %v2937, 256
    %v2940 = vpop.permute.xlu0 %2939
    %s2942 = sor.u32 256, 8
    %2943 = vbcast.lane.b32.xlu0 %v2937, %s2942
    %v2944 = vpop.permute.xlu0 %2943
    %v2945 = vlaneseq
    %v2946 = vshrl.u32 %v2945, 7
    %v2947 = vsub.s32 5, %v2946
    %v2948 = vrot.slane %v732, %v2947
    %2950 = vbcast.lane.b32.xlu0 %v2948, 256
    %v2951 = vpop.permute.xlu0 %2950
    %s2953 = sor.u32 256, 8
    %2954 = vbcast.lane.b32.xlu0 %v2948, %s2953
    %v2955 = vpop.permute.xlu0 %2954
    %v2956 = vlaneseq
    %v2957 = vshrl.u32 %v2956, 7
    %v2958 = vsub.s32 6, %v2957
    %v2959 = vrot.slane %v732, %v2958
    %2961 = vbcast.lane.b32.xlu0 %v2959, 256
    %v2962 = vpop.permute.xlu0 %2961
    %s2964 = sor.u32 256, 8
    %2965 = vbcast.lane.b32.xlu0 %v2959, %s2964
    %v2966 = vpop.permute.xlu0 %2965
    %v2967 = vlaneseq
    %v2968 = vshrl.u32 %v2967, 7
    %v2969 = vsub.s32 7, %v2968
    %v2970 = vrot.slane %v732, %v2969
    %2972 = vbcast.lane.b32.xlu0 %v2970, 256
    %v2973 = vpop.permute.xlu0 %2972
    %s2975 = sor.u32 256, 8
    %2976 = vbcast.lane.b32.xlu0 %v2970, %s2975
    %v2977 = vpop.permute.xlu0 %2976
    %v2978 = vmul.f32 %v2562, %v2632
    %v2979 = vmul.f32 %v2563, %v2636
    %v2980 = vmul.f32 %v2564, %v2643
    %v2981 = vmul.f32 %v2565, %v2647
    %v2982 = vmul.f32 %v2566, %v2654
    %v2983 = vmul.f32 %v2567, %v2658
    %v2984 = vmul.f32 %v2568, %v2665
    %v2985 = vmul.f32 %v2569, %v2669
    %v2986 = vmul.f32 %v2570, %v2676
    %v2987 = vmul.f32 %v2571, %v2680
    %v2988 = vmul.f32 %v2572, %v2687
    %v2989 = vmul.f32 %v2573, %v2691
    %v2990 = vmul.f32 %v2574, %v2698
    %v2991 = vmul.f32 %v2575, %v2702
    %v2992 = vmul.f32 %v2576, %v2709
    %v2993 = vmul.f32 %v2577, %v2713
    %v2994 = vmul.f32 %v2578, %v2720
    %v2995 = vmul.f32 %v2579, %v2724
    %v2996 = vmul.f32 %v2580, %v2731
    %v2997 = vmul.f32 %v2581, %v2735
    %v2998 = vmul.f32 %v2582, %v2742
    %v2999 = vmul.f32 %v2583, %v2746
    %v3000 = vmul.f32 %v2584, %v2753
    %v3001 = vmul.f32 %v2585, %v2757
    %v3002 = vmul.f32 %v2586, %v2764
    %v3003 = vmul.f32 %v2587, %v2768
    %v3004 = vmul.f32 %v2588, %v2775
    %v3005 = vmul.f32 %v2589, %v2779
    %v3006 = vmul.f32 %v2590, %v2786
    %v3007 = vmul.f32 %v2591, %v2790
    %v3008 = vmul.f32 %v2592, %v2797
    %v3009 = vmul.f32 %v2593, %v2801
    %v3010 = vmul.f32 %v2594, %v2808
    %v3011 = vmul.f32 %v2595, %v2812
    %v3012 = vmul.f32 %v2596, %v2819
    %v3013 = vmul.f32 %v2597, %v2823
    %v3014 = vmul.f32 %v2598, %v2830
    %v3015 = vmul.f32 %v2599, %v2834
    %v3016 = vmul.f32 %v2600, %v2841
    %v3017 = vmul.f32 %v2601, %v2845
    %v3018 = vmul.f32 %v2602, %v2852
    %v3019 = vmul.f32 %v2603, %v2856
    %v3020 = vmul.f32 %v2604, %v2863
    %v3021 = vmul.f32 %v2605, %v2867
    %v3022 = vmul.f32 %v2606, %v2874
    %v3023 = vmul.f32 %v2607, %v2878
    %v3024 = vmul.f32 %v2608, %v2885
    %v3025 = vmul.f32 %v2609, %v2889
    %v3026 = vmul.f32 %v2610, %v2896
    %v3027 = vmul.f32 %v2611, %v2900
    %v3028 = vmul.f32 %v2612, %v2907
    %v3029 = vmul.f32 %v2613, %v2911
    %v3030 = vmul.f32 %v2614, %v2918
    %v3031 = vmul.f32 %v2615, %v2922
    %v3032 = vmul.f32 %v2616, %v2929
    %v3033 = vmul.f32 %v2617, %v2933
    %v3034 = vmul.f32 %v2618, %v2940
    %v3035 = vmul.f32 %v2619, %v2944
    %v3036 = vmul.f32 %v2620, %v2951
    %v3037 = vmul.f32 %v2621, %v2955
    %v3038 = vmul.f32 %v2622, %v2962
    %v3039 = vmul.f32 %v2623, %v2966
    %v3040 = vmul.f32 %v2624, %v2973
    %v3041 = vmul.f32 %v2625, %v2977
    %v3042 = vsel %vm379, %v2978, 0.0
    %v3043 = vsel %vm379, %v2979, 0.0
    %v3044 = vadd.f32 %v3042, %v3043
    %v3045 = vrot.slane %v3044, 4
    %v3046 = vadd.f32 %v3044, %v3045
    %v3047 = vrot.slane %v3046, 2
    %v3048 = vadd.f32 %v3046, %v3047
    %v3049 = vrot.slane %v3048, 1
    %v3050 = vadd.f32 %v3048, %v3049
    %v3051 = vsel %vm379, %v2980, 0.0
    %v3052 = vsel %vm379, %v2981, 0.0
    %v3053 = vadd.f32 %v3051, %v3052
    %v3054 = vrot.slane %v3053, 4
    %v3055 = vadd.f32 %v3053, %v3054
    %v3056 = vrot.slane %v3055, 2
    %v3057 = vadd.f32 %v3055, %v3056
    %v3058 = vrot.slane %v3057, 1
    %v3059 = vadd.f32 %v3057, %v3058
    %v3060 = vsel %vm379, %v2982, 0.0
    %v3061 = vsel %vm379, %v2983, 0.0
    %v3062 = vadd.f32 %v3060, %v3061
    %v3063 = vrot.slane %v3062, 4
    %v3064 = vadd.f32 %v3062, %v3063
    %v3065 = vrot.slane %v3064, 2
    %v3066 = vadd.f32 %v3064, %v3065
    %v3067 = vrot.slane %v3066, 1
    %v3068 = vadd.f32 %v3066, %v3067
    %v3069 = vsel %vm379, %v2984, 0.0
    %v3070 = vsel %vm379, %v2985, 0.0
    %v3071 = vadd.f32 %v3069, %v3070
    %v3072 = vrot.slane %v3071, 4
    %v3073 = vadd.f32 %v3071, %v3072
    %v3074 = vrot.slane %v3073, 2
    %v3075 = vadd.f32 %v3073, %v3074
    %v3076 = vrot.slane %v3075, 1
    %v3077 = vadd.f32 %v3075, %v3076
    %v3078 = vsel %vm379, %v2986, 0.0
    %v3079 = vsel %vm379, %v2987, 0.0
    %v3080 = vadd.f32 %v3078, %v3079
    %v3081 = vrot.slane %v3080, 4
    %v3082 = vadd.f32 %v3080, %v3081
    %v3083 = vrot.slane %v3082, 2
    %v3084 = vadd.f32 %v3082, %v3083
    %v3085 = vrot.slane %v3084, 1
    %v3086 = vadd.f32 %v3084, %v3085
    %v3087 = vsel %vm379, %v2988, 0.0
    %v3088 = vsel %vm379, %v2989, 0.0
    %v3089 = vadd.f32 %v3087, %v3088
    %v3090 = vrot.slane %v3089, 4
    %v3091 = vadd.f32 %v3089, %v3090
    %v3092 = vrot.slane %v3091, 2
    %v3093 = vadd.f32 %v3091, %v3092
    %v3094 = vrot.slane %v3093, 1
    %v3095 = vadd.f32 %v3093, %v3094
    %v3096 = vsel %vm379, %v2990, 0.0
    %v3097 = vsel %vm379, %v2991, 0.0
    %v3098 = vadd.f32 %v3096, %v3097
    %v3099 = vrot.slane %v3098, 4
    %v3100 = vadd.f32 %v3098, %v3099
    %v3101 = vrot.slane %v3100, 2
    %v3102 = vadd.f32 %v3100, %v3101
    %v3103 = vrot.slane %v3102, 1
    %v3104 = vadd.f32 %v3102, %v3103
    %v3105 = vsel %vm379, %v2992, 0.0
    %v3106 = vsel %vm379, %v2993, 0.0
    %v3107 = vadd.f32 %v3105, %v3106
    %v3108 = vrot.slane %v3107, 4
    %v3109 = vadd.f32 %v3107, %v3108
    %v3110 = vrot.slane %v3109, 2
    %v3111 = vadd.f32 %v3109, %v3110
    %v3112 = vrot.slane %v3111, 1
    %v3113 = vadd.f32 %v3111, %v3112
    %v3114 = vsel %vm379, %v2994, 0.0
    %v3115 = vsel %vm379, %v2995, 0.0
    %v3116 = vadd.f32 %v3114, %v3115
    %v3117 = vrot.slane %v3116, 4
    %v3118 = vadd.f32 %v3116, %v3117
    %v3119 = vrot.slane %v3118, 2
    %v3120 = vadd.f32 %v3118, %v3119
    %v3121 = vrot.slane %v3120, 1
    %v3122 = vadd.f32 %v3120, %v3121
    %v3123 = vsel %vm379, %v2996, 0.0
    %v3124 = vsel %vm379, %v2997, 0.0
    %v3125 = vadd.f32 %v3123, %v3124
    %v3126 = vrot.slane %v3125, 4
    %v3127 = vadd.f32 %v3125, %v3126
    %v3128 = vrot.slane %v3127, 2
    %v3129 = vadd.f32 %v3127, %v3128
    %v3130 = vrot.slane %v3129, 1
    %v3131 = vadd.f32 %v3129, %v3130
    %v3132 = vsel %vm379, %v2998, 0.0
    %v3133 = vsel %vm379, %v2999, 0.0
    %v3134 = vadd.f32 %v3132, %v3133
    %v3135 = vrot.slane %v3134, 4
    %v3136 = vadd.f32 %v3134, %v3135
    %v3137 = vrot.slane %v3136, 2
    %v3138 = vadd.f32 %v3136, %v3137
    %v3139 = vrot.slane %v3138, 1
    %v3140 = vadd.f32 %v3138, %v3139
    %v3141 = vsel %vm379, %v3000, 0.0
    %v3142 = vsel %vm379, %v3001, 0.0
    %v3143 = vadd.f32 %v3141, %v3142
    %v3144 = vrot.slane %v3143, 4
    %v3145 = vadd.f32 %v3143, %v3144
    %v3146 = vrot.slane %v3145, 2
    %v3147 = vadd.f32 %v3145, %v3146
    %v3148 = vrot.slane %v3147, 1
    %v3149 = vadd.f32 %v3147, %v3148
    %v3150 = vsel %vm379, %v3002, 0.0
    %v3151 = vsel %vm379, %v3003, 0.0
    %v3152 = vadd.f32 %v3150, %v3151
    %v3153 = vrot.slane %v3152, 4
    %v3154 = vadd.f32 %v3152, %v3153
    %v3155 = vrot.slane %v3154, 2
    %v3156 = vadd.f32 %v3154, %v3155
    %v3157 = vrot.slane %v3156, 1
    %v3158 = vadd.f32 %v3156, %v3157
    %v3159 = vsel %vm379, %v3004, 0.0
    %v3160 = vsel %vm379, %v3005, 0.0
    %v3161 = vadd.f32 %v3159, %v3160
    %v3162 = vrot.slane %v3161, 4
    %v3163 = vadd.f32 %v3161, %v3162
    %v3164 = vrot.slane %v3163, 2
    %v3165 = vadd.f32 %v3163, %v3164
    %v3166 = vrot.slane %v3165, 1
    %v3167 = vadd.f32 %v3165, %v3166
    %v3168 = vsel %vm379, %v3006, 0.0
    %v3169 = vsel %vm379, %v3007, 0.0
    %v3170 = vadd.f32 %v3168, %v3169
    %v3171 = vrot.slane %v3170, 4
    %v3172 = vadd.f32 %v3170, %v3171
    %v3173 = vrot.slane %v3172, 2
    %v3174 = vadd.f32 %v3172, %v3173
    %v3175 = vrot.slane %v3174, 1
    %v3176 = vadd.f32 %v3174, %v3175
    %v3177 = vsel %vm379, %v3008, 0.0
    %v3178 = vsel %vm379, %v3009, 0.0
    %v3179 = vadd.f32 %v3177, %v3178
    %v3180 = vrot.slane %v3179, 4
    %v3181 = vadd.f32 %v3179, %v3180
    %v3182 = vrot.slane %v3181, 2
    %v3183 = vadd.f32 %v3181, %v3182
    %v3184 = vrot.slane %v3183, 1
    %v3185 = vadd.f32 %v3183, %v3184
    %v3186 = vsel %vm379, %v3010, 0.0
    %v3187 = vsel %vm379, %v3011, 0.0
    %v3188 = vadd.f32 %v3186, %v3187
    %v3189 = vrot.slane %v3188, 4
    %v3190 = vadd.f32 %v3188, %v3189
    %v3191 = vrot.slane %v3190, 2
    %v3192 = vadd.f32 %v3190, %v3191
    %v3193 = vrot.slane %v3192, 1
    %v3194 = vadd.f32 %v3192, %v3193
    %v3195 = vsel %vm379, %v3012, 0.0
    %v3196 = vsel %vm379, %v3013, 0.0
    %v3197 = vadd.f32 %v3195, %v3196
    %v3198 = vrot.slane %v3197, 4
    %v3199 = vadd.f32 %v3197, %v3198
    %v3200 = vrot.slane %v3199, 2
    %v3201 = vadd.f32 %v3199, %v3200
    %v3202 = vrot.slane %v3201, 1
    %v3203 = vadd.f32 %v3201, %v3202
    %v3204 = vsel %vm379, %v3014, 0.0
    %v3205 = vsel %vm379, %v3015, 0.0
    %v3206 = vadd.f32 %v3204, %v3205
    %v3207 = vrot.slane %v3206, 4
    %v3208 = vadd.f32 %v3206, %v3207
    %v3209 = vrot.slane %v3208, 2
    %v3210 = vadd.f32 %v3208, %v3209
    %v3211 = vrot.slane %v3210, 1
    %v3212 = vadd.f32 %v3210, %v3211
    %v3213 = vsel %vm379, %v3016, 0.0
    %v3214 = vsel %vm379, %v3017, 0.0
    %v3215 = vadd.f32 %v3213, %v3214
    %v3216 = vrot.slane %v3215, 4
    %v3217 = vadd.f32 %v3215, %v3216
    %v3218 = vrot.slane %v3217, 2
    %v3219 = vadd.f32 %v3217, %v3218
    %v3220 = vrot.slane %v3219, 1
    %v3221 = vadd.f32 %v3219, %v3220
    %v3222 = vsel %vm379, %v3018, 0.0
    %v3223 = vsel %vm379, %v3019, 0.0
    %v3224 = vadd.f32 %v3222, %v3223
    %v3225 = vrot.slane %v3224, 4
    %v3226 = vadd.f32 %v3224, %v3225
    %v3227 = vrot.slane %v3226, 2
    %v3228 = vadd.f32 %v3226, %v3227
    %v3229 = vrot.slane %v3228, 1
    %v3230 = vadd.f32 %v3228, %v3229
    %v3231 = vsel %vm379, %v3020, 0.0
    %v3232 = vsel %vm379, %v3021, 0.0
    %v3233 = vadd.f32 %v3231, %v3232
    %v3234 = vrot.slane %v3233, 4
    %v3235 = vadd.f32 %v3233, %v3234
    %v3236 = vrot.slane %v3235, 2
    %v3237 = vadd.f32 %v3235, %v3236
    %v3238 = vrot.slane %v3237, 1
    %v3239 = vadd.f32 %v3237, %v3238
    %v3240 = vsel %vm379, %v3022, 0.0
    %v3241 = vsel %vm379, %v3023, 0.0
    %v3242 = vadd.f32 %v3240, %v3241
    %v3243 = vrot.slane %v3242, 4
    %v3244 = vadd.f32 %v3242, %v3243
    %v3245 = vrot.slane %v3244, 2
    %v3246 = vadd.f32 %v3244, %v3245
    %v3247 = vrot.slane %v3246, 1
    %v3248 = vadd.f32 %v3246, %v3247
    %v3249 = vsel %vm379, %v3024, 0.0
    %v3250 = vsel %vm379, %v3025, 0.0
    %v3251 = vadd.f32 %v3249, %v3250
    %v3252 = vrot.slane %v3251, 4
    %v3253 = vadd.f32 %v3251, %v3252
    %v3254 = vrot.slane %v3253, 2
    %v3255 = vadd.f32 %v3253, %v3254
    %v3256 = vrot.slane %v3255, 1
    %v3257 = vadd.f32 %v3255, %v3256
    %v3258 = vsel %vm379, %v3026, 0.0
    %v3259 = vsel %vm379, %v3027, 0.0
    %v3260 = vadd.f32 %v3258, %v3259
    %v3261 = vrot.slane %v3260, 4
    %v3262 = vadd.f32 %v3260, %v3261
    %v3263 = vrot.slane %v3262, 2
    %v3264 = vadd.f32 %v3262, %v3263
    %v3265 = vrot.slane %v3264, 1
    %v3266 = vadd.f32 %v3264, %v3265
    %v3267 = vsel %vm379, %v3028, 0.0
    %v3268 = vsel %vm379, %v3029, 0.0
    %v3269 = vadd.f32 %v3267, %v3268
    %v3270 = vrot.slane %v3269, 4
    %v3271 = vadd.f32 %v3269, %v3270
    %v3272 = vrot.slane %v3271, 2
    %v3273 = vadd.f32 %v3271, %v3272
    %v3274 = vrot.slane %v3273, 1
    %v3275 = vadd.f32 %v3273, %v3274
    %v3276 = vsel %vm379, %v3030, 0.0
    %v3277 = vsel %vm379, %v3031, 0.0
    %v3278 = vadd.f32 %v3276, %v3277
    %v3279 = vrot.slane %v3278, 4
    %v3280 = vadd.f32 %v3278, %v3279
    %v3281 = vrot.slane %v3280, 2
    %v3282 = vadd.f32 %v3280, %v3281
    %v3283 = vrot.slane %v3282, 1
    %v3284 = vadd.f32 %v3282, %v3283
    %v3285 = vsel %vm379, %v3032, 0.0
    %v3286 = vsel %vm379, %v3033, 0.0
    %v3287 = vadd.f32 %v3285, %v3286
    %v3288 = vrot.slane %v3287, 4
    %v3289 = vadd.f32 %v3287, %v3288
    %v3290 = vrot.slane %v3289, 2
    %v3291 = vadd.f32 %v3289, %v3290
    %v3292 = vrot.slane %v3291, 1
    %v3293 = vadd.f32 %v3291, %v3292
    %v3294 = vsel %vm379, %v3034, 0.0
    %v3295 = vsel %vm379, %v3035, 0.0
    %v3296 = vadd.f32 %v3294, %v3295
    %v3297 = vrot.slane %v3296, 4
    %v3298 = vadd.f32 %v3296, %v3297
    %v3299 = vrot.slane %v3298, 2
    %v3300 = vadd.f32 %v3298, %v3299
    %v3301 = vrot.slane %v3300, 1
    %v3302 = vadd.f32 %v3300, %v3301
    %v3303 = vsel %vm379, %v3036, 0.0
    %v3304 = vsel %vm379, %v3037, 0.0
    %v3305 = vadd.f32 %v3303, %v3304
    %v3306 = vrot.slane %v3305, 4
    %v3307 = vadd.f32 %v3305, %v3306
    %v3308 = vrot.slane %v3307, 2
    %v3309 = vadd.f32 %v3307, %v3308
    %v3310 = vrot.slane %v3309, 1
    %v3311 = vadd.f32 %v3309, %v3310
    %v3312 = vsel %vm379, %v3038, 0.0
    %v3313 = vsel %vm379, %v3039, 0.0
    %v3314 = vadd.f32 %v3312, %v3313
    %v3315 = vrot.slane %v3314, 4
    %v3316 = vadd.f32 %v3314, %v3315
    %v3317 = vrot.slane %v3316, 2
    %v3318 = vadd.f32 %v3316, %v3317
    %v3319 = vrot.slane %v3318, 1
    %v3320 = vadd.f32 %v3318, %v3319
    %v3321 = vsel %vm379, %v3040, 0.0
    %v3322 = vsel %vm379, %v3041, 0.0
    %v3323 = vadd.f32 %v3321, %v3322
    %v3324 = vrot.slane %v3323, 4
    %v3325 = vadd.f32 %v3323, %v3324
    %v3326 = vrot.slane %v3325, 2
    %v3327 = vadd.f32 %v3325, %v3326
    %v3328 = vrot.slane %v3327, 1
    %v3329 = vadd.f32 %v3327, %v3328
    %v3330 = vld [vmem:[%s10] sm:$0x1]
    %v3332 = vlaneseq
    %v3333 = vshrl.u32 %v3332, 7
    %v3334 = vsub.s32 0, %v3333
    %v3335 = vrot.slane %v3330, %v3334
    %v3337 = vmul.f32 %v360, %v3335
    %v3338 = vmul.f32 %v361, %v3335
    %v3339 = vmul.f32 %v362, %v3335
    %v3340 = vmul.f32 %v363, %v3335
    %v3345 = vrot.slane %v3337, 1
    %v3346 = vrot.slane %v3337, 2
    %v3347 = vrot.slane %v3337, 3
    %v3348 = vrot.slane %v3337, 4
    %v3349 = vrot.slane %v3337, 5
    %v3350 = vrot.slane %v3337, 6
    %v3351 = vrot.slane %v3337, 7
    %v3352 = vrot.slane %v3338, 1
    %v3353 = vrot.slane %v3338, 2
    %v3354 = vrot.slane %v3338, 3
    %v3355 = vrot.slane %v3338, 4
    %v3356 = vrot.slane %v3338, 5
    %v3357 = vrot.slane %v3338, 6
    %v3358 = vrot.slane %v3338, 7
    %v3359 = vrot.slane %v3339, 1
    %v3360 = vrot.slane %v3339, 2
    %v3361 = vrot.slane %v3339, 3
    %v3362 = vrot.slane %v3339, 4
    %v3363 = vrot.slane %v3339, 5
    %v3364 = vrot.slane %v3339, 6
    %v3365 = vrot.slane %v3339, 7
    %v3366 = vrot.slane %v3340, 1
    %v3367 = vrot.slane %v3340, 2
    %v3368 = vrot.slane %v3340, 3
    %v3369 = vrot.slane %v3340, 4
    %v3370 = vrot.slane %v3340, 5
    %v3371 = vrot.slane %v3340, 6
    %v3372 = vrot.slane %v3340, 7
    %v3405 = vadd.f32 %v3050, %v3337
    %v3406 = vadd.f32 %v3059, %v3345
    %v3407 = vadd.f32 %v3068, %v3346
    %v3408 = vadd.f32 %v3077, %v3347
    %v3409 = vadd.f32 %v3086, %v3348
    %v3410 = vadd.f32 %v3095, %v3349
    %v3411 = vadd.f32 %v3104, %v3350
    %v3412 = vadd.f32 %v3113, %v3351
    %v3413 = vadd.f32 %v3122, %v3338
    %v3414 = vadd.f32 %v3131, %v3352
    %v3415 = vadd.f32 %v3140, %v3353
    %v3416 = vadd.f32 %v3149, %v3354
    %v3417 = vadd.f32 %v3158, %v3355
    %v3418 = vadd.f32 %v3167, %v3356
    %v3419 = vadd.f32 %v3176, %v3357
    %v3420 = vadd.f32 %v3185, %v3358
    %v3421 = vadd.f32 %v3194, %v3339
    %v3422 = vadd.f32 %v3203, %v3359
    %v3423 = vadd.f32 %v3212, %v3360
    %v3424 = vadd.f32 %v3221, %v3361
    %v3425 = vadd.f32 %v3230, %v3362
    %v3426 = vadd.f32 %v3239, %v3363
    %v3427 = vadd.f32 %v3248, %v3364
    %v3428 = vadd.f32 %v3257, %v3365
    %v3429 = vadd.f32 %v3266, %v3340
    %v3430 = vadd.f32 %v3275, %v3366
    %v3431 = vadd.f32 %v3284, %v3367
    %v3432 = vadd.f32 %v3293, %v3368
    %v3433 = vadd.f32 %v3302, %v3369
    %v3434 = vadd.f32 %v3311, %v3370
    %v3435 = vadd.f32 %v3320, %v3371
    %v3436 = vadd.f32 %v3329, %v3372
    %v3437 = vxor.u32 %v219, 2147483648
    %v3438 = vxor.u32 %v224, 2147483648
    %v3439 = vxor.u32 %v229, 2147483648
    %v3440 = vxor.u32 %v234, 2147483648
    %v3441 = vmul.f32 %v3437, 1.442695
    %v3442 = vpow.pop %v3441
    %v3443 = vmul.f32 %v3438, 1.442695
    %v3444 = vpow.pop %v3443
    %v3445 = vmul.f32 %v3439, 1.442695
    %v3446 = vpow.pop %v3445
    %v3447 = vmul.f32 %v3440, 1.442695
    %v3448 = vpow.pop %v3447
    %v3449 = vadd.f32 %v3442, 1.0
    %v3450 = vadd.f32 %v3444, 1.0
    %v3451 = vadd.f32 %v3446, 1.0
    %v3452 = vadd.f32 %v3448, 1.0
    %v3453 = vrcp.pop %v3449
    %v3454 = vmul.f32 1.0, %v3453
    %v3455 = vrcp.pop %v3450
    %v3456 = vmul.f32 1.0, %v3455
    %v3457 = vrcp.pop %v3451
    %v3458 = vmul.f32 1.0, %v3457
    %v3459 = vrcp.pop %v3452
    %v3460 = vmul.f32 1.0, %v3459
    %v3461 = vmul.f32 %v219, %v3454
    %v3462 = vmul.f32 %v224, %v3456
    %v3463 = vmul.f32 %v229, %v3458
    %v3464 = vmul.f32 %v234, %v3460
    %v3469 = vrot.slane %v3461, 1
    %v3470 = vrot.slane %v3461, 2
    %v3471 = vrot.slane %v3461, 3
    %v3472 = vrot.slane %v3461, 4
    %v3473 = vrot.slane %v3461, 5
    %v3474 = vrot.slane %v3461, 6
    %v3475 = vrot.slane %v3461, 7
    %v3476 = vrot.slane %v3462, 1
    %v3477 = vrot.slane %v3462, 2
    %v3478 = vrot.slane %v3462, 3
    %v3479 = vrot.slane %v3462, 4
    %v3480 = vrot.slane %v3462, 5
    %v3481 = vrot.slane %v3462, 6
    %v3482 = vrot.slane %v3462, 7
    %v3483 = vrot.slane %v3463, 1
    %v3484 = vrot.slane %v3463, 2
    %v3485 = vrot.slane %v3463, 3
    %v3486 = vrot.slane %v3463, 4
    %v3487 = vrot.slane %v3463, 5
    %v3488 = vrot.slane %v3463, 6
    %v3489 = vrot.slane %v3463, 7
    %v3490 = vrot.slane %v3464, 1
    %v3491 = vrot.slane %v3464, 2
    %v3492 = vrot.slane %v3464, 3
    %v3493 = vrot.slane %v3464, 4
    %v3494 = vrot.slane %v3464, 5
    %v3495 = vrot.slane %v3464, 6
    %v3496 = vrot.slane %v3464, 7
    %v3529 = vmul.f32 %v3405, %v3461
    %v3530 = vmul.f32 %v3406, %v3469
    %v3531 = vmul.f32 %v3407, %v3470
    %v3532 = vmul.f32 %v3408, %v3471
    %v3533 = vmul.f32 %v3409, %v3472
    %v3534 = vmul.f32 %v3410, %v3473
    %v3535 = vmul.f32 %v3411, %v3474
    %v3536 = vmul.f32 %v3412, %v3475
    %v3537 = vmul.f32 %v3413, %v3462
    %v3538 = vmul.f32 %v3414, %v3476
    %v3539 = vmul.f32 %v3415, %v3477
    %v3540 = vmul.f32 %v3416, %v3478
    %v3541 = vmul.f32 %v3417, %v3479
    %v3542 = vmul.f32 %v3418, %v3480
    %v3543 = vmul.f32 %v3419, %v3481
    %v3544 = vmul.f32 %v3420, %v3482
    %v3545 = vmul.f32 %v3421, %v3463
    %v3546 = vmul.f32 %v3422, %v3483
    %v3547 = vmul.f32 %v3423, %v3484
    %v3548 = vmul.f32 %v3424, %v3485
    %v3549 = vmul.f32 %v3425, %v3486
    %v3550 = vmul.f32 %v3426, %v3487
    %v3551 = vmul.f32 %v3427, %v3488
    %v3552 = vmul.f32 %v3428, %v3489
    %v3553 = vmul.f32 %v3429, %v3464
    %v3554 = vmul.f32 %v3430, %v3490
    %v3555 = vmul.f32 %v3431, %v3491
    %v3556 = vmul.f32 %v3432, %v3492
    %v3557 = vmul.f32 %v3433, %v3493
    %v3558 = vmul.f32 %v3434, %v3494
    %v3559 = vmul.f32 %v3435, %v3495
    %v3560 = vmul.f32 %v3436, %v3496
    %v3561 = vld [vmem:[%s11] sm:$0xff]
    %v3562 = vld [vmem:[%s11 + $0x8] sm:$0xff]
    %v3563 = vld [vmem:[%s11 + $0x10] sm:$0xff]
    %v3564 = vld [vmem:[%s11 + $0x18] sm:$0xff]
    %v3565 = vld [vmem:[%s11 + $0x20] sm:$0xff]
    %v3566 = vld [vmem:[%s11 + $0x28] sm:$0xff]
    %v3567 = vld [vmem:[%s11 + $0x30] sm:$0xff]
    %v3568 = vld [vmem:[%s11 + $0x38] sm:$0xff]
    %v3601 = vrot.slane %v3530, 7
    %vm3602 = vcmask 1041409
    %v3603 = vsel %vm3602, %v3601, %v3529
    %v3604 = vrot.slane %v3531, 6
    %vm3605 = vcmask 1042434
    %v3606 = vsel %vm3605, %v3604, %v3603
    %v3607 = vrot.slane %v3532, 5
    %vm3608 = vcmask 1043459
    %v3609 = vsel %vm3608, %v3607, %v3606
    %v3610 = vrot.slane %v3533, 4
    %vm3611 = vcmask 1044484
    %v3612 = vsel %vm3611, %v3610, %v3609
    %v3613 = vrot.slane %v3534, 3
    %vm3614 = vcmask 1045509
    %v3615 = vsel %vm3614, %v3613, %v3612
    %v3616 = vrot.slane %v3535, 2
    %vm3617 = vcmask 1046534
    %v3618 = vsel %vm3617, %v3616, %v3615
    %v3619 = vrot.slane %v3536, 1
    %vm3620 = vcmask 1047559
    %v3621 = vsel %vm3620, %v3619, %v3618
    %v3622 = vrot.slane %v3538, 7
    %v3623 = vsel %vm3602, %v3622, %v3537
    %v3624 = vrot.slane %v3539, 6
    %v3625 = vsel %vm3605, %v3624, %v3623
    %v3626 = vrot.slane %v3540, 5
    %v3627 = vsel %vm3608, %v3626, %v3625
    %v3628 = vrot.slane %v3541, 4
    %v3629 = vsel %vm3611, %v3628, %v3627
    %v3630 = vrot.slane %v3542, 3
    %v3631 = vsel %vm3614, %v3630, %v3629
    %v3632 = vrot.slane %v3543, 2
    %v3633 = vsel %vm3617, %v3632, %v3631
    %v3634 = vrot.slane %v3544, 1
    %v3635 = vsel %vm3620, %v3634, %v3633
    %v3636 = vrot.slane %v3546, 7
    %v3637 = vsel %vm3602, %v3636, %v3545
    %v3638 = vrot.slane %v3547, 6
    %v3639 = vsel %vm3605, %v3638, %v3637
    %v3640 = vrot.slane %v3548, 5
    %v3641 = vsel %vm3608, %v3640, %v3639
    %v3642 = vrot.slane %v3549, 4
    %v3643 = vsel %vm3611, %v3642, %v3641
    %v3644 = vrot.slane %v3550, 3
    %v3645 = vsel %vm3614, %v3644, %v3643
    %v3646 = vrot.slane %v3551, 2
    %v3647 = vsel %vm3617, %v3646, %v3645
    %v3648 = vrot.slane %v3552, 1
    %v3649 = vsel %vm3620, %v3648, %v3647
    %v3650 = vrot.slane %v3554, 7
    %v3651 = vsel %vm3602, %v3650, %v3553
    %v3652 = vrot.slane %v3555, 6
    %v3653 = vsel %vm3605, %v3652, %v3651
    %v3654 = vrot.slane %v3556, 5
    %v3655 = vsel %vm3608, %v3654, %v3653
    %v3656 = vrot.slane %v3557, 4
    %v3657 = vsel %vm3611, %v3656, %v3655
    %v3658 = vrot.slane %v3558, 3
    %v3659 = vsel %vm3614, %v3658, %v3657
    %v3660 = vrot.slane %v3559, 2
    %v3661 = vsel %vm3617, %v3660, %v3659
    %v3662 = vrot.slane %v3560, 1
    %v3663 = vsel %vm3620, %v3662, %v3661
    %v3664 = vsel %vm379, %v3621, 0
    %v3666 = vsel %vm379, %v3635, 0
    %v3668 = vsel %vm379, %v3649, 0
    %v3670 = vsel %vm379, %v3663, 0
    %3672 = vmatprep.subr.mxu0 0.0
    %3673 = vmatpush1.msra.mxu0 %v3561
    %3674 = vmatprep.subr.mxu0 0.0
    %3675 = vmatpush1.msra.mxu0 %v3562
    %3676 = vmatprep.subr.mxu0 0.0
    %3677 = vmatpush1.msra.mxu0 %v3563
    %3678 = vmatprep.subr.mxu0 0.0
    %3679 = vmatpush1.msra.mxu0 %v3564
    %3680 = vmatprep.subr.mxu0 0.0
    %3681 = vmatpush1.msra.mxu0 %v3565
    %3682 = vmatprep.subr.mxu0 0.0
    %3683 = vmatpush1.msra.mxu0 %v3566
    %3684 = vmatprep.subr.mxu0 0.0
    %3685 = vmatpush1.msra.mxu0 %v3567
    %3686 = vmatprep.subr.mxu0 0.0
    %3687 = vmatpush1.msra.mxu0 %v3568
    %3688 = vmatprep.subr.mxu0 0.0
    %3689 = vmatpush1.msra.mxu0 0.0
    %3690 = vmatprep.subr.mxu0 0.0
    %3691 = vmatpush1.msra.mxu0 0.0
    %3692 = vmatprep.subr.mxu0 0.0
    %3693 = vmatpush1.msra.mxu0 0.0
    %3694 = vmatprep.subr.mxu0 0.0
    %3695 = vmatpush1.msra.mxu0 0.0
    %3696 = vmatprep.subr.mxu0 0.0
    %3697 = vmatpush1.msra.mxu0 0.0
    %3698 = vmatprep.subr.mxu0 0.0
    %3699 = vmatpush1.msra.mxu0 0.0
    %3700 = vmatprep.subr.mxu0 0.0
    %3701 = vmatpush1.msra.mxu0 0.0
    %3702 = vmatprep.subr.mxu0 0.0
    %3703 = vmatpush1.msra.mxu0 0.0
    %3704 = vmatprep.subr.mxu0 0.0
    %3705 = vmatpush1.msra.mxu0 0.0
    %3706 = vmatprep.subr.mxu0 0.0
    %3707 = vmatpush1.msra.mxu0 0.0
    %3708 = vmatprep.subr.mxu0 0.0
    %3709 = vmatpush1.msra.mxu0 0.0
    %3710 = vmatprep.subr.mxu0 0.0
    %3711 = vmatpush1.msra.mxu0 0.0
    %3712 = vmatprep.subr.mxu0 0.0
    %3713 = vmatpush1.msra.mxu0 0.0
    %3714 = vmatprep.subr.mxu0 0.0
    %3715 = vmatpush1.msra.mxu0 0.0
    %3716 = vmatprep.subr.mxu0 0.0
    %3717 = vmatpush1.msra.mxu0 0.0
    %3718 = vmatprep.subr.mxu0 0.0
    %3719 = vmatpush1.msra.mxu0 0.0
    %3720 = vmatprep.subr.mxu0 0.0
    %3721 = vmatpush1.msra.mxu0 0.0
    %3722 = vmatprep.subr.mxu0 0.0
    %3723 = vmatpush1.msra.mxu0 0.0
    %3724 = vmatprep.subr.mxu0 0.0
    %3725 = vmatpush1.msra.mxu0 0.0
    %3726 = vmatprep.subr.mxu0 0.0
    %3727 = vmatpush1.msra.mxu0 0.0
    %3728 = vmatprep.subr.mxu0 0.0
    %3729 = vmatpush1.msra.mxu0 0.0
    %3730 = vmatprep.subr.mxu0 0.0
    %3731 = vmatpush1.msra.mxu0 0.0
    %3732 = vmatprep.subr.mxu0 0.0
    %3733 = vmatpush1.msra.mxu0 0.0
    %3734 = vmatprep.subr.mxu0 0.0
    %3735 = vmatpush1.msra.mxu0 0.0
    %3736 = vmatprep.mubr.f32.mxu0 0.0
    %3737 = vmatmul.mubr.f32.gmra.mrb[0].mxu0 %v3664
    %v3738 = vpop.f32.mrb[0].mxu0
    %v3739 = vadd.f32 0.0, %v3738
    %v3740 = vpop.f32.mrb[0].mxu0
    %3741 = vmatprep.mubr.f32.mxu0 0.0
    %3742 = vmatmul.mubr.f32.gmra.mrb[0].mxu0 %v3666
    %v3743 = vpop.f32.mrb[0].mxu0
    %v3744 = vadd.f32 0.0, %v3743
    %v3745 = vpop.f32.mrb[0].mxu0
    %3746 = vmatprep.mubr.f32.mxu0 0.0
    %3747 = vmatmul.mubr.f32.gmra.mrb[0].mxu0 %v3668
    %v3748 = vpop.f32.mrb[0].mxu0
    %v3749 = vadd.f32 0.0, %v3748
    %v3750 = vpop.f32.mrb[0].mxu0
    %3751 = vmatprep.mubr.f32.mxu0 0.0
    %3752 = vmatmul.mubr.f32.gmra.mrb[0].mxu0 %v3670
    %v3753 = vpop.f32.mrb[0].mxu0
    %v3754 = vadd.f32 0.0, %v3753
    %v3755 = vpop.f32.mrb[0].mxu0
    %3756 = vdwg.mxu0
    %3757 = vst.msk [vmem:[#allocation5] sm:$0xff] %vm50, %v3739
    %3758 = vst.msk [vmem:[#allocation5 + $0x8] sm:$0xff] %vm50, %v3744
    %3759 = vst.msk [vmem:[#allocation5 + $0x10] sm:$0xff] %vm50, %v3749
    %3760 = vst.msk [vmem:[#allocation5 + $0x18] sm:$0xff] %vm50, %v3754
    // Predicated region
    $region50: #{tpu_custom_call.1} parent=1 // pred_check
      _
    $region51: #{tpu_custom_call.1} parent=1 // pred_check_branch
      %3762 = sbr.rel (0) target = $region53
    $region52: #{tpu_custom_call.1} parent=1 // pred_region
      %s3764 = ssub.s32 512, 512
      %3765 = vsyncadd [#allocation6], %s3764
      %s3766 = sshll.u32 [#allocation5], 4
      %s3767 = int_to_ptr.vmem [resolvable:$true] %s3766
      %3772 = dma.vmem_to_hbm [thread:$0]  %s3767, 512, %s12, [#allocation6], 128, 128, 8
    $region53: #{tpu_custom_call.1} parent=1 // pred_fallthru
      _
    // Predicated region
    $region54: #{tpu_custom_call.1} parent=1 // pred_check
      _
    $region55: #{tpu_custom_call.1} parent=1 // pred_check_branch
      %3774 = sbr.rel (0) target = $region57
    $region56: #{tpu_custom_call.1} parent=1 // pred_region
      %3775 = dma.done [#allocation6], 512
    $region57: #{tpu_custom_call.1} parent=1 // pred_fallthru
      _
    %3776 = vsyncpa [#allocation6], 1

</llo_original>
